<compile_context>
chip_gen: v7x
topology: tpu7x:2x2x1
jax: 0.10.0
libtpu: 0.0.40
codegen_flags: <defaults>
</compile_context>

<pallas_src>
import math

import jax
import jax.numpy as jnp
from jax.experimental import pallas as pl
from jax.experimental.pallas import tpu as pltpu

# ----------------------------- small config ---------------------------------
INPUT_SIZE = 16
IN_CHANNELS = 3
PATCH_SIZE = 8
NUM_LAYERS = 2
PATCH_DIM = 32
FF_DIM = 64
NUM_HEADS = 4
N_CLASSES = 10
BATCH = 2

NUM_PATCHES = (INPUT_SIZE // PATCH_SIZE) ** 2        # 4
SEQ = NUM_PATCHES + 1                                # 5 (CLS token + patches)
ROWS = BATCH * SEQ                                   # 10 (batch folded into rows)
HEAD_DIM = PATCH_DIM // NUM_HEADS                    # 8
CPP = IN_CHANNELS * PATCH_SIZE * PATCH_SIZE          # 192 (flattened patch)
LN_EPS = 1e-5                                        # PyTorch LayerNorm default
LANE = 128                                           # lane-dense logits buffer
NEG_INF = -1e9                                       # cross-batch attention mask

# ------------------------ packed-vector row layout ---------------------------
ROW_CLS = 0          # class embedding (D)
ROW_PATCH_B = 1      # patcher conv bias (D)
ROW_FINAL_G = 2      # final LayerNorm gamma (D)
ROW_FINAL_B = 3      # final LayerNorm beta  (D)
ROW_FC_B = 4         # classifier bias, lane-padded (128)
LAYER_ROW0 = 5
ROWS_PER_LAYER = 8
V_LN1G, V_LN1B, V_BQKV, V_BO, V_LN2G, V_LN2B, V_B1, V_B2 = range(8)
N_VEC_ROWS = LAYER_ROW0 + ROWS_PER_LAYER * NUM_LAYERS   # 21


# ----------------------------- in-kernel math --------------------------------
def _layernorm(x, g, b):
    mu = jnp.mean(x, axis=-1, keepdims=True)
    var = jnp.mean((x - mu) ** 2, axis=-1, keepdims=True)
    return (x - mu) * jax.lax.rsqrt(var + LN_EPS) * g + b


def _erf(x):
    # Abramowitz & Stegun 7.1.26 — uses only exp/mul/add (safe Mosaic lowering).
    a1, a2, a3, a4, a5 = 0.254829592, -0.284496736, 1.421413741, -1.453152027, 1.061405429
    p = 0.3275911
    ax = jnp.abs(x)
    t = 1.0 / (1.0 + p * ax)
    poly = ((((a5 * t + a4) * t + a3) * t + a2) * t + a1) * t
    y = 1.0 - poly * jnp.exp(-ax * ax)
    return jnp.where(x < 0.0, -y, y)


def _gelu(x):
    # exact (erf) GELU, matching nn.GELU() default
    # TODO(synk): ~1.5e-7 abs error vs torch's exact erf; fine at f32 tolerances.
    return 0.5 * x * (1.0 + _erf(x * (1.0 / math.sqrt(2.0))))


# --------------------------- single fused kernel ------------------------------
def _vit_fused_kernel(patches_ref, pw_ref, wqkv_ref, wo_ref, w1_ref, w2_ref,
                      fcw_ref, vecs_ref, out_ref):
    D, H, hd, F = PATCH_DIM, NUM_HEADS, HEAD_DIM, FF_DIM

    def vec(row, width):
        return vecs_ref[row:row + 1, 0:width]            # (1, width) packed vector

    # --- Patcher: Conv2d(k=P, stride=P) == Linear over flattened patches -----
    patches = patches_ref[...]                            # (ROWS, CPP); CLS rows are zero
    emb = jnp.dot(patches, pw_ref[...],
                  preferred_element_type=jnp.float32) + vec(ROW_PATCH_B, D)
    row_id = jax.lax.broadcasted_iota(jnp.int32, (ROWS, D), 0)
    is_cls = row_id == 0
    for b in range(1, BATCH):
        is_cls = jnp.logical_or(is_cls, row_id == b * SEQ)
    cls_b = jnp.broadcast_to(vec(ROW_CLS, D), (ROWS, D))
    x = jnp.where(is_cls, cls_b, emb)                      # (ROWS, D) tokens, all batches
    # NOTE: `x - position_emb + x` in the reference is never assigned -> pos-emb skipped.
    # emb_dropout / attention dropout / FF dropout are identity at inference.

    # Block-diagonal additive mask so folded-batch attention never crosses batches.
    ri = jax.lax.broadcasted_iota(jnp.int32, (ROWS, ROWS), 0)
    ci = jax.lax.broadcasted_iota(jnp.int32, (ROWS, ROWS), 1)
    same = None
    for b in range(BATCH):
        in_r = jnp.logical_and(ri >= b * SEQ, ri < (b + 1) * SEQ)
        in_c = jnp.logical_and(ci >= b * SEQ, ci < (b + 1) * SEQ)
        blk = jnp.logical_and(in_r, in_c)
        same = blk if same is None else jnp.logical_or(same, blk)
    mask_bias = jnp.where(same, 0.0, NEG_INF).astype(jnp.float32)   # (ROWS, ROWS)

    for li in range(NUM_LAYERS):                           # static unroll over layers
        base = LAYER_ROW0 + li * ROWS_PER_LAYER

        # --- Attentionblock: LayerNorm + MultiheadAttention, residual add ---
        h = _layernorm(x, vec(base + V_LN1G, D), vec(base + V_LN1B, D))
        # single fused (ROWS, D) @ (D, 3D) QKV projection; Q scale folded into weights
        qkv = jnp.dot(h, wqkv_ref[li],
                      preferred_element_type=jnp.float32) + vec(base + V_BQKV, 3 * D)
        heads = []
        for hh in range(H):                                # per-head lane slices (no relayout)
            q = qkv[:, hh * hd:(hh + 1) * hd]
            k = qkv[:, D + hh * hd:D + (hh + 1) * hd]
            v = qkv[:, 2 * D + hh * hd:2 * D + (hh + 1) * hd]
            s = jax.lax.dot_general(q, k, (((1,), (1,)), ((), ())),
                                    preferred_element_type=jnp.float32)  # (ROWS, ROWS)
            s = s + mask_bias
            s = s - jnp.max(s, axis=-1, keepdims=True)
            p = jnp.exp(s)
            p = p / jnp.sum(p, axis=-1, keepdims=True)      # exact softmax division
            heads.append(jnp.dot(p, v, preferred_element_type=jnp.float32))  # (ROWS, hd)
        oh = jnp.concatenate(heads, axis=-1)                # (ROWS, D) head concat
        # fused head-reduction + output projection: one (ROWS, D) @ (D, D) matmul
        att = jnp.dot(oh, wo_ref[li],
                      preferred_element_type=jnp.float32) + vec(base + V_BO, D)
        x = att + x                                         # residual

        # --- FF block: LayerNorm + Linear + GELU + Linear, residual add -----
        h2 = _layernorm(x, vec(base + V_LN2G, D), vec(base + V_LN2B, D))
        f = jnp.dot(h2, w1_ref[li], preferred_element_type=jnp.float32) + vec(base + V_B1, F)
        f = _gelu(f)
        f = jnp.dot(f, w2_ref[li], preferred_element_type=jnp.float32) + vec(base + V_B2, D)
        x = f + x

    # --- final LayerNorm + classifier on the CLS tokens (lane-dense store) ----
    cls_tok = jnp.concatenate([x[b * SEQ:b * SEQ + 1, :] for b in range(BATCH)], axis=0)
    hc = _layernorm(cls_tok, vec(ROW_FINAL_G, D), vec(ROW_FINAL_B, D))   # (B, D)
    logits = jnp.dot(hc, fcw_ref[...],
                     preferred_element_type=jnp.float32) + vec(ROW_FC_B, LANE)
    out_ref[...] = logits.astype(out_ref.dtype)             # (B, 128)


# ----------------------------- parameters ------------------------------------
def init_params(key):
    D, H, hd, F, L = PATCH_DIM, NUM_HEADS, HEAD_DIM, FF_DIM, NUM_LAYERS
    s = 0.02
    scale = 1.0 / math.sqrt(hd)
    keys = jax.random.split(key, 8 + L)
    p = {}
    class_emb = jax.random.normal(keys[0], (D,), jnp.float32)
    # position_emb exists in the module but is never applied (dead expression); kept for fidelity.
    p["position_emb"] = jax.random.normal(keys[1], (1, SEQ, D), jnp.float32)
    conv_w = jax.random.normal(keys[2], (D, IN_CHANNELS, PATCH_SIZE, PATCH_SIZE), jnp.float32) * s
    p["patch_w_t"] = conv_w.reshape(D, CPP).T                            # (CPP, D)
    patch_b = jax.random.normal(keys[3], (D,), jnp.float32) * s
    fc_w = jax.random.normal(keys[4], (N_CLASSES, D), jnp.float32) * s
    fc_b = jax.random.normal(keys[5], (N_CLASSES,), jnp.float32) * s
    p["fc_w_pad"] = jnp.pad(fc_w.T, ((0, 0), (0, LANE - N_CLASSES)))     # (D, 128) lane-padded

    def pad_lane(v):
        return jnp.pad(v, (0, LANE - v.shape[0]))

    vec_rows = [None] * N_VEC_ROWS
    vec_rows[ROW_CLS] = pad_lane(class_emb)
    vec_rows[ROW_PATCH_B] = pad_lane(patch_b)
    vec_rows[ROW_FINAL_G] = pad_lane(jnp.ones((D,), jnp.float32))
    vec_rows[ROW_FINAL_B] = pad_lane(jnp.zeros((D,), jnp.float32))
    vec_rows[ROW_FC_B] = pad_lane(fc_b)

    wqkv, wo, w1, w2 = [], [], [], []
    for li in range(L):
        lk = jax.random.split(keys[8 + li], 8)
        in_proj_w = jax.random.normal(lk[0], (3 * D, D), jnp.float32) * s
        in_proj_b = jax.random.normal(lk[1], (3 * D,), jnp.float32) * s
        # (D, 3D) columns = [Q | K | V] (head-major within each), 1/sqrt(hd) folded into Q
        wqkv.append(jnp.concatenate(
            [in_proj_w[:D].T * scale, in_proj_w[D:2 * D].T, in_proj_w[2 * D:].T], axis=1))
        bqkv = jnp.concatenate([in_proj_b[:D] * scale, in_proj_b[D:]], axis=0)    # (3D,)
        out_w = jax.random.normal(lk[2], (D, D), jnp.float32) * s
        wo.append(out_w.T)                                                        # (D, D)
        out_b = jax.random.normal(lk[3], (D,), jnp.float32) * s
        fc1_w = jax.random.normal(lk[4], (F, D), jnp.float32) * s
        b1 = jax.random.normal(lk[5], (F,), jnp.float32) * s
        fc2_w = jax.random.normal(lk[6], (D, F), jnp.float32) * s
        b2 = jax.random.normal(lk[7], (D,), jnp.float32) * s
        w1.append(fc1_w.T)                                                        # (D, F)
        w2.append(fc2_w.T)                                                        # (F, D)

        base = LAYER_ROW0 + li * ROWS_PER_LAYER
        vec_rows[base + V_LN1G] = pad_lane(jnp.ones((D,), jnp.float32))
        vec_rows[base + V_LN1B] = pad_lane(jnp.zeros((D,), jnp.float32))
        vec_rows[base + V_BQKV] = pad_lane(bqkv)
        vec_rows[base + V_BO] = pad_lane(out_b)
        vec_rows[base + V_LN2G] = pad_lane(jnp.ones((D,), jnp.float32))
        vec_rows[base + V_LN2B] = pad_lane(jnp.zeros((D,), jnp.float32))
        vec_rows[base + V_B1] = pad_lane(b1)
        vec_rows[base + V_B2] = pad_lane(b2)

    p["wqkv"] = jnp.stack(wqkv)          # (L, D, 3D)
    p["wo"] = jnp.stack(wo)              # (L, D, D)
    p["w1"] = jnp.stack(w1)              # (L, D, F)
    p["w2"] = jnp.stack(w2)              # (L, F, D)
    p["vecs"] = jnp.stack(vec_rows)      # (N_VEC_ROWS, 128) packed small vectors
    return p


# ----------------------------- full forward ----------------------------------
def vit_forward(x, params):
    B = x.shape[0]
    assert B == BATCH, "kernel is specialized for BATCH batch elements"
    # x.permute(0, -1, 1, 2): NHWC -> NCHW (as in the PyTorch forward)
    xc = jnp.transpose(x, (0, 3, 1, 2))
    Hp = Wp = INPUT_SIZE // PATCH_SIZE
    patches = xc.reshape(B, IN_CHANNELS, Hp, PATCH_SIZE, Wp, PATCH_SIZE)
    patches = jnp.transpose(patches, (0, 2, 4, 1, 3, 5)).reshape(B, NUM_PATCHES, CPP)
    # zero row at the front of every batch's token axis -> becomes the CLS slot in-kernel;
    # then fold batch into the row axis.
    patches = jnp.pad(patches, ((0, 0), (1, 0), (0, 0))).reshape(B * SEQ, CPP)

    ops = (patches, params["patch_w_t"], params["wqkv"], params["wo"],
           params["w1"], params["w2"], params["fc_w_pad"], params["vecs"])

    vmem = pl.BlockSpec(memory_space=pltpu.MemorySpace.VMEM)   # whole array resident in VMEM
    out = pl.pallas_call(
        _vit_fused_kernel,
        out_shape=jax.ShapeDtypeStruct((B, LANE), jnp.float32),
        in_specs=[vmem] * len(ops),
        out_specs=vmem,
    )(*ops)
    return out[:, :N_CLASSES]                                   # (B, n_classes)


# ----------------------------- demo -------------------------------------------
if __name__ == "__main__":
    key = jax.random.PRNGKey(0)
    pkey, xkey = jax.random.split(key)
    params = init_params(pkey)
    x = jax.random.normal(xkey, (BATCH, INPUT_SIZE, INPUT_SIZE, IN_CHANNELS), jnp.float32)

    out = jax.jit(lambda inp: vit_forward(inp, params))(x)
    out = jax.block_until_ready(out)
    assert out.shape == (BATCH, N_CLASSES), out.shape
    assert bool(jnp.all(jnp.isfinite(out)))
    print("KERNEL_OK")
</pallas_src>

<mosaic_0001>
module attributes {stable_mosaic.version = 11 : i64} {
  func.func @_vit_fused_kernel(%arg0: memref<10x192xf32, #tpu.memory_space<vmem>>, %arg1: memref<192x32xf32, #tpu.memory_space<vmem>>, %arg2: memref<2x32x96xf32, #tpu.memory_space<vmem>>, %arg3: memref<2x32x32xf32, #tpu.memory_space<vmem>>, %arg4: memref<2x32x64xf32, #tpu.memory_space<vmem>>, %arg5: memref<2x64x32xf32, #tpu.memory_space<vmem>>, %arg6: memref<32x128xf32, #tpu.memory_space<vmem>>, %arg7: memref<21x128xf32, #tpu.memory_space<vmem>>, %arg8: memref<2x128xf32, #tpu.memory_space<vmem>>) attributes {dimension_semantics = [], scalar_prefetch = 0 : i64, scratch_operands = 0 : i64, tpu.core_type = #tpu.core_type<tc>} {
    %c0 = arith.constant 0 : index
    %c0_0 = arith.constant 0 : index
    %0 = vector.load %arg0[%c0, %c0_0] : memref<10x192xf32, #tpu.memory_space<vmem>>, vector<10x192xf32>
    %c0_1 = arith.constant 0 : index
    %c0_2 = arith.constant 0 : index
    %1 = vector.load %arg1[%c0_1, %c0_2] : memref<192x32xf32, #tpu.memory_space<vmem>>, vector<192x32xf32>
    %cst = arith.constant dense<0.000000e+00> : vector<10x32xf32>
    %2 = tpu.matmul %0, %1, %cst {dimension_numbers = #tpu.dot_dimension_numbers<[1], [0], [0], [1], [0, 0, 1, 1], [], []>} : vector<10x192xf32>, vector<192x32xf32>, vector<10x32xf32> -> vector<10x32xf32>
    %c1 = arith.constant 1 : index
    %c0_3 = arith.constant 0 : index
    %3 = vector.load %arg7[%c1, %c0_3] : memref<21x128xf32, #tpu.memory_space<vmem>>, vector<1x32xf32>
    %4 = vector.broadcast %3 : vector<1x32xf32> to vector<10x32xf32>
    %5 = arith.addf %2, %4 : vector<10x32xf32>
    %6 = tpu.iota {dimensions = array<i32: 0>} : vector<10x32xi32>
    %c0_i32 = arith.constant 0 : i32
    %7 = vector.broadcast %c0_i32 : i32 to vector<10x32xi32>
    %8 = arith.cmpi eq, %6, %7 : vector<10x32xi32>
    %c5_i32 = arith.constant 5 : i32
    %9 = vector.broadcast %c5_i32 : i32 to vector<10x32xi32>
    %10 = arith.cmpi eq, %6, %9 : vector<10x32xi32>
    %11 = arith.ori %8, %10 : vector<10x32xi1>
    %c0_4 = arith.constant 0 : index
    %c0_5 = arith.constant 0 : index
    %12 = vector.load %arg7[%c0_4, %c0_5] : memref<21x128xf32, #tpu.memory_space<vmem>>, vector<1x32xf32>
    %13 = vector.shape_cast %12 : vector<1x32xf32> to vector<1x32xf32>
    %14 = vector.broadcast %13 : vector<1x32xf32> to vector<10x32xf32>
    %15 = arith.select %11, %14, %5 : vector<10x32xi1>, vector<10x32xf32>
    %16 = tpu.iota {dimensions = array<i32: 0>} : vector<10x10xi32>
    %17 = tpu.iota {dimensions = array<i32: 1>} : vector<10x10xi32>
    %c0_i32_6 = arith.constant 0 : i32
    %18 = vector.broadcast %c0_i32_6 : i32 to vector<10x10xi32>
    %19 = arith.cmpi sge, %16, %18 : vector<10x10xi32>
    %c5_i32_7 = arith.constant 5 : i32
    %20 = vector.broadcast %c5_i32_7 : i32 to vector<10x10xi32>
    %21 = arith.cmpi slt, %16, %20 : vector<10x10xi32>
    %22 = arith.andi %19, %21 : vector<10x10xi1>
    %c0_i32_8 = arith.constant 0 : i32
    %23 = vector.broadcast %c0_i32_8 : i32 to vector<10x10xi32>
    %24 = arith.cmpi sge, %17, %23 : vector<10x10xi32>
    %c5_i32_9 = arith.constant 5 : i32
    %25 = vector.broadcast %c5_i32_9 : i32 to vector<10x10xi32>
    %26 = arith.cmpi slt, %17, %25 : vector<10x10xi32>
    %27 = arith.andi %24, %26 : vector<10x10xi1>
    %28 = arith.andi %22, %27 : vector<10x10xi1>
    %c5_i32_10 = arith.constant 5 : i32
    %29 = vector.broadcast %c5_i32_10 : i32 to vector<10x10xi32>
    %30 = arith.cmpi sge, %16, %29 : vector<10x10xi32>
    %c10_i32 = arith.constant 10 : i32
    %31 = vector.broadcast %c10_i32 : i32 to vector<10x10xi32>
    %32 = arith.cmpi slt, %16, %31 : vector<10x10xi32>
    %33 = arith.andi %30, %32 : vector<10x10xi1>
    %c5_i32_11 = arith.constant 5 : i32
    %34 = vector.broadcast %c5_i32_11 : i32 to vector<10x10xi32>
    %35 = arith.cmpi sge, %17, %34 : vector<10x10xi32>
    %c10_i32_12 = arith.constant 10 : i32
    %36 = vector.broadcast %c10_i32_12 : i32 to vector<10x10xi32>
    %37 = arith.cmpi slt, %17, %36 : vector<10x10xi32>
    %38 = arith.andi %35, %37 : vector<10x10xi1>
    %39 = arith.andi %33, %38 : vector<10x10xi1>
    %40 = arith.ori %28, %39 : vector<10x10xi1>
    %cst_13 = arith.constant 0.000000e+00 : f32
    %cst_14 = arith.constant -1.000000e+09 : f32
    %41 = vector.broadcast %cst_13 : f32 to vector<10x10xf32>
    %42 = vector.broadcast %cst_14 : f32 to vector<10x10xf32>
    %43 = arith.select %40, %41, %42 : vector<10x10xi1>, vector<10x10xf32>
    %c5 = arith.constant 5 : index
    %c0_15 = arith.constant 0 : index
    %44 = vector.load %arg7[%c5, %c0_15] : memref<21x128xf32, #tpu.memory_space<vmem>>, vector<1x32xf32>
    %c6 = arith.constant 6 : index
    %c0_16 = arith.constant 0 : index
    %45 = vector.load %arg7[%c6, %c0_16] : memref<21x128xf32, #tpu.memory_space<vmem>>, vector<1x32xf32>
    %cst_17 = arith.constant dense<0.000000e+00> : vector<10xf32>
    %46 = vector.multi_reduction <add>, %15, %cst_17 [1] : vector<10x32xf32> to vector<10xf32>
    %47 = vector.shape_cast %46 : vector<10xf32> to vector<10x1xf32>
    %cst_18 = arith.constant 3.200000e+01 : f32
    %48 = vector.broadcast %cst_18 : f32 to vector<10x1xf32>
    %49 = arith.divf %47, %48 : vector<10x1xf32>
    %50 = vector.broadcast %49 : vector<10x1xf32> to vector<10x32xf32>
    %51 = arith.subf %15, %50 : vector<10x32xf32>
    %52 = arith.mulf %51, %51 : vector<10x32xf32>
    %cst_19 = arith.constant dense<0.000000e+00> : vector<10xf32>
    %53 = vector.multi_reduction <add>, %52, %cst_19 [1] : vector<10x32xf32> to vector<10xf32>
    %54 = vector.shape_cast %53 : vector<10xf32> to vector<10x1xf32>
    %cst_20 = arith.constant 3.200000e+01 : f32
    %55 = vector.broadcast %cst_20 : f32 to vector<10x1xf32>
    %56 = arith.divf %54, %55 : vector<10x1xf32>
    %57 = vector.broadcast %49 : vector<10x1xf32> to vector<10x32xf32>
    %58 = arith.subf %15, %57 : vector<10x32xf32>
    %cst_21 = arith.constant 9.99999974E-6 : f32
    %59 = vector.broadcast %cst_21 : f32 to vector<10x1xf32>
    %60 = arith.addf %56, %59 : vector<10x1xf32>
    %61 = math.rsqrt %60 : vector<10x1xf32>
    %62 = vector.broadcast %61 : vector<10x1xf32> to vector<10x32xf32>
    %63 = arith.mulf %58, %62 : vector<10x32xf32>
    %64 = vector.broadcast %44 : vector<1x32xf32> to vector<10x32xf32>
    %65 = arith.mulf %63, %64 : vector<10x32xf32>
    %66 = vector.broadcast %45 : vector<1x32xf32> to vector<10x32xf32>
    %67 = arith.addf %65, %66 : vector<10x32xf32>
    %c0_22 = arith.constant 0 : index
    %c0_23 = arith.constant 0 : index
    %c0_24 = arith.constant 0 : index
    %68 = vector.load %arg2[%c0_22, %c0_23, %c0_24] : memref<2x32x96xf32, #tpu.memory_space<vmem>>, vector<1x32x96xf32>
    %69 = vector.shape_cast %68 : vector<1x32x96xf32> to vector<32x96xf32>
    %cst_25 = arith.constant dense<0.000000e+00> : vector<10x96xf32>
    %70 = tpu.matmul %67, %69, %cst_25 {dimension_numbers = #tpu.dot_dimension_numbers<[1], [0], [0], [1], [0, 0, 1, 1], [], []>} : vector<10x32xf32>, vector<32x96xf32>, vector<10x96xf32> -> vector<10x96xf32>
    %c7 = arith.constant 7 : index
    %c0_26 = arith.constant 0 : index
    %71 = vector.load %arg7[%c7, %c0_26] : memref<21x128xf32, #tpu.memory_space<vmem>>, vector<1x96xf32>
    %72 = vector.broadcast %71 : vector<1x96xf32> to vector<10x96xf32>
    %73 = arith.addf %70, %72 : vector<10x96xf32>
    %74 = vector.extract_strided_slice %73 {offsets = [0, 0], sizes = [10, 8], strides = [1, 1]} : vector<10x96xf32> to vector<10x8xf32>
    %75 = vector.extract_strided_slice %73 {offsets = [0, 32], sizes = [10, 8], strides = [1, 1]} : vector<10x96xf32> to vector<10x8xf32>
    %76 = vector.extract_strided_slice %73 {offsets = [0, 64], sizes = [10, 8], strides = [1, 1]} : vector<10x96xf32> to vector<10x8xf32>
    %cst_27 = arith.constant dense<0.000000e+00> : vector<10x10xf32>
    %77 = tpu.matmul %74, %75, %cst_27 {dimension_numbers = #tpu.dot_dimension_numbers<[1], [1], [0], [0], [0, 0, 1, 0], [], []>} : vector<10x8xf32>, vector<10x8xf32>, vector<10x10xf32> -> vector<10x10xf32>
    %78 = arith.addf %77, %43 : vector<10x10xf32>
    %cst_28 = arith.constant dense<0xFF800000> : vector<10xf32>
    %79 = vector.multi_reduction <maximumf>, %78, %cst_28 [1] : vector<10x10xf32> to vector<10xf32>
    %80 = vector.shape_cast %79 : vector<10xf32> to vector<10x1xf32>
    %81 = vector.broadcast %80 : vector<10x1xf32> to vector<10x10xf32>
    %82 = arith.subf %78, %81 : vector<10x10xf32>
    %83 = math.exp %82 : vector<10x10xf32>
    %cst_29 = arith.constant dense<0.000000e+00> : vector<10xf32>
    %84 = vector.multi_reduction <add>, %83, %cst_29 [1] : vector<10x10xf32> to vector<10xf32>
    %85 = vector.shape_cast %84 : vector<10xf32> to vector<10x1xf32>
    %86 = vector.broadcast %85 : vector<10x1xf32> to vector<10x10xf32>
    %87 = arith.divf %83, %86 : vector<10x10xf32>
    %cst_30 = arith.constant dense<0.000000e+00> : vector<10x8xf32>
    %88 = tpu.matmul %87, %76, %cst_30 {dimension_numbers = #tpu.dot_dimension_numbers<[1], [0], [0], [1], [0, 0, 1, 1], [], []>} : vector<10x10xf32>, vector<10x8xf32>, vector<10x8xf32> -> vector<10x8xf32>
    %89 = vector.extract_strided_slice %73 {offsets = [0, 8], sizes = [10, 8], strides = [1, 1]} : vector<10x96xf32> to vector<10x8xf32>
    %90 = vector.extract_strided_slice %73 {offsets = [0, 40], sizes = [10, 8], strides = [1, 1]} : vector<10x96xf32> to vector<10x8xf32>
    %91 = vector.extract_strided_slice %73 {offsets = [0, 72], sizes = [10, 8], strides = [1, 1]} : vector<10x96xf32> to vector<10x8xf32>
    %cst_31 = arith.constant dense<0.000000e+00> : vector<10x10xf32>
    %92 = tpu.matmul %89, %90, %cst_31 {dimension_numbers = #tpu.dot_dimension_numbers<[1], [1], [0], [0], [0, 0, 1, 0], [], []>} : vector<10x8xf32>, vector<10x8xf32>, vector<10x10xf32> -> vector<10x10xf32>
    %93 = arith.addf %92, %43 : vector<10x10xf32>
    %cst_32 = arith.constant dense<0xFF800000> : vector<10xf32>
    %94 = vector.multi_reduction <maximumf>, %93, %cst_32 [1] : vector<10x10xf32> to vector<10xf32>
    %95 = vector.shape_cast %94 : vector<10xf32> to vector<10x1xf32>
    %96 = vector.broadcast %95 : vector<10x1xf32> to vector<10x10xf32>
    %97 = arith.subf %93, %96 : vector<10x10xf32>
    %98 = math.exp %97 : vector<10x10xf32>
    %cst_33 = arith.constant dense<0.000000e+00> : vector<10xf32>
    %99 = vector.multi_reduction <add>, %98, %cst_33 [1] : vector<10x10xf32> to vector<10xf32>
    %100 = vector.shape_cast %99 : vector<10xf32> to vector<10x1xf32>
    %101 = vector.broadcast %100 : vector<10x1xf32> to vector<10x10xf32>
    %102 = arith.divf %98, %101 : vector<10x10xf32>
    %cst_34 = arith.constant dense<0.000000e+00> : vector<10x8xf32>
    %103 = tpu.matmul %102, %91, %cst_34 {dimension_numbers = #tpu.dot_dimension_numbers<[1], [0], [0], [1], [0, 0, 1, 1], [], []>} : vector<10x10xf32>, vector<10x8xf32>, vector<10x8xf32> -> vector<10x8xf32>
    %104 = vector.extract_strided_slice %73 {offsets = [0, 16], sizes = [10, 8], strides = [1, 1]} : vector<10x96xf32> to vector<10x8xf32>
    %105 = vector.extract_strided_slice %73 {offsets = [0, 48], sizes = [10, 8], strides = [1, 1]} : vector<10x96xf32> to vector<10x8xf32>
    %106 = vector.extract_strided_slice %73 {offsets = [0, 80], sizes = [10, 8], strides = [1, 1]} : vector<10x96xf32> to vector<10x8xf32>
    %cst_35 = arith.constant dense<0.000000e+00> : vector<10x10xf32>
    %107 = tpu.matmul %104, %105, %cst_35 {dimension_numbers = #tpu.dot_dimension_numbers<[1], [1], [0], [0], [0, 0, 1, 0], [], []>} : vector<10x8xf32>, vector<10x8xf32>, vector<10x10xf32> -> vector<10x10xf32>
    %108 = arith.addf %107, %43 : vector<10x10xf32>
    %cst_36 = arith.constant dense<0xFF800000> : vector<10xf32>
    %109 = vector.multi_reduction <maximumf>, %108, %cst_36 [1] : vector<10x10xf32> to vector<10xf32>
    %110 = vector.shape_cast %109 : vector<10xf32> to vector<10x1xf32>
    %111 = vector.broadcast %110 : vector<10x1xf32> to vector<10x10xf32>
    %112 = arith.subf %108, %111 : vector<10x10xf32>
    %113 = math.exp %112 : vector<10x10xf32>
    %cst_37 = arith.constant dense<0.000000e+00> : vector<10xf32>
    %114 = vector.multi_reduction <add>, %113, %cst_37 [1] : vector<10x10xf32> to vector<10xf32>
    %115 = vector.shape_cast %114 : vector<10xf32> to vector<10x1xf32>
    %116 = vector.broadcast %115 : vector<10x1xf32> to vector<10x10xf32>
    %117 = arith.divf %113, %116 : vector<10x10xf32>
    %cst_38 = arith.constant dense<0.000000e+00> : vector<10x8xf32>
    %118 = tpu.matmul %117, %106, %cst_38 {dimension_numbers = #tpu.dot_dimension_numbers<[1], [0], [0], [1], [0, 0, 1, 1], [], []>} : vector<10x10xf32>, vector<10x8xf32>, vector<10x8xf32> -> vector<10x8xf32>
    %119 = vector.extract_strided_slice %73 {offsets = [0, 24], sizes = [10, 8], strides = [1, 1]} : vector<10x96xf32> to vector<10x8xf32>
    %120 = vector.extract_strided_slice %73 {offsets = [0, 56], sizes = [10, 8], strides = [1, 1]} : vector<10x96xf32> to vector<10x8xf32>
    %121 = vector.extract_strided_slice %73 {offsets = [0, 88], sizes = [10, 8], strides = [1, 1]} : vector<10x96xf32> to vector<10x8xf32>
    %cst_39 = arith.constant dense<0.000000e+00> : vector<10x10xf32>
    %122 = tpu.matmul %119, %120, %cst_39 {dimension_numbers = #tpu.dot_dimension_numbers<[1], [1], [0], [0], [0, 0, 1, 0], [], []>} : vector<10x8xf32>, vector<10x8xf32>, vector<10x10xf32> -> vector<10x10xf32>
    %123 = arith.addf %122, %43 : vector<10x10xf32>
    %cst_40 = arith.constant dense<0xFF800000> : vector<10xf32>
    %124 = vector.multi_reduction <maximumf>, %123, %cst_40 [1] : vector<10x10xf32> to vector<10xf32>
    %125 = vector.shape_cast %124 : vector<10xf32> to vector<10x1xf32>
    %126 = vector.broadcast %125 : vector<10x1xf32> to vector<10x10xf32>
    %127 = arith.subf %123, %126 : vector<10x10xf32>
    %128 = math.exp %127 : vector<10x10xf32>
    %cst_41 = arith.constant dense<0.000000e+00> : vector<10xf32>
    %129 = vector.multi_reduction <add>, %128, %cst_41 [1] : vector<10x10xf32> to vector<10xf32>
    %130 = vector.shape_cast %129 : vector<10xf32> to vector<10x1xf32>
    %131 = vector.broadcast %130 : vector<10x1xf32> to vector<10x10xf32>
    %132 = arith.divf %128, %131 : vector<10x10xf32>
    %cst_42 = arith.constant dense<0.000000e+00> : vector<10x8xf32>
    %133 = tpu.matmul %132, %121, %cst_42 {dimension_numbers = #tpu.dot_dimension_numbers<[1], [0], [0], [1], [0, 0, 1, 1], [], []>} : vector<10x10xf32>, vector<10x8xf32>, vector<10x8xf32> -> vector<10x8xf32>
    %134 = tpu.concatenate %88, %103, %118, %133 in 1 : vector<10x8xf32>, vector<10x8xf32>, vector<10x8xf32>, vector<10x8xf32> -> vector<10x32xf32>
    %c0_43 = arith.constant 0 : index
    %c0_44 = arith.constant 0 : index
    %c0_45 = arith.constant 0 : index
    %135 = vector.load %arg3[%c0_43, %c0_44, %c0_45] : memref<2x32x32xf32, #tpu.memory_space<vmem>>, vector<1x32x32xf32>
    %136 = vector.shape_cast %135 : vector<1x32x32xf32> to vector<32x32xf32>
    %cst_46 = arith.constant dense<0.000000e+00> : vector<10x32xf32>
    %137 = tpu.matmul %134, %136, %cst_46 {dimension_numbers = #tpu.dot_dimension_numbers<[1], [0], [0], [1], [0, 0, 1, 1], [], []>} : vector<10x32xf32>, vector<32x32xf32>, vector<10x32xf32> -> vector<10x32xf32>
    %c8 = arith.constant 8 : index
    %c0_47 = arith.constant 0 : index
    %138 = vector.load %arg7[%c8, %c0_47] : memref<21x128xf32, #tpu.memory_space<vmem>>, vector<1x32xf32>
    %139 = vector.broadcast %138 : vector<1x32xf32> to vector<10x32xf32>
    %140 = arith.addf %137, %139 : vector<10x32xf32>
    %141 = arith.addf %140, %15 : vector<10x32xf32>
    %c9 = arith.constant 9 : index
    %c0_48 = arith.constant 0 : index
    %142 = vector.load %arg7[%c9, %c0_48] : memref<21x128xf32, #tpu.memory_space<vmem>>, vector<1x32xf32>
    %c10 = arith.constant 10 : index
    %c0_49 = arith.constant 0 : index
    %143 = vector.load %arg7[%c10, %c0_49] : memref<21x128xf32, #tpu.memory_space<vmem>>, vector<1x32xf32>
    %cst_50 = arith.constant dense<0.000000e+00> : vector<10xf32>
    %144 = vector.multi_reduction <add>, %141, %cst_50 [1] : vector<10x32xf32> to vector<10xf32>
    %145 = vector.shape_cast %144 : vector<10xf32> to vector<10x1xf32>
    %cst_51 = arith.constant 3.200000e+01 : f32
    %146 = vector.broadcast %cst_51 : f32 to vector<10x1xf32>
    %147 = arith.divf %145, %146 : vector<10x1xf32>
    %148 = vector.broadcast %147 : vector<10x1xf32> to vector<10x32xf32>
    %149 = arith.subf %141, %148 : vector<10x32xf32>
    %150 = arith.mulf %149, %149 : vector<10x32xf32>
    %cst_52 = arith.constant dense<0.000000e+00> : vector<10xf32>
    %151 = vector.multi_reduction <add>, %150, %cst_52 [1] : vector<10x32xf32> to vector<10xf32>
    %152 = vector.shape_cast %151 : vector<10xf32> to vector<10x1xf32>
    %cst_53 = arith.constant 3.200000e+01 : f32
    %153 = vector.broadcast %cst_53 : f32 to vector<10x1xf32>
    %154 = arith.divf %152, %153 : vector<10x1xf32>
    %155 = vector.broadcast %147 : vector<10x1xf32> to vector<10x32xf32>
    %156 = arith.subf %141, %155 : vector<10x32xf32>
    %cst_54 = arith.constant 9.99999974E-6 : f32
    %157 = vector.broadcast %cst_54 : f32 to vector<10x1xf32>
    %158 = arith.addf %154, %157 : vector<10x1xf32>
    %159 = math.rsqrt %158 : vector<10x1xf32>
    %160 = vector.broadcast %159 : vector<10x1xf32> to vector<10x32xf32>
    %161 = arith.mulf %156, %160 : vector<10x32xf32>
    %162 = vector.broadcast %142 : vector<1x32xf32> to vector<10x32xf32>
    %163 = arith.mulf %161, %162 : vector<10x32xf32>
    %164 = vector.broadcast %143 : vector<1x32xf32> to vector<10x32xf32>
    %165 = arith.addf %163, %164 : vector<10x32xf32>
    %c0_55 = arith.constant 0 : index
    %c0_56 = arith.constant 0 : index
    %c0_57 = arith.constant 0 : index
    %166 = vector.load %arg4[%c0_55, %c0_56, %c0_57] : memref<2x32x64xf32, #tpu.memory_space<vmem>>, vector<1x32x64xf32>
    %167 = vector.shape_cast %166 : vector<1x32x64xf32> to vector<32x64xf32>
    %cst_58 = arith.constant dense<0.000000e+00> : vector<10x64xf32>
    %168 = tpu.matmul %165, %167, %cst_58 {dimension_numbers = #tpu.dot_dimension_numbers<[1], [0], [0], [1], [0, 0, 1, 1], [], []>} : vector<10x32xf32>, vector<32x64xf32>, vector<10x64xf32> -> vector<10x64xf32>
    %c11 = arith.constant 11 : index
    %c0_59 = arith.constant 0 : index
    %169 = vector.load %arg7[%c11, %c0_59] : memref<21x128xf32, #tpu.memory_space<vmem>>, vector<1x64xf32>
    %170 = vector.broadcast %169 : vector<1x64xf32> to vector<10x64xf32>
    %171 = arith.addf %168, %170 : vector<10x64xf32>
    %cst_60 = arith.constant 5.000000e-01 : f32
    %172 = vector.broadcast %cst_60 : f32 to vector<10x64xf32>
    %173 = arith.mulf %172, %171 : vector<10x64xf32>
    %cst_61 = arith.constant 0.707106769 : f32
    %174 = vector.broadcast %cst_61 : f32 to vector<10x64xf32>
    %175 = arith.mulf %171, %174 : vector<10x64xf32>
    %176 = math.absf %175 : vector<10x64xf32>
    %cst_62 = arith.constant 0.327591091 : f32
    %177 = vector.broadcast %cst_62 : f32 to vector<10x64xf32>
    %178 = arith.mulf %177, %176 : vector<10x64xf32>
    %cst_63 = arith.constant 1.000000e+00 : f32
    %179 = vector.broadcast %cst_63 : f32 to vector<10x64xf32>
    %180 = arith.addf %179, %178 : vector<10x64xf32>
    %cst_64 = arith.constant 1.000000e+00 : f32
    %181 = vector.broadcast %cst_64 : f32 to vector<10x64xf32>
    %182 = arith.divf %181, %180 : vector<10x64xf32>
    %cst_65 = arith.constant 1.06140542 : f32
    %183 = vector.broadcast %cst_65 : f32 to vector<10x64xf32>
    %184 = arith.mulf %183, %182 : vector<10x64xf32>
    %cst_66 = arith.constant -1.45315206 : f32
    %185 = vector.broadcast %cst_66 : f32 to vector<10x64xf32>
    %186 = arith.addf %184, %185 : vector<10x64xf32>
    %187 = arith.mulf %186, %182 : vector<10x64xf32>
    %cst_67 = arith.constant 1.42141378 : f32
    %188 = vector.broadcast %cst_67 : f32 to vector<10x64xf32>
    %189 = arith.addf %187, %188 : vector<10x64xf32>
    %190 = arith.mulf %189, %182 : vector<10x64xf32>
    %cst_68 = arith.constant -0.284496725 : f32
    %191 = vector.broadcast %cst_68 : f32 to vector<10x64xf32>
    %192 = arith.addf %190, %191 : vector<10x64xf32>
    %193 = arith.mulf %192, %182 : vector<10x64xf32>
    %cst_69 = arith.constant 0.254829586 : f32
    %194 = vector.broadcast %cst_69 : f32 to vector<10x64xf32>
    %195 = arith.addf %193, %194 : vector<10x64xf32>
    %196 = arith.mulf %195, %182 : vector<10x64xf32>
    %cst_70 = arith.constant 0.000000e+00 : f32
    %197 = vector.broadcast %cst_70 : f32 to vector<10x64xf32>
    %198 = arith.subf %197, %176 : vector<10x64xf32>
    %199 = arith.mulf %198, %176 : vector<10x64xf32>
    %200 = math.exp %199 : vector<10x64xf32>
    %201 = arith.mulf %196, %200 : vector<10x64xf32>
    %cst_71 = arith.constant 1.000000e+00 : f32
    %202 = vector.broadcast %cst_71 : f32 to vector<10x64xf32>
    %203 = arith.subf %202, %201 : vector<10x64xf32>
    %cst_72 = arith.constant 0.000000e+00 : f32
    %204 = vector.broadcast %cst_72 : f32 to vector<10x64xf32>
    %205 = arith.cmpf olt, %175, %204 : vector<10x64xf32>
    %cst_73 = arith.constant 0.000000e+00 : f32
    %206 = vector.broadcast %cst_73 : f32 to vector<10x64xf32>
    %207 = arith.subf %206, %203 : vector<10x64xf32>
    %208 = arith.select %205, %207, %203 : vector<10x64xi1>, vector<10x64xf32>
    %cst_74 = arith.constant 1.000000e+00 : f32
    %209 = vector.broadcast %cst_74 : f32 to vector<10x64xf32>
    %210 = arith.addf %209, %208 : vector<10x64xf32>
    %211 = arith.mulf %173, %210 : vector<10x64xf32>
    %c0_75 = arith.constant 0 : index
    %c0_76 = arith.constant 0 : index
    %c0_77 = arith.constant 0 : index
    %212 = vector.load %arg5[%c0_75, %c0_76, %c0_77] : memref<2x64x32xf32, #tpu.memory_space<vmem>>, vector<1x64x32xf32>
    %213 = vector.shape_cast %212 : vector<1x64x32xf32> to vector<64x32xf32>
    %cst_78 = arith.constant dense<0.000000e+00> : vector<10x32xf32>
    %214 = tpu.matmul %211, %213, %cst_78 {dimension_numbers = #tpu.dot_dimension_numbers<[1], [0], [0], [1], [0, 0, 1, 1], [], []>} : vector<10x64xf32>, vector<64x32xf32>, vector<10x32xf32> -> vector<10x32xf32>
    %c12 = arith.constant 12 : index
    %c0_79 = arith.constant 0 : index
    %215 = vector.load %arg7[%c12, %c0_79] : memref<21x128xf32, #tpu.memory_space<vmem>>, vector<1x32xf32>
    %216 = vector.broadcast %215 : vector<1x32xf32> to vector<10x32xf32>
    %217 = arith.addf %214, %216 : vector<10x32xf32>
    %218 = arith.addf %217, %141 : vector<10x32xf32>
    %c13 = arith.constant 13 : index
    %c0_80 = arith.constant 0 : index
    %219 = vector.load %arg7[%c13, %c0_80] : memref<21x128xf32, #tpu.memory_space<vmem>>, vector<1x32xf32>
    %c14 = arith.constant 14 : index
    %c0_81 = arith.constant 0 : index
    %220 = vector.load %arg7[%c14, %c0_81] : memref<21x128xf32, #tpu.memory_space<vmem>>, vector<1x32xf32>
    %cst_82 = arith.constant dense<0.000000e+00> : vector<10xf32>
    %221 = vector.multi_reduction <add>, %218, %cst_82 [1] : vector<10x32xf32> to vector<10xf32>
    %222 = vector.shape_cast %221 : vector<10xf32> to vector<10x1xf32>
    %cst_83 = arith.constant 3.200000e+01 : f32
    %223 = vector.broadcast %cst_83 : f32 to vector<10x1xf32>
    %224 = arith.divf %222, %223 : vector<10x1xf32>
    %225 = vector.broadcast %224 : vector<10x1xf32> to vector<10x32xf32>
    %226 = arith.subf %218, %225 : vector<10x32xf32>
    %227 = arith.mulf %226, %226 : vector<10x32xf32>
    %cst_84 = arith.constant dense<0.000000e+00> : vector<10xf32>
    %228 = vector.multi_reduction <add>, %227, %cst_84 [1] : vector<10x32xf32> to vector<10xf32>
    %229 = vector.shape_cast %228 : vector<10xf32> to vector<10x1xf32>
    %cst_85 = arith.constant 3.200000e+01 : f32
    %230 = vector.broadcast %cst_85 : f32 to vector<10x1xf32>
    %231 = arith.divf %229, %230 : vector<10x1xf32>
    %232 = vector.broadcast %224 : vector<10x1xf32> to vector<10x32xf32>
    %233 = arith.subf %218, %232 : vector<10x32xf32>
    %cst_86 = arith.constant 9.99999974E-6 : f32
    %234 = vector.broadcast %cst_86 : f32 to vector<10x1xf32>
    %235 = arith.addf %231, %234 : vector<10x1xf32>
    %236 = math.rsqrt %235 : vector<10x1xf32>
    %237 = vector.broadcast %236 : vector<10x1xf32> to vector<10x32xf32>
    %238 = arith.mulf %233, %237 : vector<10x32xf32>
    %239 = vector.broadcast %219 : vector<1x32xf32> to vector<10x32xf32>
    %240 = arith.mulf %238, %239 : vector<10x32xf32>
    %241 = vector.broadcast %220 : vector<1x32xf32> to vector<10x32xf32>
    %242 = arith.addf %240, %241 : vector<10x32xf32>
    %c1_87 = arith.constant 1 : index
    %c0_88 = arith.constant 0 : index
    %c0_89 = arith.constant 0 : index
    %243 = vector.load %arg2[%c1_87, %c0_88, %c0_89] : memref<2x32x96xf32, #tpu.memory_space<vmem>>, vector<1x32x96xf32>
    %244 = vector.shape_cast %243 : vector<1x32x96xf32> to vector<32x96xf32>
    %cst_90 = arith.constant dense<0.000000e+00> : vector<10x96xf32>
    %245 = tpu.matmul %242, %244, %cst_90 {dimension_numbers = #tpu.dot_dimension_numbers<[1], [0], [0], [1], [0, 0, 1, 1], [], []>} : vector<10x32xf32>, vector<32x96xf32>, vector<10x96xf32> -> vector<10x96xf32>
    %c15 = arith.constant 15 : index
    %c0_91 = arith.constant 0 : index
    %246 = vector.load %arg7[%c15, %c0_91] : memref<21x128xf32, #tpu.memory_space<vmem>>, vector<1x96xf32>
    %247 = vector.broadcast %246 : vector<1x96xf32> to vector<10x96xf32>
    %248 = arith.addf %245, %247 : vector<10x96xf32>
    %249 = vector.extract_strided_slice %248 {offsets = [0, 0], sizes = [10, 8], strides = [1, 1]} : vector<10x96xf32> to vector<10x8xf32>
    %250 = vector.extract_strided_slice %248 {offsets = [0, 32], sizes = [10, 8], strides = [1, 1]} : vector<10x96xf32> to vector<10x8xf32>
    %251 = vector.extract_strided_slice %248 {offsets = [0, 64], sizes = [10, 8], strides = [1, 1]} : vector<10x96xf32> to vector<10x8xf32>
    %cst_92 = arith.constant dense<0.000000e+00> : vector<10x10xf32>
    %252 = tpu.matmul %249, %250, %cst_92 {dimension_numbers = #tpu.dot_dimension_numbers<[1], [1], [0], [0], [0, 0, 1, 0], [], []>} : vector<10x8xf32>, vector<10x8xf32>, vector<10x10xf32> -> vector<10x10xf32>
    %253 = arith.addf %252, %43 : vector<10x10xf32>
    %cst_93 = arith.constant dense<0xFF800000> : vector<10xf32>
    %254 = vector.multi_reduction <maximumf>, %253, %cst_93 [1] : vector<10x10xf32> to vector<10xf32>
    %255 = vector.shape_cast %254 : vector<10xf32> to vector<10x1xf32>
    %256 = vector.broadcast %255 : vector<10x1xf32> to vector<10x10xf32>
    %257 = arith.subf %253, %256 : vector<10x10xf32>
    %258 = math.exp %257 : vector<10x10xf32>
    %cst_94 = arith.constant dense<0.000000e+00> : vector<10xf32>
    %259 = vector.multi_reduction <add>, %258, %cst_94 [1] : vector<10x10xf32> to vector<10xf32>
    %260 = vector.shape_cast %259 : vector<10xf32> to vector<10x1xf32>
    %261 = vector.broadcast %260 : vector<10x1xf32> to vector<10x10xf32>
    %262 = arith.divf %258, %261 : vector<10x10xf32>
    %cst_95 = arith.constant dense<0.000000e+00> : vector<10x8xf32>
    %263 = tpu.matmul %262, %251, %cst_95 {dimension_numbers = #tpu.dot_dimension_numbers<[1], [0], [0], [1], [0, 0, 1, 1], [], []>} : vector<10x10xf32>, vector<10x8xf32>, vector<10x8xf32> -> vector<10x8xf32>
    %264 = vector.extract_strided_slice %248 {offsets = [0, 8], sizes = [10, 8], strides = [1, 1]} : vector<10x96xf32> to vector<10x8xf32>
    %265 = vector.extract_strided_slice %248 {offsets = [0, 40], sizes = [10, 8], strides = [1, 1]} : vector<10x96xf32> to vector<10x8xf32>
    %266 = vector.extract_strided_slice %248 {offsets = [0, 72], sizes = [10, 8], strides = [1, 1]} : vector<10x96xf32> to vector<10x8xf32>
    %cst_96 = arith.constant dense<0.000000e+00> : vector<10x10xf32>
    %267 = tpu.matmul %264, %265, %cst_96 {dimension_numbers = #tpu.dot_dimension_numbers<[1], [1], [0], [0], [0, 0, 1, 0], [], []>} : vector<10x8xf32>, vector<10x8xf32>, vector<10x10xf32> -> vector<10x10xf32>
    %268 = arith.addf %267, %43 : vector<10x10xf32>
    %cst_97 = arith.constant dense<0xFF800000> : vector<10xf32>
    %269 = vector.multi_reduction <maximumf>, %268, %cst_97 [1] : vector<10x10xf32> to vector<10xf32>
    %270 = vector.shape_cast %269 : vector<10xf32> to vector<10x1xf32>
    %271 = vector.broadcast %270 : vector<10x1xf32> to vector<10x10xf32>
    %272 = arith.subf %268, %271 : vector<10x10xf32>
    %273 = math.exp %272 : vector<10x10xf32>
    %cst_98 = arith.constant dense<0.000000e+00> : vector<10xf32>
    %274 = vector.multi_reduction <add>, %273, %cst_98 [1] : vector<10x10xf32> to vector<10xf32>
    %275 = vector.shape_cast %274 : vector<10xf32> to vector<10x1xf32>
    %276 = vector.broadcast %275 : vector<10x1xf32> to vector<10x10xf32>
    %277 = arith.divf %273, %276 : vector<10x10xf32>
    %cst_99 = arith.constant dense<0.000000e+00> : vector<10x8xf32>
    %278 = tpu.matmul %277, %266, %cst_99 {dimension_numbers = #tpu.dot_dimension_numbers<[1], [0], [0], [1], [0, 0, 1, 1], [], []>} : vector<10x10xf32>, vector<10x8xf32>, vector<10x8xf32> -> vector<10x8xf32>
    %279 = vector.extract_strided_slice %248 {offsets = [0, 16], sizes = [10, 8], strides = [1, 1]} : vector<10x96xf32> to vector<10x8xf32>
    %280 = vector.extract_strided_slice %248 {offsets = [0, 48], sizes = [10, 8], strides = [1, 1]} : vector<10x96xf32> to vector<10x8xf32>
    %281 = vector.extract_strided_slice %248 {offsets = [0, 80], sizes = [10, 8], strides = [1, 1]} : vector<10x96xf32> to vector<10x8xf32>
    %cst_100 = arith.constant dense<0.000000e+00> : vector<10x10xf32>
    %282 = tpu.matmul %279, %280, %cst_100 {dimension_numbers = #tpu.dot_dimension_numbers<[1], [1], [0], [0], [0, 0, 1, 0], [], []>} : vector<10x8xf32>, vector<10x8xf32>, vector<10x10xf32> -> vector<10x10xf32>
    %283 = arith.addf %282, %43 : vector<10x10xf32>
    %cst_101 = arith.constant dense<0xFF800000> : vector<10xf32>
    %284 = vector.multi_reduction <maximumf>, %283, %cst_101 [1] : vector<10x10xf32> to vector<10xf32>
    %285 = vector.shape_cast %284 : vector<10xf32> to vector<10x1xf32>
    %286 = vector.broadcast %285 : vector<10x1xf32> to vector<10x10xf32>
    %287 = arith.subf %283, %286 : vector<10x10xf32>
    %288 = math.exp %287 : vector<10x10xf32>
    %cst_102 = arith.constant dense<0.000000e+00> : vector<10xf32>
    %289 = vector.multi_reduction <add>, %288, %cst_102 [1] : vector<10x10xf32> to vector<10xf32>
    %290 = vector.shape_cast %289 : vector<10xf32> to vector<10x1xf32>
    %291 = vector.broadcast %290 : vector<10x1xf32> to vector<10x10xf32>
    %292 = arith.divf %288, %291 : vector<10x10xf32>
    %cst_103 = arith.constant dense<0.000000e+00> : vector<10x8xf32>
    %293 = tpu.matmul %292, %281, %cst_103 {dimension_numbers = #tpu.dot_dimension_numbers<[1], [0], [0], [1], [0, 0, 1, 1], [], []>} : vector<10x10xf32>, vector<10x8xf32>, vector<10x8xf32> -> vector<10x8xf32>
    %294 = vector.extract_strided_slice %248 {offsets = [0, 24], sizes = [10, 8], strides = [1, 1]} : vector<10x96xf32> to vector<10x8xf32>
    %295 = vector.extract_strided_slice %248 {offsets = [0, 56], sizes = [10, 8], strides = [1, 1]} : vector<10x96xf32> to vector<10x8xf32>
    %296 = vector.extract_strided_slice %248 {offsets = [0, 88], sizes = [10, 8], strides = [1, 1]} : vector<10x96xf32> to vector<10x8xf32>
    %cst_104 = arith.constant dense<0.000000e+00> : vector<10x10xf32>
    %297 = tpu.matmul %294, %295, %cst_104 {dimension_numbers = #tpu.dot_dimension_numbers<[1], [1], [0], [0], [0, 0, 1, 0], [], []>} : vector<10x8xf32>, vector<10x8xf32>, vector<10x10xf32> -> vector<10x10xf32>
    %298 = arith.addf %297, %43 : vector<10x10xf32>
    %cst_105 = arith.constant dense<0xFF800000> : vector<10xf32>
    %299 = vector.multi_reduction <maximumf>, %298, %cst_105 [1] : vector<10x10xf32> to vector<10xf32>
    %300 = vector.shape_cast %299 : vector<10xf32> to vector<10x1xf32>
    %301 = vector.broadcast %300 : vector<10x1xf32> to vector<10x10xf32>
    %302 = arith.subf %298, %301 : vector<10x10xf32>
    %303 = math.exp %302 : vector<10x10xf32>
    %cst_106 = arith.constant dense<0.000000e+00> : vector<10xf32>
    %304 = vector.multi_reduction <add>, %303, %cst_106 [1] : vector<10x10xf32> to vector<10xf32>
    %305 = vector.shape_cast %304 : vector<10xf32> to vector<10x1xf32>
    %306 = vector.broadcast %305 : vector<10x1xf32> to vector<10x10xf32>
    %307 = arith.divf %303, %306 : vector<10x10xf32>
    %cst_107 = arith.constant dense<0.000000e+00> : vector<10x8xf32>
    %308 = tpu.matmul %307, %296, %cst_107 {dimension_numbers = #tpu.dot_dimension_numbers<[1], [0], [0], [1], [0, 0, 1, 1], [], []>} : vector<10x10xf32>, vector<10x8xf32>, vector<10x8xf32> -> vector<10x8xf32>
    %309 = tpu.concatenate %263, %278, %293, %308 in 1 : vector<10x8xf32>, vector<10x8xf32>, vector<10x8xf32>, vector<10x8xf32> -> vector<10x32xf32>
    %c1_108 = arith.constant 1 : index
    %c0_109 = arith.constant 0 : index
    %c0_110 = arith.constant 0 : index
    %310 = vector.load %arg3[%c1_108, %c0_109, %c0_110] : memref<2x32x32xf32, #tpu.memory_space<vmem>>, vector<1x32x32xf32>
    %311 = vector.shape_cast %310 : vector<1x32x32xf32> to vector<32x32xf32>
    %cst_111 = arith.constant dense<0.000000e+00> : vector<10x32xf32>
    %312 = tpu.matmul %309, %311, %cst_111 {dimension_numbers = #tpu.dot_dimension_numbers<[1], [0], [0], [1], [0, 0, 1, 1], [], []>} : vector<10x32xf32>, vector<32x32xf32>, vector<10x32xf32> -> vector<10x32xf32>
    %c16 = arith.constant 16 : index
    %c0_112 = arith.constant 0 : index
    %313 = vector.load %arg7[%c16, %c0_112] : memref<21x128xf32, #tpu.memory_space<vmem>>, vector<1x32xf32>
    %314 = vector.broadcast %313 : vector<1x32xf32> to vector<10x32xf32>
    %315 = arith.addf %312, %314 : vector<10x32xf32>
    %316 = arith.addf %315, %218 : vector<10x32xf32>
    %c17 = arith.constant 17 : index
    %c0_113 = arith.constant 0 : index
    %317 = vector.load %arg7[%c17, %c0_113] : memref<21x128xf32, #tpu.memory_space<vmem>>, vector<1x32xf32>
    %c18 = arith.constant 18 : index
    %c0_114 = arith.constant 0 : index
    %318 = vector.load %arg7[%c18, %c0_114] : memref<21x128xf32, #tpu.memory_space<vmem>>, vector<1x32xf32>
    %cst_115 = arith.constant dense<0.000000e+00> : vector<10xf32>
    %319 = vector.multi_reduction <add>, %316, %cst_115 [1] : vector<10x32xf32> to vector<10xf32>
    %320 = vector.shape_cast %319 : vector<10xf32> to vector<10x1xf32>
    %cst_116 = arith.constant 3.200000e+01 : f32
    %321 = vector.broadcast %cst_116 : f32 to vector<10x1xf32>
    %322 = arith.divf %320, %321 : vector<10x1xf32>
    %323 = vector.broadcast %322 : vector<10x1xf32> to vector<10x32xf32>
    %324 = arith.subf %316, %323 : vector<10x32xf32>
    %325 = arith.mulf %324, %324 : vector<10x32xf32>
    %cst_117 = arith.constant dense<0.000000e+00> : vector<10xf32>
    %326 = vector.multi_reduction <add>, %325, %cst_117 [1] : vector<10x32xf32> to vector<10xf32>
    %327 = vector.shape_cast %326 : vector<10xf32> to vector<10x1xf32>
    %cst_118 = arith.constant 3.200000e+01 : f32
    %328 = vector.broadcast %cst_118 : f32 to vector<10x1xf32>
    %329 = arith.divf %327, %328 : vector<10x1xf32>
    %330 = vector.broadcast %322 : vector<10x1xf32> to vector<10x32xf32>
    %331 = arith.subf %316, %330 : vector<10x32xf32>
    %cst_119 = arith.constant 9.99999974E-6 : f32
    %332 = vector.broadcast %cst_119 : f32 to vector<10x1xf32>
    %333 = arith.addf %329, %332 : vector<10x1xf32>
    %334 = math.rsqrt %333 : vector<10x1xf32>
    %335 = vector.broadcast %334 : vector<10x1xf32> to vector<10x32xf32>
    %336 = arith.mulf %331, %335 : vector<10x32xf32>
    %337 = vector.broadcast %317 : vector<1x32xf32> to vector<10x32xf32>
    %338 = arith.mulf %336, %337 : vector<10x32xf32>
    %339 = vector.broadcast %318 : vector<1x32xf32> to vector<10x32xf32>
    %340 = arith.addf %338, %339 : vector<10x32xf32>
    %c1_120 = arith.constant 1 : index
    %c0_121 = arith.constant 0 : index
    %c0_122 = arith.constant 0 : index
    %341 = vector.load %arg4[%c1_120, %c0_121, %c0_122] : memref<2x32x64xf32, #tpu.memory_space<vmem>>, vector<1x32x64xf32>
    %342 = vector.shape_cast %341 : vector<1x32x64xf32> to vector<32x64xf32>
    %cst_123 = arith.constant dense<0.000000e+00> : vector<10x64xf32>
    %343 = tpu.matmul %340, %342, %cst_123 {dimension_numbers = #tpu.dot_dimension_numbers<[1], [0], [0], [1], [0, 0, 1, 1], [], []>} : vector<10x32xf32>, vector<32x64xf32>, vector<10x64xf32> -> vector<10x64xf32>
    %c19 = arith.constant 19 : index
    %c0_124 = arith.constant 0 : index
    %344 = vector.load %arg7[%c19, %c0_124] : memref<21x128xf32, #tpu.memory_space<vmem>>, vector<1x64xf32>
    %345 = vector.broadcast %344 : vector<1x64xf32> to vector<10x64xf32>
    %346 = arith.addf %343, %345 : vector<10x64xf32>
    %cst_125 = arith.constant 5.000000e-01 : f32
    %347 = vector.broadcast %cst_125 : f32 to vector<10x64xf32>
    %348 = arith.mulf %347, %346 : vector<10x64xf32>
    %cst_126 = arith.constant 0.707106769 : f32
    %349 = vector.broadcast %cst_126 : f32 to vector<10x64xf32>
    %350 = arith.mulf %346, %349 : vector<10x64xf32>
    %351 = math.absf %350 : vector<10x64xf32>
    %cst_127 = arith.constant 0.327591091 : f32
    %352 = vector.broadcast %cst_127 : f32 to vector<10x64xf32>
    %353 = arith.mulf %352, %351 : vector<10x64xf32>
    %cst_128 = arith.constant 1.000000e+00 : f32
    %354 = vector.broadcast %cst_128 : f32 to vector<10x64xf32>
    %355 = arith.addf %354, %353 : vector<10x64xf32>
    %cst_129 = arith.constant 1.000000e+00 : f32
    %356 = vector.broadcast %cst_129 : f32 to vector<10x64xf32>
    %357 = arith.divf %356, %355 : vector<10x64xf32>
    %cst_130 = arith.constant 1.06140542 : f32
    %358 = vector.broadcast %cst_130 : f32 to vector<10x64xf32>
    %359 = arith.mulf %358, %357 : vector<10x64xf32>
    %cst_131 = arith.constant -1.45315206 : f32
    %360 = vector.broadcast %cst_131 : f32 to vector<10x64xf32>
    %361 = arith.addf %359, %360 : vector<10x64xf32>
    %362 = arith.mulf %361, %357 : vector<10x64xf32>
    %cst_132 = arith.constant 1.42141378 : f32
    %363 = vector.broadcast %cst_132 : f32 to vector<10x64xf32>
    %364 = arith.addf %362, %363 : vector<10x64xf32>
    %365 = arith.mulf %364, %357 : vector<10x64xf32>
    %cst_133 = arith.constant -0.284496725 : f32
    %366 = vector.broadcast %cst_133 : f32 to vector<10x64xf32>
    %367 = arith.addf %365, %366 : vector<10x64xf32>
    %368 = arith.mulf %367, %357 : vector<10x64xf32>
    %cst_134 = arith.constant 0.254829586 : f32
    %369 = vector.broadcast %cst_134 : f32 to vector<10x64xf32>
    %370 = arith.addf %368, %369 : vector<10x64xf32>
    %371 = arith.mulf %370, %357 : vector<10x64xf32>
    %cst_135 = arith.constant 0.000000e+00 : f32
    %372 = vector.broadcast %cst_135 : f32 to vector<10x64xf32>
    %373 = arith.subf %372, %351 : vector<10x64xf32>
    %374 = arith.mulf %373, %351 : vector<10x64xf32>
    %375 = math.exp %374 : vector<10x64xf32>
    %376 = arith.mulf %371, %375 : vector<10x64xf32>
    %cst_136 = arith.constant 1.000000e+00 : f32
    %377 = vector.broadcast %cst_136 : f32 to vector<10x64xf32>
    %378 = arith.subf %377, %376 : vector<10x64xf32>
    %cst_137 = arith.constant 0.000000e+00 : f32
    %379 = vector.broadcast %cst_137 : f32 to vector<10x64xf32>
    %380 = arith.cmpf olt, %350, %379 : vector<10x64xf32>
    %cst_138 = arith.constant 0.000000e+00 : f32
    %381 = vector.broadcast %cst_138 : f32 to vector<10x64xf32>
    %382 = arith.subf %381, %378 : vector<10x64xf32>
    %383 = arith.select %380, %382, %378 : vector<10x64xi1>, vector<10x64xf32>
    %cst_139 = arith.constant 1.000000e+00 : f32
    %384 = vector.broadcast %cst_139 : f32 to vector<10x64xf32>
    %385 = arith.addf %384, %383 : vector<10x64xf32>
    %386 = arith.mulf %348, %385 : vector<10x64xf32>
    %c1_140 = arith.constant 1 : index
    %c0_141 = arith.constant 0 : index
    %c0_142 = arith.constant 0 : index
    %387 = vector.load %arg5[%c1_140, %c0_141, %c0_142] : memref<2x64x32xf32, #tpu.memory_space<vmem>>, vector<1x64x32xf32>
    %388 = vector.shape_cast %387 : vector<1x64x32xf32> to vector<64x32xf32>
    %cst_143 = arith.constant dense<0.000000e+00> : vector<10x32xf32>
    %389 = tpu.matmul %386, %388, %cst_143 {dimension_numbers = #tpu.dot_dimension_numbers<[1], [0], [0], [1], [0, 0, 1, 1], [], []>} : vector<10x64xf32>, vector<64x32xf32>, vector<10x32xf32> -> vector<10x32xf32>
    %c20 = arith.constant 20 : index
    %c0_144 = arith.constant 0 : index
    %390 = vector.load %arg7[%c20, %c0_144] : memref<21x128xf32, #tpu.memory_space<vmem>>, vector<1x32xf32>
    %391 = vector.broadcast %390 : vector<1x32xf32> to vector<10x32xf32>
    %392 = arith.addf %389, %391 : vector<10x32xf32>
    %393 = arith.addf %392, %316 : vector<10x32xf32>
    %394 = vector.extract_strided_slice %393 {offsets = [0, 0], sizes = [1, 32], strides = [1, 1]} : vector<10x32xf32> to vector<1x32xf32>
    %395 = vector.extract_strided_slice %393 {offsets = [5, 0], sizes = [1, 32], strides = [1, 1]} : vector<10x32xf32> to vector<1x32xf32>
    %396 = tpu.concatenate %394, %395 in 0 : vector<1x32xf32>, vector<1x32xf32> -> vector<2x32xf32>
    %c2 = arith.constant 2 : index
    %c0_145 = arith.constant 0 : index
    %397 = vector.load %arg7[%c2, %c0_145] : memref<21x128xf32, #tpu.memory_space<vmem>>, vector<1x32xf32>
    %c3 = arith.constant 3 : index
    %c0_146 = arith.constant 0 : index
    %398 = vector.load %arg7[%c3, %c0_146] : memref<21x128xf32, #tpu.memory_space<vmem>>, vector<1x32xf32>
    %cst_147 = arith.constant dense<0.000000e+00> : vector<2xf32>
    %399 = vector.multi_reduction <add>, %396, %cst_147 [1] : vector<2x32xf32> to vector<2xf32>
    %400 = vector.shape_cast %399 : vector<2xf32> to vector<2x1xf32>
    %cst_148 = arith.constant 3.200000e+01 : f32
    %401 = vector.broadcast %cst_148 : f32 to vector<2x1xf32>
    %402 = arith.divf %400, %401 : vector<2x1xf32>
    %403 = vector.broadcast %402 : vector<2x1xf32> to vector<2x32xf32>
    %404 = arith.subf %396, %403 : vector<2x32xf32>
    %405 = arith.mulf %404, %404 : vector<2x32xf32>
    %cst_149 = arith.constant dense<0.000000e+00> : vector<2xf32>
    %406 = vector.multi_reduction <add>, %405, %cst_149 [1] : vector<2x32xf32> to vector<2xf32>
    %407 = vector.shape_cast %406 : vector<2xf32> to vector<2x1xf32>
    %cst_150 = arith.constant 3.200000e+01 : f32
    %408 = vector.broadcast %cst_150 : f32 to vector<2x1xf32>
    %409 = arith.divf %407, %408 : vector<2x1xf32>
    %410 = vector.broadcast %402 : vector<2x1xf32> to vector<2x32xf32>
    %411 = arith.subf %396, %410 : vector<2x32xf32>
    %cst_151 = arith.constant 9.99999974E-6 : f32
    %412 = vector.broadcast %cst_151 : f32 to vector<2x1xf32>
    %413 = arith.addf %409, %412 : vector<2x1xf32>
    %414 = math.rsqrt %413 : vector<2x1xf32>
    %415 = vector.broadcast %414 : vector<2x1xf32> to vector<2x32xf32>
    %416 = arith.mulf %411, %415 : vector<2x32xf32>
    %417 = vector.broadcast %397 : vector<1x32xf32> to vector<2x32xf32>
    %418 = arith.mulf %416, %417 : vector<2x32xf32>
    %419 = vector.broadcast %398 : vector<1x32xf32> to vector<2x32xf32>
    %420 = arith.addf %418, %419 : vector<2x32xf32>
    %c0_152 = arith.constant 0 : index
    %c0_153 = arith.constant 0 : index
    %421 = vector.load %arg6[%c0_152, %c0_153] : memref<32x128xf32, #tpu.memory_space<vmem>>, vector<32x128xf32>
    %cst_154 = arith.constant dense<0.000000e+00> : vector<2x128xf32>
    %422 = tpu.matmul %420, %421, %cst_154 {dimension_numbers = #tpu.dot_dimension_numbers<[1], [0], [0], [1], [0, 0, 1, 1], [], []>} : vector<2x32xf32>, vector<32x128xf32>, vector<2x128xf32> -> vector<2x128xf32>
    %c4 = arith.constant 4 : index
    %c0_155 = arith.constant 0 : index
    %423 = vector.load %arg7[%c4, %c0_155] : memref<21x128xf32, #tpu.memory_space<vmem>>, vector<1x128xf32>
    %424 = vector.broadcast %423 : vector<1x128xf32> to vector<2x128xf32>
    %425 = arith.addf %422, %424 : vector<2x128xf32>
    %c0_156 = arith.constant 0 : index
    %c0_157 = arith.constant 0 : index
    %426 = vector.load %arg8[%c0_156, %c0_157] : memref<2x128xf32, #tpu.memory_space<vmem>>, vector<2x128xf32>
    tpu.vector_store %arg8[%c0_156, %c0_157], %425 {strides = array<i32>} : memref<2x128xf32, #tpu.memory_space<vmem>>, vector<2x128xf32>,
    return
  }
}

</mosaic_0001>

<llo_original>
// kernel: _lambda_.1
$region0: #{_lambda_.1}
  #allocation0 [shape = 'u32[]', space=smem, size = 0x4, offset = 0x4, fixed_abs, tag = 'smem constant byte address 0x4 - core index']
  #allocation1 [shape = 'u32[144,128]{1,0:T(1,128)}', space=vmem, size = 0x12000, scoped, tag = 'internal scratch']
  %s0 = inlined_call_operand.vmem [shape: f32[10,192], index: 0, kind: input, shape index: {}]
  %s1 = inlined_call_operand.vmem [shape: f32[192,32], index: 1, kind: input, shape index: {}]
  %s2 = inlined_call_operand.vmem [shape: f32[2,32,96], index: 2, kind: input, shape index: {}]
  %s3 = inlined_call_operand.vmem [shape: f32[2,32,32], index: 3, kind: input, shape index: {}]
  %s4 = inlined_call_operand.vmem [shape: f32[2,32,64], index: 4, kind: input, shape index: {}]
  %s5 = inlined_call_operand.vmem [shape: f32[2,64,32], index: 5, kind: input, shape index: {}]
  %s6 = inlined_call_operand.vmem [shape: f32[32,128], index: 6, kind: input, shape index: {}]
  %s7 = inlined_call_operand.vmem [shape: f32[21,128], index: 7, kind: input, shape index: {}]
  %s8 = inlined_call_operand.hbm [shape: f32[2,128], index: 8, kind: output, shape index: {}]
  %s9 = sld [smem:[#allocation0]]
  $region42: #{_lambda_.1} parent=0
    _
  %s11 = ssub.s32 1, %s9
  %s12 = scalar_select 0, %s11, %s9
  $region1: #{_lambda_.1} parent=0
    #allocation2 [shape = 'u8[1024]{0}', space=vmem, size = 0x400, scoped, tag = 'output window, operand 0, single buffered']
    #allocation3 [shape = 's32[1]{0}', space=sflag, size = 0x4, scoped, tag = 'scoped memory for _lambda_.1']
    %13 = vsyncpa [#allocation3], 0
    // Predicated region
    $region2: #{_lambda_.1} parent=1 // pred_check
      _
    $region3: #{_lambda_.1} parent=1 // pred_check_branch
      %15 = sbr.rel (0) target = $region5
    $region4: #{_lambda_.1} parent=1 // pred_region
      _
    $region5: #{_lambda_.1} parent=1 // pred_fallthru
      _
    // Predicated region
    $region6: #{_lambda_.1} parent=1 // pred_check
      _
    $region7: #{_lambda_.1} parent=1 // pred_check_branch
      %17 = sbr.rel (0) target = $region9
    $region8: #{_lambda_.1} parent=1 // pred_region
      _
    $region9: #{_lambda_.1} parent=1 // pred_fallthru
      _
    // Predicated region
    $region10: #{_lambda_.1} parent=1 // pred_check
      _
    $region11: #{_lambda_.1} parent=1 // pred_check_branch
      %19 = sbr.rel (0) target = $region13
    $region12: #{_lambda_.1} parent=1 // pred_region
      _
    $region13: #{_lambda_.1} parent=1 // pred_fallthru
      _
    // Predicated region
    $region14: #{_lambda_.1} parent=1 // pred_check
      _
    $region15: #{_lambda_.1} parent=1 // pred_check_branch
      %21 = sbr.rel (0) target = $region17
    $region16: #{_lambda_.1} parent=1 // pred_region
      _
    $region17: #{_lambda_.1} parent=1 // pred_fallthru
      _
    // Predicated region
    $region18: #{_lambda_.1} parent=1 // pred_check
      _
    $region19: #{_lambda_.1} parent=1 // pred_check_branch
      %23 = sbr.rel (0) target = $region21
    $region20: #{_lambda_.1} parent=1 // pred_region
      _
    $region21: #{_lambda_.1} parent=1 // pred_fallthru
      _
    // Predicated region
    $region22: #{_lambda_.1} parent=1 // pred_check
      _
    $region23: #{_lambda_.1} parent=1 // pred_check_branch
      %25 = sbr.rel (0) target = $region25
    $region24: #{_lambda_.1} parent=1 // pred_region
      _
    $region25: #{_lambda_.1} parent=1 // pred_fallthru
      _
    // Predicated region
    $region26: #{_lambda_.1} parent=1 // pred_check
      _
    $region27: #{_lambda_.1} parent=1 // pred_check_branch
      %27 = sbr.rel (0) target = $region29
    $region28: #{_lambda_.1} parent=1 // pred_region
      _
    $region29: #{_lambda_.1} parent=1 // pred_fallthru
      _
    // Predicated region
    $region30: #{_lambda_.1} parent=1 // pred_check
      _
    $region31: #{_lambda_.1} parent=1 // pred_check_branch
      %29 = sbr.rel (0) target = $region33
    $region32: #{_lambda_.1} parent=1 // pred_region
      _
    $region33: #{_lambda_.1} parent=1 // pred_fallthru
      _
    %v30 = vld [vmem:[%s0] sm:$0xff]
    %v31 = vld [vmem:[%s0 + $0x8] sm:$0xff]
    %v32 = vld [vmem:[%s0 + $0x10] sm:$0x3]
    %v33 = vld [vmem:[%s0 + $0x18] sm:$0x3]
    %v34 = vld [vmem:[%s1] sm:$0xff]
    %v35 = vld [vmem:[%s1 + $0x8] sm:$0xff]
    %v36 = vld [vmem:[%s1 + $0x10] sm:$0xff]
    %v37 = vld [vmem:[%s1 + $0x18] sm:$0xff]
    %v38 = vld [vmem:[%s1 + $0x20] sm:$0xff]
    %v39 = vld [vmem:[%s1 + $0x28] sm:$0xff]
    %v40 = vld [vmem:[%s1 + $0x30] sm:$0xff]
    %v41 = vld [vmem:[%s1 + $0x38] sm:$0xff]
    %v42 = vld [vmem:[%s1 + $0x40] sm:$0xff]
    %v43 = vld [vmem:[%s1 + $0x48] sm:$0xff]
    %v44 = vld [vmem:[%s1 + $0x50] sm:$0xff]
    %v45 = vld [vmem:[%s1 + $0x58] sm:$0xff]
    %v46 = vld [vmem:[%s1 + $0x60] sm:$0xff]
    %v47 = vld [vmem:[%s1 + $0x68] sm:$0xff]
    %v48 = vld [vmem:[%s1 + $0x70] sm:$0xff]
    %v49 = vld [vmem:[%s1 + $0x78] sm:$0xff]
    %v50 = vld [vmem:[%s1 + $0x80] sm:$0xff]
    %v51 = vld [vmem:[%s1 + $0x88] sm:$0xff]
    %v52 = vld [vmem:[%s1 + $0x90] sm:$0xff]
    %v53 = vld [vmem:[%s1 + $0x98] sm:$0xff]
    %v54 = vld [vmem:[%s1 + $0xa0] sm:$0xff]
    %v55 = vld [vmem:[%s1 + $0xa8] sm:$0xff]
    %v56 = vld [vmem:[%s1 + $0xb0] sm:$0xff]
    %v57 = vld [vmem:[%s1 + $0xb8] sm:$0xff]
    %v58 = vld [vmem:[%s7 + $0x1] sm:$0x1]
    %v59 = vlaneseq
    %v60 = vshrl.u32 %v59, 7
    %v61 = vsub.s32 0, %v60
    %v62 = vrot.slane %v58, %v61
    %vm63 = vcmask 523264
    %v65 = vsel %vm63, %v31, 0
    %v68 = vsel %vm63, %v33, 0
    %70 = vmatprep.subr.mxu0 0.0
    %71 = vmatpush1.msra.mxu0 %v34
    %72 = vmatprep.subr.mxu0 0.0
    %73 = vmatpush1.msra.mxu0 %v35
    %74 = vmatprep.subr.mxu0 0.0
    %75 = vmatpush1.msra.mxu0 %v36
    %76 = vmatprep.subr.mxu0 0.0
    %77 = vmatpush1.msra.mxu0 %v37
    %78 = vmatprep.subr.mxu0 0.0
    %79 = vmatpush1.msra.mxu0 %v38
    %80 = vmatprep.subr.mxu0 0.0
    %81 = vmatpush1.msra.mxu0 %v39
    %82 = vmatprep.subr.mxu0 0.0
    %83 = vmatpush1.msra.mxu0 %v40
    %84 = vmatprep.subr.mxu0 0.0
    %85 = vmatpush1.msra.mxu0 %v41
    %86 = vmatprep.subr.mxu0 0.0
    %87 = vmatpush1.msra.mxu0 %v42
    %88 = vmatprep.subr.mxu0 0.0
    %89 = vmatpush1.msra.mxu0 %v43
    %90 = vmatprep.subr.mxu0 0.0
    %91 = vmatpush1.msra.mxu0 %v44
    %92 = vmatprep.subr.mxu0 0.0
    %93 = vmatpush1.msra.mxu0 %v45
    %94 = vmatprep.subr.mxu0 0.0
    %95 = vmatpush1.msra.mxu0 %v46
    %96 = vmatprep.subr.mxu0 0.0
    %97 = vmatpush1.msra.mxu0 %v47
    %98 = vmatprep.subr.mxu0 0.0
    %99 = vmatpush1.msra.mxu0 %v48
    %100 = vmatprep.subr.mxu0 0.0
    %101 = vmatpush1.msra.mxu0 %v49
    %102 = vmatprep.subr.mxu0 0.0
    %103 = vmatpush1.msra.mxu0 %v50
    %104 = vmatprep.subr.mxu0 0.0
    %105 = vmatpush1.msra.mxu0 %v51
    %106 = vmatprep.subr.mxu0 0.0
    %107 = vmatpush1.msra.mxu0 %v52
    %108 = vmatprep.subr.mxu0 0.0
    %109 = vmatpush1.msra.mxu0 %v53
    %110 = vmatprep.subr.mxu0 0.0
    %111 = vmatpush1.msra.mxu0 %v54
    %112 = vmatprep.subr.mxu0 0.0
    %113 = vmatpush1.msra.mxu0 %v55
    %114 = vmatprep.subr.mxu0 0.0
    %115 = vmatpush1.msra.mxu0 %v56
    %116 = vmatprep.subr.mxu0 0.0
    %117 = vmatpush1.msra.mxu0 %v57
    %118 = vmatprep.subr.mxu0 0.0
    %119 = vmatpush1.msra.mxu0 0.0
    %120 = vmatprep.subr.mxu0 0.0
    %121 = vmatpush1.msra.mxu0 0.0
    %122 = vmatprep.subr.mxu0 0.0
    %123 = vmatpush1.msra.mxu0 0.0
    %124 = vmatprep.subr.mxu0 0.0
    %125 = vmatpush1.msra.mxu0 0.0
    %126 = vmatprep.subr.mxu0 0.0
    %127 = vmatpush1.msra.mxu0 0.0
    %128 = vmatprep.subr.mxu0 0.0
    %129 = vmatpush1.msra.mxu0 0.0
    %130 = vmatprep.subr.mxu0 0.0
    %131 = vmatpush1.msra.mxu0 0.0
    %132 = vmatprep.subr.mxu0 0.0
    %133 = vmatpush1.msra.mxu0 0.0
    %134 = vmatprep.mubr.f32.mxu0 %v65
    %135 = vmatmul.mubr.f32.gmra.mrb[0].mxu0 %v30
    %v136 = vpop.f32.mrb[0].mxu0
    %v137 = vadd.f32 %v62, %v136
    %v138 = vpop.f32.mrb[0].mxu0
    %139 = vmatprep.mubr.f32.mxu0 %v68
    %140 = vmatmul.mubr.f32.gmra.mrb[0].mxu0 %v32
    %v141 = vpop.f32.mrb[0].mxu0
    %v142 = vadd.f32 %v62, %v141
    %v143 = vpop.f32.mrb[0].mxu0
    %144 = vdwg.mxu0
    %v145 = vlaneseq
    %v146 = vshrl.u32 %v145, 7
    %v147 = vadd.s32 %v146, 8
    %vm148 = vcmp.eq.s32.totalorder %v146, 0
    %vm149 = vcmp.eq.s32.totalorder %v147, 0
    %vm150 = vcmp.eq.s32.totalorder %v146, 5
    %vm151 = vcmp.eq.s32.totalorder %v147, 5
    %vm152 = vmor %vm148, %vm150
    %vm153 = vmor %vm149, %vm151
    %v154 = vld [vmem:[%s7] sm:$0x1]
    %v155 = vlaneseq
    %v156 = vshrl.u32 %v155, 7
    %v157 = vsub.s32 0, %v156
    %v158 = vrot.slane %v154, %v157
    %v159 = vsel %vm152, %v158, %v137
    %v160 = vsel %vm153, %v158, %v142
    %v161 = vlaneseq
    %v162 = vand.u32 %v161, 127
    %vm163 = vcmp.ge.s32.totalorder %v146, 0
    %vm164 = vcmp.ge.s32.totalorder %v147, 0
    %vm165 = vcmp.lt.s32.totalorder %v146, 5
    %vm166 = vcmp.lt.s32.totalorder %v147, 5
    %vm167 = vmand %vm163, %vm165
    %vm168 = vmand %vm164, %vm166
    %vm169 = vcmp.ge.s32.totalorder %v162, 0
    %vm170 = vcmp.lt.s32.totalorder %v162, 5
    %vm171 = vmand %vm169, %vm170
    %vm172 = vmand %vm167, %vm171
    %vm173 = vmand %vm168, %vm171
    %vm174 = vcmp.ge.s32.totalorder %v146, 5
    %vm175 = vcmp.ge.s32.totalorder %v147, 5
    %vm176 = vcmp.lt.s32.totalorder %v146, 10
    %vm177 = vcmp.lt.s32.totalorder %v147, 10
    %vm178 = vmand %vm174, %vm176
    %vm179 = vmand %vm175, %vm177
    %vm180 = vcmp.ge.s32.totalorder %v162, 5
    %vm181 = vcmp.lt.s32.totalorder %v162, 10
    %vm182 = vmand %vm180, %vm181
    %vm183 = vmand %vm178, %vm182
    %vm184 = vmand %vm179, %vm182
    %vm185 = vmor %vm172, %vm183
    %vm186 = vmor %vm173, %vm184
    %v187 = vsel %vm185, 0.0, -1e+09
    %v188 = vsel %vm186, 0.0, -1e+09
    %v189 = vld [vmem:[%s7 + $0x5] sm:$0x1]
    %v190 = vld [vmem:[%s7 + $0x6] sm:$0x1]
    %vm191 = vcmask 261120
    %v192 = vsel %vm191, %v159, 0.0
    %193 = vadd.xlane.f32.xlu0 %v192
    %v194 = vpop.xlane.xlu0 %193
    %vm195 = vcmask 254976
    %v196 = vsel %vm195, %v160, 0.0
    %197 = vadd.xlane.f32.xlu0 %v196
    %v198 = vpop.xlane.xlu0 %197
    %v199 = vrcp.pop 32.0
    %v200 = vmul.f32 %v194, %v199
    %v201 = vmul.f32 %v198, %v199
    %v202 = vsub.f32 %v159, %v200
    %v203 = vsub.f32 %v160, %v201
    %v204 = vmul.f32 %v202, %v202
    %v205 = vmul.f32 %v203, %v203
    %v206 = vsel %vm191, %v204, 0.0
    %207 = vadd.xlane.f32.xlu0 %v206
    %v208 = vpop.xlane.xlu0 %207
    %v209 = vsel %vm195, %v205, 0.0
    %210 = vadd.xlane.f32.xlu0 %v209
    %v211 = vpop.xlane.xlu0 %210
    %v212 = vmul.f32 %v208, %v199
    %v213 = vmul.f32 %v211, %v199
    %v214 = vadd.f32 %v212, 1e-05
    %v215 = vadd.f32 %v213, 1e-05
    %v216 = vrsqrt.pop %v214
    %v217 = vrsqrt.pop %v215
    %v218 = vmul.f32 %v202, %v216
    %v219 = vmul.f32 %v203, %v217
    %v220 = vlaneseq
    %v221 = vshrl.u32 %v220, 7
    %v222 = vsub.s32 0, %v221
    %v223 = vrot.slane %v189, %v222
    %v224 = vmul.f32 %v218, %v223
    %v225 = vmul.f32 %v219, %v223
    %v226 = vlaneseq
    %v227 = vshrl.u32 %v226, 7
    %v228 = vsub.s32 0, %v227
    %v229 = vrot.slane %v190, %v228
    %v230 = vadd.f32 %v224, %v229
    %v231 = vadd.f32 %v225, %v229
    %v232 = vld [vmem:[%s2] sm:$0xff]
    %v233 = vld [vmem:[%s2 + $0x8] sm:$0xff]
    %v234 = vld [vmem:[%s2 + $0x10] sm:$0xff]
    %v235 = vld [vmem:[%s2 + $0x18] sm:$0xff]
    %v236 = vld [vmem:[%s7 + $0x7] sm:$0x1]
    %v237 = vlaneseq
    %v238 = vshrl.u32 %v237, 7
    %v239 = vsub.s32 0, %v238
    %v240 = vrot.slane %v236, %v239
    %v242 = vsel %vm191, %v230, 0
    %v245 = vsel %vm191, %v231, 0
    %247 = vmatprep.subr.mxu0 0.0
    %248 = vmatpush1.msra.mxu0 %v232
    %249 = vmatprep.subr.mxu0 0.0
    %250 = vmatpush1.msra.mxu0 %v233
    %251 = vmatprep.subr.mxu0 0.0
    %252 = vmatpush1.msra.mxu0 %v234
    %253 = vmatprep.subr.mxu0 0.0
    %254 = vmatpush1.msra.mxu0 %v235
    %255 = vmatprep.subr.mxu0 0.0
    %256 = vmatpush1.msra.mxu0 0.0
    %257 = vmatprep.subr.mxu0 0.0
    %258 = vmatpush1.msra.mxu0 0.0
    %259 = vmatprep.subr.mxu0 0.0
    %260 = vmatpush1.msra.mxu0 0.0
    %261 = vmatprep.subr.mxu0 0.0
    %262 = vmatpush1.msra.mxu0 0.0
    %263 = vmatprep.subr.mxu0 0.0
    %264 = vmatpush1.msra.mxu0 0.0
    %265 = vmatprep.subr.mxu0 0.0
    %266 = vmatpush1.msra.mxu0 0.0
    %267 = vmatprep.subr.mxu0 0.0
    %268 = vmatpush1.msra.mxu0 0.0
    %269 = vmatprep.subr.mxu0 0.0
    %270 = vmatpush1.msra.mxu0 0.0
    %271 = vmatprep.subr.mxu0 0.0
    %272 = vmatpush1.msra.mxu0 0.0
    %273 = vmatprep.subr.mxu0 0.0
    %274 = vmatpush1.msra.mxu0 0.0
    %275 = vmatprep.subr.mxu0 0.0
    %276 = vmatpush1.msra.mxu0 0.0
    %277 = vmatprep.subr.mxu0 0.0
    %278 = vmatpush1.msra.mxu0 0.0
    %279 = vmatprep.subr.mxu0 0.0
    %280 = vmatpush1.msra.mxu0 0.0
    %281 = vmatprep.subr.mxu0 0.0
    %282 = vmatpush1.msra.mxu0 0.0
    %283 = vmatprep.subr.mxu0 0.0
    %284 = vmatpush1.msra.mxu0 0.0
    %285 = vmatprep.subr.mxu0 0.0
    %286 = vmatpush1.msra.mxu0 0.0
    %287 = vmatprep.subr.mxu0 0.0
    %288 = vmatpush1.msra.mxu0 0.0
    %289 = vmatprep.subr.mxu0 0.0
    %290 = vmatpush1.msra.mxu0 0.0
    %291 = vmatprep.subr.mxu0 0.0
    %292 = vmatpush1.msra.mxu0 0.0
    %293 = vmatprep.subr.mxu0 0.0
    %294 = vmatpush1.msra.mxu0 0.0
    %295 = vmatprep.subr.mxu0 0.0
    %296 = vmatpush1.msra.mxu0 0.0
    %297 = vmatprep.subr.mxu0 0.0
    %298 = vmatpush1.msra.mxu0 0.0
    %299 = vmatprep.subr.mxu0 0.0
    %300 = vmatpush1.msra.mxu0 0.0
    %301 = vmatprep.subr.mxu0 0.0
    %302 = vmatpush1.msra.mxu0 0.0
    %303 = vmatprep.subr.mxu0 0.0
    %304 = vmatpush1.msra.mxu0 0.0
    %305 = vmatprep.subr.mxu0 0.0
    %306 = vmatpush1.msra.mxu0 0.0
    %307 = vmatprep.subr.mxu0 0.0
    %308 = vmatpush1.msra.mxu0 0.0
    %309 = vmatprep.subr.mxu0 0.0
    %310 = vmatpush1.msra.mxu0 0.0
    %311 = vmatprep.mubr.f32.mxu0 0.0
    %312 = vmatmul.mubr.f32.gmra.mrb[0].mxu0 %v242
    %v313 = vpop.f32.mrb[0].mxu0
    %v314 = vadd.f32 %v240, %v313
    %v315 = vpop.f32.mrb[0].mxu0
    %316 = vmatprep.mubr.f32.mxu0 0.0
    %317 = vmatmul.mubr.f32.gmra.mrb[0].mxu0 %v245
    %v318 = vpop.f32.mrb[0].mxu0
    %v319 = vadd.f32 %v240, %v318
    %v320 = vpop.f32.mrb[0].mxu0
    %321 = vdwg.mxu0
    %324 = vrot.lane.b32.xlu0 %v314, 96
    %v325 = vpop.permute.xlu0 %324
    %326 = vrot.lane.b32.xlu0 %v319, 96
    %v327 = vpop.permute.xlu0 %326
    %vm328 = vcmask 64512
    %v329 = vsel %vm328, %v314, 0
    %v331 = vsel %vm328, %v319, 0
    %v333 = vsel %vm328, %v325, 0
    %v335 = vsel %vm328, %v327, 0
    %337 = vmatprep.subr.mxu0 0.0
    %338 = vmatpush1.xpose.msra.mxu0 %v333
    %339 = vmatprep.subr.mxu0 0.0
    %340 = vmatpush1.xpose.msra.mxu0 %v335
    %341 = vmatprep.subr.mxu0 0.0
    %342 = vmatpush1.xpose.msra.mxu0 0.0
    %343 = vmatprep.subr.mxu0 0.0
    %344 = vmatpush1.xpose.msra.mxu0 0.0
    %345 = vmatprep.subr.mxu0 0.0
    %346 = vmatpush1.xpose.msra.mxu0 0.0
    %347 = vmatprep.subr.mxu0 0.0
    %348 = vmatpush1.xpose.msra.mxu0 0.0
    %349 = vmatprep.subr.mxu0 0.0
    %350 = vmatpush1.xpose.msra.mxu0 0.0
    %351 = vmatprep.subr.mxu0 0.0
    %352 = vmatpush1.xpose.msra.mxu0 0.0
    %353 = vmatprep.subr.mxu0 0.0
    %354 = vmatpush1.xpose.msra.mxu0 0.0
    %355 = vmatprep.subr.mxu0 0.0
    %356 = vmatpush1.xpose.msra.mxu0 0.0
    %357 = vmatprep.subr.mxu0 0.0
    %358 = vmatpush1.xpose.msra.mxu0 0.0
    %359 = vmatprep.subr.mxu0 0.0
    %360 = vmatpush1.xpose.msra.mxu0 0.0
    %361 = vmatprep.subr.mxu0 0.0
    %362 = vmatpush1.xpose.msra.mxu0 0.0
    %363 = vmatprep.subr.mxu0 0.0
    %364 = vmatpush1.xpose.msra.mxu0 0.0
    %365 = vmatprep.subr.mxu0 0.0
    %366 = vmatpush1.xpose.msra.mxu0 0.0
    %367 = vmatprep.subr.mxu0 0.0
    %368 = vmatpush1.xpose.msra.mxu0 0.0
    %369 = vmatprep.subr.mxu0 0.0
    %370 = vmatpush1.xpose.msra.mxu0 0.0
    %371 = vmatprep.subr.mxu0 0.0
    %372 = vmatpush1.xpose.msra.mxu0 0.0
    %373 = vmatprep.subr.mxu0 0.0
    %374 = vmatpush1.xpose.msra.mxu0 0.0
    %375 = vmatprep.subr.mxu0 0.0
    %376 = vmatpush1.xpose.msra.mxu0 0.0
    %377 = vmatprep.subr.mxu0 0.0
    %378 = vmatpush1.xpose.msra.mxu0 0.0
    %379 = vmatprep.subr.mxu0 0.0
    %380 = vmatpush1.xpose.msra.mxu0 0.0
    %381 = vmatprep.subr.mxu0 0.0
    %382 = vmatpush1.xpose.msra.mxu0 0.0
    %383 = vmatprep.subr.mxu0 0.0
    %384 = vmatpush1.xpose.msra.mxu0 0.0
    %385 = vmatprep.subr.mxu0 0.0
    %386 = vmatpush1.xpose.msra.mxu0 0.0
    %387 = vmatprep.subr.mxu0 0.0
    %388 = vmatpush1.xpose.msra.mxu0 0.0
    %389 = vmatprep.subr.mxu0 0.0
    %390 = vmatpush1.xpose.msra.mxu0 0.0
    %391 = vmatprep.subr.mxu0 0.0
    %392 = vmatpush1.xpose.msra.mxu0 0.0
    %393 = vmatprep.subr.mxu0 0.0
    %394 = vmatpush1.xpose.msra.mxu0 0.0
    %395 = vmatprep.subr.mxu0 0.0
    %396 = vmatpush1.xpose.msra.mxu0 0.0
    %397 = vmatprep.subr.mxu0 0.0
    %398 = vmatpush1.xpose.msra.mxu0 0.0
    %399 = vmatprep.subr.mxu0 0.0
    %400 = vmatpush1.xpose.msra.mxu0 0.0
    %401 = vmatprep.mubr.f32.mxu0 0.0
    %402 = vmatmul.mubr.f32.gmra.mrb[0].mxu0 %v329
    %v403 = vpop.f32.mrb[0].mxu0
    %v404 = vadd.f32 %v187, %v403
    %v405 = vpop.f32.mrb[0].mxu0
    %406 = vmatprep.mubr.f32.mxu0 0.0
    %407 = vmatmul.mubr.f32.gmra.mrb[0].mxu0 %v331
    %v408 = vpop.f32.mrb[0].mxu0
    %v409 = vadd.f32 %v188, %v408
    %v410 = vpop.f32.mrb[0].mxu0
    %411 = vdwg.mxu0
    %vm412 = vcmask 80896
    %v413 = vsel %vm412, %v404, -inf
    %414 = vmax.xlane.f32.xlu0 %v413
    %v415 = vpop.xlane.xlu0 %414
    %vm416 = vcmask 74752
    %v417 = vsel %vm416, %v409, -inf
    %418 = vmax.xlane.f32.xlu0 %v417
    %v419 = vpop.xlane.xlu0 %418
    %v420 = vsub.f32 %v404, %v415
    %v421 = vsub.f32 %v409, %v419
    %v422 = vmul.f32 %v420, 1.442695
    %v423 = vpow.pop %v422
    %v424 = vmul.f32 %v421, 1.442695
    %v425 = vpow.pop %v424
    %v426 = vsel %vm412, %v423, 0.0
    %427 = vadd.xlane.f32.xlu0 %v426
    %v428 = vpop.xlane.xlu0 %427
    %v429 = vsel %vm416, %v425, 0.0
    %430 = vadd.xlane.f32.xlu0 %v429
    %v431 = vpop.xlane.xlu0 %430
    %v432 = vrcp.pop %v428
    %v433 = vmul.f32 %v423, %v432
    %v434 = vrcp.pop %v431
    %v435 = vmul.f32 %v425, %v434
    %436 = vrot.lane.b32.xlu0 %v314, 64
    %v437 = vpop.permute.xlu0 %436
    %438 = vrot.lane.b32.xlu0 %v319, 64
    %v439 = vpop.permute.xlu0 %438
    %v442 = vsel %vm412, %v433, 0
    %v445 = vsel %vm412, %v435, 0
    %vm447 = vcmask 1041408
    %v448 = vsel %vm447, %v439, 0
    %450 = vmatprep.subr.mxu0 0.0
    %451 = vmatpush1.msra.mxu0 %v437
    %452 = vmatprep.subr.mxu0 0.0
    %453 = vmatpush1.msra.mxu0 %v448
    %454 = vmatprep.subr.mxu0 0.0
    %455 = vmatpush1.msra.mxu0 0.0
    %456 = vmatprep.subr.mxu0 0.0
    %457 = vmatpush1.msra.mxu0 0.0
    %458 = vmatprep.subr.mxu0 0.0
    %459 = vmatpush1.msra.mxu0 0.0
    %460 = vmatprep.subr.mxu0 0.0
    %461 = vmatpush1.msra.mxu0 0.0
    %462 = vmatprep.subr.mxu0 0.0
    %463 = vmatpush1.msra.mxu0 0.0
    %464 = vmatprep.subr.mxu0 0.0
    %465 = vmatpush1.msra.mxu0 0.0
    %466 = vmatprep.subr.mxu0 0.0
    %467 = vmatpush1.msra.mxu0 0.0
    %468 = vmatprep.subr.mxu0 0.0
    %469 = vmatpush1.msra.mxu0 0.0
    %470 = vmatprep.subr.mxu0 0.0
    %471 = vmatpush1.msra.mxu0 0.0
    %472 = vmatprep.subr.mxu0 0.0
    %473 = vmatpush1.msra.mxu0 0.0
    %474 = vmatprep.subr.mxu0 0.0
    %475 = vmatpush1.msra.mxu0 0.0
    %476 = vmatprep.subr.mxu0 0.0
    %477 = vmatpush1.msra.mxu0 0.0
    %478 = vmatprep.subr.mxu0 0.0
    %479 = vmatpush1.msra.mxu0 0.0
    %480 = vmatprep.subr.mxu0 0.0
    %481 = vmatpush1.msra.mxu0 0.0
    %482 = vmatprep.subr.mxu0 0.0
    %483 = vmatpush1.msra.mxu0 0.0
    %484 = vmatprep.subr.mxu0 0.0
    %485 = vmatpush1.msra.mxu0 0.0
    %486 = vmatprep.subr.mxu0 0.0
    %487 = vmatpush1.msra.mxu0 0.0
    %488 = vmatprep.subr.mxu0 0.0
    %489 = vmatpush1.msra.mxu0 0.0
    %490 = vmatprep.subr.mxu0 0.0
    %491 = vmatpush1.msra.mxu0 0.0
    %492 = vmatprep.subr.mxu0 0.0
    %493 = vmatpush1.msra.mxu0 0.0
    %494 = vmatprep.subr.mxu0 0.0
    %495 = vmatpush1.msra.mxu0 0.0
    %496 = vmatprep.subr.mxu0 0.0
    %497 = vmatpush1.msra.mxu0 0.0
    %498 = vmatprep.subr.mxu0 0.0
    %499 = vmatpush1.msra.mxu0 0.0
    %500 = vmatprep.subr.mxu0 0.0
    %501 = vmatpush1.msra.mxu0 0.0
    %502 = vmatprep.subr.mxu0 0.0
    %503 = vmatpush1.msra.mxu0 0.0
    %504 = vmatprep.subr.mxu0 0.0
    %505 = vmatpush1.msra.mxu0 0.0
    %506 = vmatprep.subr.mxu0 0.0
    %507 = vmatpush1.msra.mxu0 0.0
    %508 = vmatprep.subr.mxu0 0.0
    %509 = vmatpush1.msra.mxu0 0.0
    %510 = vmatprep.subr.mxu0 0.0
    %511 = vmatpush1.msra.mxu0 0.0
    %512 = vmatprep.subr.mxu0 0.0
    %513 = vmatpush1.msra.mxu0 0.0
    %514 = vmatprep.mubr.f32.mxu0 0.0
    %515 = vmatmul.mubr.f32.gmra.mrb[0].mxu0 %v442
    %v516 = vpop.f32.mrb[0].mxu0
    %v517 = vadd.f32 0.0, %v516
    %v518 = vpop.f32.mrb[0].mxu0
    %519 = vmatprep.mubr.f32.mxu0 0.0
    %520 = vmatmul.mubr.f32.gmra.mrb[0].mxu0 %v445
    %v521 = vpop.f32.mrb[0].mxu0
    %v522 = vadd.f32 0.0, %v521
    %v523 = vpop.f32.mrb[0].mxu0
    %524 = vdwg.mxu0
    %525 = vrot.lane.b32.xlu0 %v314, 120
    %v526 = vpop.permute.xlu0 %525
    %527 = vrot.lane.b32.xlu0 %v319, 120
    %v528 = vpop.permute.xlu0 %527
    %529 = vrot.lane.b32.xlu0 %v314, 88
    %v530 = vpop.permute.xlu0 %529
    %531 = vrot.lane.b32.xlu0 %v319, 88
    %v532 = vpop.permute.xlu0 %531
    %v533 = vsel %vm328, %v526, 0
    %v535 = vsel %vm328, %v528, 0
    %v537 = vsel %vm328, %v530, 0
    %v539 = vsel %vm328, %v532, 0
    %541 = vmatprep.subr.mxu0 0.0
    %542 = vmatpush1.xpose.msra.mxu0 %v537
    %543 = vmatprep.subr.mxu0 0.0
    %544 = vmatpush1.xpose.msra.mxu0 %v539
    %545 = vmatprep.subr.mxu0 0.0
    %546 = vmatpush1.xpose.msra.mxu0 0.0
    %547 = vmatprep.subr.mxu0 0.0
    %548 = vmatpush1.xpose.msra.mxu0 0.0
    %549 = vmatprep.subr.mxu0 0.0
    %550 = vmatpush1.xpose.msra.mxu0 0.0
    %551 = vmatprep.subr.mxu0 0.0
    %552 = vmatpush1.xpose.msra.mxu0 0.0
    %553 = vmatprep.subr.mxu0 0.0
    %554 = vmatpush1.xpose.msra.mxu0 0.0
    %555 = vmatprep.subr.mxu0 0.0
    %556 = vmatpush1.xpose.msra.mxu0 0.0
    %557 = vmatprep.subr.mxu0 0.0
    %558 = vmatpush1.xpose.msra.mxu0 0.0
    %559 = vmatprep.subr.mxu0 0.0
    %560 = vmatpush1.xpose.msra.mxu0 0.0
    %561 = vmatprep.subr.mxu0 0.0
    %562 = vmatpush1.xpose.msra.mxu0 0.0
    %563 = vmatprep.subr.mxu0 0.0
    %564 = vmatpush1.xpose.msra.mxu0 0.0
    %565 = vmatprep.subr.mxu0 0.0
    %566 = vmatpush1.xpose.msra.mxu0 0.0
    %567 = vmatprep.subr.mxu0 0.0
    %568 = vmatpush1.xpose.msra.mxu0 0.0
    %569 = vmatprep.subr.mxu0 0.0
    %570 = vmatpush1.xpose.msra.mxu0 0.0
    %571 = vmatprep.subr.mxu0 0.0
    %572 = vmatpush1.xpose.msra.mxu0 0.0
    %573 = vmatprep.subr.mxu0 0.0
    %574 = vmatpush1.xpose.msra.mxu0 0.0
    %575 = vmatprep.subr.mxu0 0.0
    %576 = vmatpush1.xpose.msra.mxu0 0.0
    %577 = vmatprep.subr.mxu0 0.0
    %578 = vmatpush1.xpose.msra.mxu0 0.0
    %579 = vmatprep.subr.mxu0 0.0
    %580 = vmatpush1.xpose.msra.mxu0 0.0
    %581 = vmatprep.subr.mxu0 0.0
    %582 = vmatpush1.xpose.msra.mxu0 0.0
    %583 = vmatprep.subr.mxu0 0.0
    %584 = vmatpush1.xpose.msra.mxu0 0.0
    %585 = vmatprep.subr.mxu0 0.0
    %586 = vmatpush1.xpose.msra.mxu0 0.0
    %587 = vmatprep.subr.mxu0 0.0
    %588 = vmatpush1.xpose.msra.mxu0 0.0
    %589 = vmatprep.subr.mxu0 0.0
    %590 = vmatpush1.xpose.msra.mxu0 0.0
    %591 = vmatprep.subr.mxu0 0.0
    %592 = vmatpush1.xpose.msra.mxu0 0.0
    %593 = vmatprep.subr.mxu0 0.0
    %594 = vmatpush1.xpose.msra.mxu0 0.0
    %595 = vmatprep.subr.mxu0 0.0
    %596 = vmatpush1.xpose.msra.mxu0 0.0
    %597 = vmatprep.subr.mxu0 0.0
    %598 = vmatpush1.xpose.msra.mxu0 0.0
    %599 = vmatprep.subr.mxu0 0.0
    %600 = vmatpush1.xpose.msra.mxu0 0.0
    %601 = vmatprep.subr.mxu0 0.0
    %602 = vmatpush1.xpose.msra.mxu0 0.0
    %603 = vmatprep.subr.mxu0 0.0
    %604 = vmatpush1.xpose.msra.mxu0 0.0
    %605 = vmatprep.mubr.f32.mxu0 0.0
    %606 = vmatmul.mubr.f32.gmra.mrb[0].mxu0 %v533
    %v607 = vpop.f32.mrb[0].mxu0
    %v608 = vadd.f32 %v187, %v607
    %v609 = vpop.f32.mrb[0].mxu0
    %610 = vmatprep.mubr.f32.mxu0 0.0
    %611 = vmatmul.mubr.f32.gmra.mrb[0].mxu0 %v535
    %v612 = vpop.f32.mrb[0].mxu0
    %v613 = vadd.f32 %v188, %v612
    %v614 = vpop.f32.mrb[0].mxu0
    %615 = vdwg.mxu0
    %v616 = vsel %vm412, %v608, -inf
    %617 = vmax.xlane.f32.xlu0 %v616
    %v618 = vpop.xlane.xlu0 %617
    %v619 = vsel %vm416, %v613, -inf
    %620 = vmax.xlane.f32.xlu0 %v619
    %v621 = vpop.xlane.xlu0 %620
    %v622 = vsub.f32 %v608, %v618
    %v623 = vsub.f32 %v613, %v621
    %v624 = vmul.f32 %v622, 1.442695
    %v625 = vpow.pop %v624
    %v626 = vmul.f32 %v623, 1.442695
    %v627 = vpow.pop %v626
    %v628 = vsel %vm412, %v625, 0.0
    %629 = vadd.xlane.f32.xlu0 %v628
    %v630 = vpop.xlane.xlu0 %629
    %v631 = vsel %vm416, %v627, 0.0
    %632 = vadd.xlane.f32.xlu0 %v631
    %v633 = vpop.xlane.xlu0 %632
    %v634 = vrcp.pop %v630
    %v635 = vmul.f32 %v625, %v634
    %v636 = vrcp.pop %v633
    %v637 = vmul.f32 %v627, %v636
    %638 = vrot.lane.b32.xlu0 %v314, 56
    %v639 = vpop.permute.xlu0 %638
    %640 = vrot.lane.b32.xlu0 %v319, 56
    %v641 = vpop.permute.xlu0 %640
    %v644 = vsel %vm412, %v635, 0
    %v647 = vsel %vm412, %v637, 0
    %v649 = vsel %vm447, %v641, 0
    %651 = vmatprep.subr.mxu0 0.0
    %652 = vmatpush1.msra.mxu0 %v639
    %653 = vmatprep.subr.mxu0 0.0
    %654 = vmatpush1.msra.mxu0 %v649
    %655 = vmatprep.subr.mxu0 0.0
    %656 = vmatpush1.msra.mxu0 0.0
    %657 = vmatprep.subr.mxu0 0.0
    %658 = vmatpush1.msra.mxu0 0.0
    %659 = vmatprep.subr.mxu0 0.0
    %660 = vmatpush1.msra.mxu0 0.0
    %661 = vmatprep.subr.mxu0 0.0
    %662 = vmatpush1.msra.mxu0 0.0
    %663 = vmatprep.subr.mxu0 0.0
    %664 = vmatpush1.msra.mxu0 0.0
    %665 = vmatprep.subr.mxu0 0.0
    %666 = vmatpush1.msra.mxu0 0.0
    %667 = vmatprep.subr.mxu0 0.0
    %668 = vmatpush1.msra.mxu0 0.0
    %669 = vmatprep.subr.mxu0 0.0
    %670 = vmatpush1.msra.mxu0 0.0
    %671 = vmatprep.subr.mxu0 0.0
    %672 = vmatpush1.msra.mxu0 0.0
    %673 = vmatprep.subr.mxu0 0.0
    %674 = vmatpush1.msra.mxu0 0.0
    %675 = vmatprep.subr.mxu0 0.0
    %676 = vmatpush1.msra.mxu0 0.0
    %677 = vmatprep.subr.mxu0 0.0
    %678 = vmatpush1.msra.mxu0 0.0
    %679 = vmatprep.subr.mxu0 0.0
    %680 = vmatpush1.msra.mxu0 0.0
    %681 = vmatprep.subr.mxu0 0.0
    %682 = vmatpush1.msra.mxu0 0.0
    %683 = vmatprep.subr.mxu0 0.0
    %684 = vmatpush1.msra.mxu0 0.0
    %685 = vmatprep.subr.mxu0 0.0
    %686 = vmatpush1.msra.mxu0 0.0
    %687 = vmatprep.subr.mxu0 0.0
    %688 = vmatpush1.msra.mxu0 0.0
    %689 = vmatprep.subr.mxu0 0.0
    %690 = vmatpush1.msra.mxu0 0.0
    %691 = vmatprep.subr.mxu0 0.0
    %692 = vmatpush1.msra.mxu0 0.0
    %693 = vmatprep.subr.mxu0 0.0
    %694 = vmatpush1.msra.mxu0 0.0
    %695 = vmatprep.subr.mxu0 0.0
    %696 = vmatpush1.msra.mxu0 0.0
    %697 = vmatprep.subr.mxu0 0.0
    %698 = vmatpush1.msra.mxu0 0.0
    %699 = vmatprep.subr.mxu0 0.0
    %700 = vmatpush1.msra.mxu0 0.0
    %701 = vmatprep.subr.mxu0 0.0
    %702 = vmatpush1.msra.mxu0 0.0
    %703 = vmatprep.subr.mxu0 0.0
    %704 = vmatpush1.msra.mxu0 0.0
    %705 = vmatprep.subr.mxu0 0.0
    %706 = vmatpush1.msra.mxu0 0.0
    %707 = vmatprep.subr.mxu0 0.0
    %708 = vmatpush1.msra.mxu0 0.0
    %709 = vmatprep.subr.mxu0 0.0
    %710 = vmatpush1.msra.mxu0 0.0
    %711 = vmatprep.subr.mxu0 0.0
    %712 = vmatpush1.msra.mxu0 0.0
    %713 = vmatprep.subr.mxu0 0.0
    %714 = vmatpush1.msra.mxu0 0.0
    %715 = vmatprep.mubr.f32.mxu0 0.0
    %716 = vmatmul.mubr.f32.gmra.mrb[0].mxu0 %v644
    %v717 = vpop.f32.mrb[0].mxu0
    %v718 = vadd.f32 0.0, %v717
    %v719 = vpop.f32.mrb[0].mxu0
    %720 = vmatprep.mubr.f32.mxu0 0.0
    %721 = vmatmul.mubr.f32.gmra.mrb[0].mxu0 %v647
    %v722 = vpop.f32.mrb[0].mxu0
    %v723 = vadd.f32 0.0, %v722
    %v724 = vpop.f32.mrb[0].mxu0
    %725 = vdwg.mxu0
    %726 = vrot.lane.b32.xlu0 %v314, 112
    %v727 = vpop.permute.xlu0 %726
    %728 = vrot.lane.b32.xlu0 %v319, 112
    %v729 = vpop.permute.xlu0 %728
    %730 = vrot.lane.b32.xlu0 %v314, 80
    %v731 = vpop.permute.xlu0 %730
    %732 = vrot.lane.b32.xlu0 %v319, 80
    %v733 = vpop.permute.xlu0 %732
    %v734 = vsel %vm328, %v727, 0
    %v736 = vsel %vm328, %v729, 0
    %v738 = vsel %vm328, %v731, 0
    %v740 = vsel %vm328, %v733, 0
    %742 = vmatprep.subr.mxu0 0.0
    %743 = vmatpush1.xpose.msra.mxu0 %v738
    %744 = vmatprep.subr.mxu0 0.0
    %745 = vmatpush1.xpose.msra.mxu0 %v740
    %746 = vmatprep.subr.mxu0 0.0
    %747 = vmatpush1.xpose.msra.mxu0 0.0
    %748 = vmatprep.subr.mxu0 0.0
    %749 = vmatpush1.xpose.msra.mxu0 0.0
    %750 = vmatprep.subr.mxu0 0.0
    %751 = vmatpush1.xpose.msra.mxu0 0.0
    %752 = vmatprep.subr.mxu0 0.0
    %753 = vmatpush1.xpose.msra.mxu0 0.0
    %754 = vmatprep.subr.mxu0 0.0
    %755 = vmatpush1.xpose.msra.mxu0 0.0
    %756 = vmatprep.subr.mxu0 0.0
    %757 = vmatpush1.xpose.msra.mxu0 0.0
    %758 = vmatprep.subr.mxu0 0.0
    %759 = vmatpush1.xpose.msra.mxu0 0.0
    %760 = vmatprep.subr.mxu0 0.0
    %761 = vmatpush1.xpose.msra.mxu0 0.0
    %762 = vmatprep.subr.mxu0 0.0
    %763 = vmatpush1.xpose.msra.mxu0 0.0
    %764 = vmatprep.subr.mxu0 0.0
    %765 = vmatpush1.xpose.msra.mxu0 0.0
    %766 = vmatprep.subr.mxu0 0.0
    %767 = vmatpush1.xpose.msra.mxu0 0.0
    %768 = vmatprep.subr.mxu0 0.0
    %769 = vmatpush1.xpose.msra.mxu0 0.0
    %770 = vmatprep.subr.mxu0 0.0
    %771 = vmatpush1.xpose.msra.mxu0 0.0
    %772 = vmatprep.subr.mxu0 0.0
    %773 = vmatpush1.xpose.msra.mxu0 0.0
    %774 = vmatprep.subr.mxu0 0.0
    %775 = vmatpush1.xpose.msra.mxu0 0.0
    %776 = vmatprep.subr.mxu0 0.0
    %777 = vmatpush1.xpose.msra.mxu0 0.0
    %778 = vmatprep.subr.mxu0 0.0
    %779 = vmatpush1.xpose.msra.mxu0 0.0
    %780 = vmatprep.subr.mxu0 0.0
    %781 = vmatpush1.xpose.msra.mxu0 0.0
    %782 = vmatprep.subr.mxu0 0.0
    %783 = vmatpush1.xpose.msra.mxu0 0.0
    %784 = vmatprep.subr.mxu0 0.0
    %785 = vmatpush1.xpose.msra.mxu0 0.0
    %786 = vmatprep.subr.mxu0 0.0
    %787 = vmatpush1.xpose.msra.mxu0 0.0
    %788 = vmatprep.subr.mxu0 0.0
    %789 = vmatpush1.xpose.msra.mxu0 0.0
    %790 = vmatprep.subr.mxu0 0.0
    %791 = vmatpush1.xpose.msra.mxu0 0.0
    %792 = vmatprep.subr.mxu0 0.0
    %793 = vmatpush1.xpose.msra.mxu0 0.0
    %794 = vmatprep.subr.mxu0 0.0
    %795 = vmatpush1.xpose.msra.mxu0 0.0
    %796 = vmatprep.subr.mxu0 0.0
    %797 = vmatpush1.xpose.msra.mxu0 0.0
    %798 = vmatprep.subr.mxu0 0.0
    %799 = vmatpush1.xpose.msra.mxu0 0.0
    %800 = vmatprep.subr.mxu0 0.0
    %801 = vmatpush1.xpose.msra.mxu0 0.0
    %802 = vmatprep.subr.mxu0 0.0
    %803 = vmatpush1.xpose.msra.mxu0 0.0
    %804 = vmatprep.subr.mxu0 0.0
    %805 = vmatpush1.xpose.msra.mxu0 0.0
    %806 = vmatprep.mubr.f32.mxu0 0.0
    %807 = vmatmul.mubr.f32.gmra.mrb[0].mxu0 %v734
    %v808 = vpop.f32.mrb[0].mxu0
    %v809 = vadd.f32 %v187, %v808
    %v810 = vpop.f32.mrb[0].mxu0
    %811 = vmatprep.mubr.f32.mxu0 0.0
    %812 = vmatmul.mubr.f32.gmra.mrb[0].mxu0 %v736
    %v813 = vpop.f32.mrb[0].mxu0
    %v814 = vadd.f32 %v188, %v813
    %v815 = vpop.f32.mrb[0].mxu0
    %816 = vdwg.mxu0
    %v817 = vsel %vm412, %v809, -inf
    %818 = vmax.xlane.f32.xlu0 %v817
    %v819 = vpop.xlane.xlu0 %818
    %v820 = vsel %vm416, %v814, -inf
    %821 = vmax.xlane.f32.xlu0 %v820
    %v822 = vpop.xlane.xlu0 %821
    %v823 = vsub.f32 %v809, %v819
    %v824 = vsub.f32 %v814, %v822
    %v825 = vmul.f32 %v823, 1.442695
    %v826 = vpow.pop %v825
    %v827 = vmul.f32 %v824, 1.442695
    %v828 = vpow.pop %v827
    %v829 = vsel %vm412, %v826, 0.0
    %830 = vadd.xlane.f32.xlu0 %v829
    %v831 = vpop.xlane.xlu0 %830
    %v832 = vsel %vm416, %v828, 0.0
    %833 = vadd.xlane.f32.xlu0 %v832
    %v834 = vpop.xlane.xlu0 %833
    %v835 = vrcp.pop %v831
    %v836 = vmul.f32 %v826, %v835
    %v837 = vrcp.pop %v834
    %v838 = vmul.f32 %v828, %v837
    %839 = vrot.lane.b32.xlu0 %v314, 48
    %v840 = vpop.permute.xlu0 %839
    %841 = vrot.lane.b32.xlu0 %v319, 48
    %v842 = vpop.permute.xlu0 %841
    %v845 = vsel %vm412, %v836, 0
    %v848 = vsel %vm412, %v838, 0
    %v850 = vsel %vm447, %v842, 0
    %852 = vmatprep.subr.mxu0 0.0
    %853 = vmatpush1.msra.mxu0 %v840
    %854 = vmatprep.subr.mxu0 0.0
    %855 = vmatpush1.msra.mxu0 %v850
    %856 = vmatprep.subr.mxu0 0.0
    %857 = vmatpush1.msra.mxu0 0.0
    %858 = vmatprep.subr.mxu0 0.0
    %859 = vmatpush1.msra.mxu0 0.0
    %860 = vmatprep.subr.mxu0 0.0
    %861 = vmatpush1.msra.mxu0 0.0
    %862 = vmatprep.subr.mxu0 0.0
    %863 = vmatpush1.msra.mxu0 0.0
    %864 = vmatprep.subr.mxu0 0.0
    %865 = vmatpush1.msra.mxu0 0.0
    %866 = vmatprep.subr.mxu0 0.0
    %867 = vmatpush1.msra.mxu0 0.0
    %868 = vmatprep.subr.mxu0 0.0
    %869 = vmatpush1.msra.mxu0 0.0
    %870 = vmatprep.subr.mxu0 0.0
    %871 = vmatpush1.msra.mxu0 0.0
    %872 = vmatprep.subr.mxu0 0.0
    %873 = vmatpush1.msra.mxu0 0.0
    %874 = vmatprep.subr.mxu0 0.0
    %875 = vmatpush1.msra.mxu0 0.0
    %876 = vmatprep.subr.mxu0 0.0
    %877 = vmatpush1.msra.mxu0 0.0
    %878 = vmatprep.subr.mxu0 0.0
    %879 = vmatpush1.msra.mxu0 0.0
    %880 = vmatprep.subr.mxu0 0.0
    %881 = vmatpush1.msra.mxu0 0.0
    %882 = vmatprep.subr.mxu0 0.0
    %883 = vmatpush1.msra.mxu0 0.0
    %884 = vmatprep.subr.mxu0 0.0
    %885 = vmatpush1.msra.mxu0 0.0
    %886 = vmatprep.subr.mxu0 0.0
    %887 = vmatpush1.msra.mxu0 0.0
    %888 = vmatprep.subr.mxu0 0.0
    %889 = vmatpush1.msra.mxu0 0.0
    %890 = vmatprep.subr.mxu0 0.0
    %891 = vmatpush1.msra.mxu0 0.0
    %892 = vmatprep.subr.mxu0 0.0
    %893 = vmatpush1.msra.mxu0 0.0
    %894 = vmatprep.subr.mxu0 0.0
    %895 = vmatpush1.msra.mxu0 0.0
    %896 = vmatprep.subr.mxu0 0.0
    %897 = vmatpush1.msra.mxu0 0.0
    %898 = vmatprep.subr.mxu0 0.0
    %899 = vmatpush1.msra.mxu0 0.0
    %900 = vmatprep.subr.mxu0 0.0
    %901 = vmatpush1.msra.mxu0 0.0
    %902 = vmatprep.subr.mxu0 0.0
    %903 = vmatpush1.msra.mxu0 0.0
    %904 = vmatprep.subr.mxu0 0.0
    %905 = vmatpush1.msra.mxu0 0.0
    %906 = vmatprep.subr.mxu0 0.0
    %907 = vmatpush1.msra.mxu0 0.0
    %908 = vmatprep.subr.mxu0 0.0
    %909 = vmatpush1.msra.mxu0 0.0
    %910 = vmatprep.subr.mxu0 0.0
    %911 = vmatpush1.msra.mxu0 0.0
    %912 = vmatprep.subr.mxu0 0.0
    %913 = vmatpush1.msra.mxu0 0.0
    %914 = vmatprep.subr.mxu0 0.0
    %915 = vmatpush1.msra.mxu0 0.0
    %916 = vmatprep.mubr.f32.mxu0 0.0
    %917 = vmatmul.mubr.f32.gmra.mrb[0].mxu0 %v845
    %v918 = vpop.f32.mrb[0].mxu0
    %v919 = vadd.f32 0.0, %v918
    %v920 = vpop.f32.mrb[0].mxu0
    %921 = vmatprep.mubr.f32.mxu0 0.0
    %922 = vmatmul.mubr.f32.gmra.mrb[0].mxu0 %v848
    %v923 = vpop.f32.mrb[0].mxu0
    %v924 = vadd.f32 0.0, %v923
    %v925 = vpop.f32.mrb[0].mxu0
    %926 = vdwg.mxu0
    %927 = vrot.lane.b32.xlu0 %v314, 104
    %v928 = vpop.permute.xlu0 %927
    %929 = vrot.lane.b32.xlu0 %v319, 104
    %v930 = vpop.permute.xlu0 %929
    %931 = vrot.lane.b32.xlu0 %v314, 72
    %v932 = vpop.permute.xlu0 %931
    %933 = vrot.lane.b32.xlu0 %v319, 72
    %v934 = vpop.permute.xlu0 %933
    %v935 = vsel %vm328, %v928, 0
    %v937 = vsel %vm328, %v930, 0
    %v939 = vsel %vm328, %v932, 0
    %v941 = vsel %vm328, %v934, 0
    %943 = vmatprep.subr.mxu0 0.0
    %944 = vmatpush1.xpose.msra.mxu0 %v939
    %945 = vmatprep.subr.mxu0 0.0
    %946 = vmatpush1.xpose.msra.mxu0 %v941
    %947 = vmatprep.subr.mxu0 0.0
    %948 = vmatpush1.xpose.msra.mxu0 0.0
    %949 = vmatprep.subr.mxu0 0.0
    %950 = vmatpush1.xpose.msra.mxu0 0.0
    %951 = vmatprep.subr.mxu0 0.0
    %952 = vmatpush1.xpose.msra.mxu0 0.0
    %953 = vmatprep.subr.mxu0 0.0
    %954 = vmatpush1.xpose.msra.mxu0 0.0
    %955 = vmatprep.subr.mxu0 0.0
    %956 = vmatpush1.xpose.msra.mxu0 0.0
    %957 = vmatprep.subr.mxu0 0.0
    %958 = vmatpush1.xpose.msra.mxu0 0.0
    %959 = vmatprep.subr.mxu0 0.0
    %960 = vmatpush1.xpose.msra.mxu0 0.0
    %961 = vmatprep.subr.mxu0 0.0
    %962 = vmatpush1.xpose.msra.mxu0 0.0
    %963 = vmatprep.subr.mxu0 0.0
    %964 = vmatpush1.xpose.msra.mxu0 0.0
    %965 = vmatprep.subr.mxu0 0.0
    %966 = vmatpush1.xpose.msra.mxu0 0.0
    %967 = vmatprep.subr.mxu0 0.0
    %968 = vmatpush1.xpose.msra.mxu0 0.0
    %969 = vmatprep.subr.mxu0 0.0
    %970 = vmatpush1.xpose.msra.mxu0 0.0
    %971 = vmatprep.subr.mxu0 0.0
    %972 = vmatpush1.xpose.msra.mxu0 0.0
    %973 = vmatprep.subr.mxu0 0.0
    %974 = vmatpush1.xpose.msra.mxu0 0.0
    %975 = vmatprep.subr.mxu0 0.0
    %976 = vmatpush1.xpose.msra.mxu0 0.0
    %977 = vmatprep.subr.mxu0 0.0
    %978 = vmatpush1.xpose.msra.mxu0 0.0
    %979 = vmatprep.subr.mxu0 0.0
    %980 = vmatpush1.xpose.msra.mxu0 0.0
    %981 = vmatprep.subr.mxu0 0.0
    %982 = vmatpush1.xpose.msra.mxu0 0.0
    %983 = vmatprep.subr.mxu0 0.0
    %984 = vmatpush1.xpose.msra.mxu0 0.0
    %985 = vmatprep.subr.mxu0 0.0
    %986 = vmatpush1.xpose.msra.mxu0 0.0
    %987 = vmatprep.subr.mxu0 0.0
    %988 = vmatpush1.xpose.msra.mxu0 0.0
    %989 = vmatprep.subr.mxu0 0.0
    %990 = vmatpush1.xpose.msra.mxu0 0.0
    %991 = vmatprep.subr.mxu0 0.0
    %992 = vmatpush1.xpose.msra.mxu0 0.0
    %993 = vmatprep.subr.mxu0 0.0
    %994 = vmatpush1.xpose.msra.mxu0 0.0
    %995 = vmatprep.subr.mxu0 0.0
    %996 = vmatpush1.xpose.msra.mxu0 0.0
    %997 = vmatprep.subr.mxu0 0.0
    %998 = vmatpush1.xpose.msra.mxu0 0.0
    %999 = vmatprep.subr.mxu0 0.0
    %1000 = vmatpush1.xpose.msra.mxu0 0.0
    %1001 = vmatprep.subr.mxu0 0.0
    %1002 = vmatpush1.xpose.msra.mxu0 0.0
    %1003 = vmatprep.subr.mxu0 0.0
    %1004 = vmatpush1.xpose.msra.mxu0 0.0
    %1005 = vmatprep.subr.mxu0 0.0
    %1006 = vmatpush1.xpose.msra.mxu0 0.0
    %1007 = vmatprep.mubr.f32.mxu0 0.0
    %1008 = vmatmul.mubr.f32.gmra.mrb[0].mxu0 %v935
    %v1009 = vpop.f32.mrb[0].mxu0
    %v1010 = vadd.f32 %v187, %v1009
    %v1011 = vpop.f32.mrb[0].mxu0
    %1012 = vmatprep.mubr.f32.mxu0 0.0
    %1013 = vmatmul.mubr.f32.gmra.mrb[0].mxu0 %v937
    %v1014 = vpop.f32.mrb[0].mxu0
    %v1015 = vadd.f32 %v188, %v1014
    %v1016 = vpop.f32.mrb[0].mxu0
    %1017 = vdwg.mxu0
    %v1018 = vsel %vm412, %v1010, -inf
    %1019 = vmax.xlane.f32.xlu0 %v1018
    %v1020 = vpop.xlane.xlu0 %1019
    %v1021 = vsel %vm416, %v1015, -inf
    %1022 = vmax.xlane.f32.xlu0 %v1021
    %v1023 = vpop.xlane.xlu0 %1022
    %v1024 = vsub.f32 %v1010, %v1020
    %v1025 = vsub.f32 %v1015, %v1023
    %v1026 = vmul.f32 %v1024, 1.442695
    %v1027 = vpow.pop %v1026
    %v1028 = vmul.f32 %v1025, 1.442695
    %v1029 = vpow.pop %v1028
    %v1030 = vsel %vm412, %v1027, 0.0
    %1031 = vadd.xlane.f32.xlu0 %v1030
    %v1032 = vpop.xlane.xlu0 %1031
    %v1033 = vsel %vm416, %v1029, 0.0
    %1034 = vadd.xlane.f32.xlu0 %v1033
    %v1035 = vpop.xlane.xlu0 %1034
    %v1036 = vrcp.pop %v1032
    %v1037 = vmul.f32 %v1027, %v1036
    %v1038 = vrcp.pop %v1035
    %v1039 = vmul.f32 %v1029, %v1038
    %1040 = vrot.lane.b32.xlu0 %v314, 40
    %v1041 = vpop.permute.xlu0 %1040
    %1042 = vrot.lane.b32.xlu0 %v319, 40
    %v1043 = vpop.permute.xlu0 %1042
    %v1046 = vsel %vm412, %v1037, 0
    %v1049 = vsel %vm412, %v1039, 0
    %v1051 = vsel %vm447, %v1043, 0
    %1053 = vmatprep.subr.mxu0 0.0
    %1054 = vmatpush1.msra.mxu0 %v1041
    %1055 = vmatprep.subr.mxu0 0.0
    %1056 = vmatpush1.msra.mxu0 %v1051
    %1057 = vmatprep.subr.mxu0 0.0
    %1058 = vmatpush1.msra.mxu0 0.0
    %1059 = vmatprep.subr.mxu0 0.0
    %1060 = vmatpush1.msra.mxu0 0.0
    %1061 = vmatprep.subr.mxu0 0.0
    %1062 = vmatpush1.msra.mxu0 0.0
    %1063 = vmatprep.subr.mxu0 0.0
    %1064 = vmatpush1.msra.mxu0 0.0
    %1065 = vmatprep.subr.mxu0 0.0
    %1066 = vmatpush1.msra.mxu0 0.0
    %1067 = vmatprep.subr.mxu0 0.0
    %1068 = vmatpush1.msra.mxu0 0.0
    %1069 = vmatprep.subr.mxu0 0.0
    %1070 = vmatpush1.msra.mxu0 0.0
    %1071 = vmatprep.subr.mxu0 0.0
    %1072 = vmatpush1.msra.mxu0 0.0
    %1073 = vmatprep.subr.mxu0 0.0
    %1074 = vmatpush1.msra.mxu0 0.0
    %1075 = vmatprep.subr.mxu0 0.0
    %1076 = vmatpush1.msra.mxu0 0.0
    %1077 = vmatprep.subr.mxu0 0.0
    %1078 = vmatpush1.msra.mxu0 0.0
    %1079 = vmatprep.subr.mxu0 0.0
    %1080 = vmatpush1.msra.mxu0 0.0
    %1081 = vmatprep.subr.mxu0 0.0
    %1082 = vmatpush1.msra.mxu0 0.0
    %1083 = vmatprep.subr.mxu0 0.0
    %1084 = vmatpush1.msra.mxu0 0.0
    %1085 = vmatprep.subr.mxu0 0.0
    %1086 = vmatpush1.msra.mxu0 0.0
    %1087 = vmatprep.subr.mxu0 0.0
    %1088 = vmatpush1.msra.mxu0 0.0
    %1089 = vmatprep.subr.mxu0 0.0
    %1090 = vmatpush1.msra.mxu0 0.0
    %1091 = vmatprep.subr.mxu0 0.0
    %1092 = vmatpush1.msra.mxu0 0.0
    %1093 = vmatprep.subr.mxu0 0.0
    %1094 = vmatpush1.msra.mxu0 0.0
    %1095 = vmatprep.subr.mxu0 0.0
    %1096 = vmatpush1.msra.mxu0 0.0
    %1097 = vmatprep.subr.mxu0 0.0
    %1098 = vmatpush1.msra.mxu0 0.0
    %1099 = vmatprep.subr.mxu0 0.0
    %1100 = vmatpush1.msra.mxu0 0.0
    %1101 = vmatprep.subr.mxu0 0.0
    %1102 = vmatpush1.msra.mxu0 0.0
    %1103 = vmatprep.subr.mxu0 0.0
    %1104 = vmatpush1.msra.mxu0 0.0
    %1105 = vmatprep.subr.mxu0 0.0
    %1106 = vmatpush1.msra.mxu0 0.0
    %1107 = vmatprep.subr.mxu0 0.0
    %1108 = vmatpush1.msra.mxu0 0.0
    %1109 = vmatprep.subr.mxu0 0.0
    %1110 = vmatpush1.msra.mxu0 0.0
    %1111 = vmatprep.subr.mxu0 0.0
    %1112 = vmatpush1.msra.mxu0 0.0
    %1113 = vmatprep.subr.mxu0 0.0
    %1114 = vmatpush1.msra.mxu0 0.0
    %1115 = vmatprep.subr.mxu0 0.0
    %1116 = vmatpush1.msra.mxu0 0.0
    %1117 = vmatprep.mubr.f32.mxu0 0.0
    %1118 = vmatmul.mubr.f32.gmra.mrb[0].mxu0 %v1046
    %v1119 = vpop.f32.mrb[0].mxu0
    %v1120 = vadd.f32 0.0, %v1119
    %v1121 = vpop.f32.mrb[0].mxu0
    %1122 = vmatprep.mubr.f32.mxu0 0.0
    %1123 = vmatmul.mubr.f32.gmra.mrb[0].mxu0 %v1049
    %v1124 = vpop.f32.mrb[0].mxu0
    %v1125 = vadd.f32 0.0, %v1124
    %v1126 = vpop.f32.mrb[0].mxu0
    %1127 = vdwg.mxu0
    %1130 = vrot.lane.b32.xlu0 %v718, 8
    %v1131 = vpop.permute.xlu0 %1130
    %1132 = vrot.lane.b32.xlu0 %v723, 8
    %v1133 = vpop.permute.xlu0 %1132
    %1138 = vrot.lane.b32.xlu0 %v919, 16
    %v1139 = vpop.permute.xlu0 %1138
    %1140 = vrot.lane.b32.xlu0 %v924, 16
    %v1141 = vpop.permute.xlu0 %1140
    %1146 = vrot.lane.b32.xlu0 %v1120, 24
    %v1147 = vpop.permute.xlu0 %1146
    %1148 = vrot.lane.b32.xlu0 %v1125, 24
    %v1149 = vpop.permute.xlu0 %1148
    %v1152 = vsel %vm328, %v517, %v1131
    %v1153 = vsel %vm328, %v522, %v1133
    %vm1154 = vcmask 130048
    %v1155 = vsel %vm1154, %v1152, %v1139
    %v1156 = vsel %vm1154, %v1153, %v1141
    %vm1157 = vcmask 195584
    %v1158 = vsel %vm1157, %v1155, %v1147
    %v1159 = vsel %vm1157, %v1156, %v1149
    %v1160 = vld [vmem:[%s3] sm:$0xff]
    %v1161 = vld [vmem:[%s3 + $0x8] sm:$0xff]
    %v1162 = vld [vmem:[%s3 + $0x10] sm:$0xff]
    %v1163 = vld [vmem:[%s3 + $0x18] sm:$0xff]
    %v1164 = vld [vmem:[%s7 + $0x8] sm:$0x1]
    %v1165 = vlaneseq
    %v1166 = vshrl.u32 %v1165, 7
    %v1167 = vsub.s32 0, %v1166
    %v1168 = vrot.slane %v1164, %v1167
    %v1170 = vsel %vm191, %v1158, 0
    %v1173 = vsel %vm191, %v1159, 0
    %1175 = vmatprep.subr.mxu0 0.0
    %1176 = vmatpush1.msra.mxu0 %v1160
    %1177 = vmatprep.subr.mxu0 0.0
    %1178 = vmatpush1.msra.mxu0 %v1161
    %1179 = vmatprep.subr.mxu0 0.0
    %1180 = vmatpush1.msra.mxu0 %v1162
    %1181 = vmatprep.subr.mxu0 0.0
    %1182 = vmatpush1.msra.mxu0 %v1163
    %1183 = vmatprep.subr.mxu0 0.0
    %1184 = vmatpush1.msra.mxu0 0.0
    %1185 = vmatprep.subr.mxu0 0.0
    %1186 = vmatpush1.msra.mxu0 0.0
    %1187 = vmatprep.subr.mxu0 0.0
    %1188 = vmatpush1.msra.mxu0 0.0
    %1189 = vmatprep.subr.mxu0 0.0
    %1190 = vmatpush1.msra.mxu0 0.0
    %1191 = vmatprep.subr.mxu0 0.0
    %1192 = vmatpush1.msra.mxu0 0.0
    %1193 = vmatprep.subr.mxu0 0.0
    %1194 = vmatpush1.msra.mxu0 0.0
    %1195 = vmatprep.subr.mxu0 0.0
    %1196 = vmatpush1.msra.mxu0 0.0
    %1197 = vmatprep.subr.mxu0 0.0
    %1198 = vmatpush1.msra.mxu0 0.0
    %1199 = vmatprep.subr.mxu0 0.0
    %1200 = vmatpush1.msra.mxu0 0.0
    %1201 = vmatprep.subr.mxu0 0.0
    %1202 = vmatpush1.msra.mxu0 0.0
    %1203 = vmatprep.subr.mxu0 0.0
    %1204 = vmatpush1.msra.mxu0 0.0
    %1205 = vmatprep.subr.mxu0 0.0
    %1206 = vmatpush1.msra.mxu0 0.0
    %1207 = vmatprep.subr.mxu0 0.0
    %1208 = vmatpush1.msra.mxu0 0.0
    %1209 = vmatprep.subr.mxu0 0.0
    %1210 = vmatpush1.msra.mxu0 0.0
    %1211 = vmatprep.subr.mxu0 0.0
    %1212 = vmatpush1.msra.mxu0 0.0
    %1213 = vmatprep.subr.mxu0 0.0
    %1214 = vmatpush1.msra.mxu0 0.0
    %1215 = vmatprep.subr.mxu0 0.0
    %1216 = vmatpush1.msra.mxu0 0.0
    %1217 = vmatprep.subr.mxu0 0.0
    %1218 = vmatpush1.msra.mxu0 0.0
    %1219 = vmatprep.subr.mxu0 0.0
    %1220 = vmatpush1.msra.mxu0 0.0
    %1221 = vmatprep.subr.mxu0 0.0
    %1222 = vmatpush1.msra.mxu0 0.0
    %1223 = vmatprep.subr.mxu0 0.0
    %1224 = vmatpush1.msra.mxu0 0.0
    %1225 = vmatprep.subr.mxu0 0.0
    %1226 = vmatpush1.msra.mxu0 0.0
    %1227 = vmatprep.subr.mxu0 0.0
    %1228 = vmatpush1.msra.mxu0 0.0
    %1229 = vmatprep.subr.mxu0 0.0
    %1230 = vmatpush1.msra.mxu0 0.0
    %1231 = vmatprep.subr.mxu0 0.0
    %1232 = vmatpush1.msra.mxu0 0.0
    %1233 = vmatprep.subr.mxu0 0.0
    %1234 = vmatpush1.msra.mxu0 0.0
    %1235 = vmatprep.subr.mxu0 0.0
    %1236 = vmatpush1.msra.mxu0 0.0
    %1237 = vmatprep.subr.mxu0 0.0
    %1238 = vmatpush1.msra.mxu0 0.0
    %1239 = vmatprep.mubr.f32.mxu0 0.0
    %1240 = vmatmul.mubr.f32.gmra.mrb[0].mxu0 %v1170
    %v1241 = vpop.f32.mrb[0].mxu0
    %v1242 = vadd.f32 %v1168, %v1241
    %v1243 = vpop.f32.mrb[0].mxu0
    %1244 = vmatprep.mubr.f32.mxu0 0.0
    %1245 = vmatmul.mubr.f32.gmra.mrb[0].mxu0 %v1173
    %v1246 = vpop.f32.mrb[0].mxu0
    %v1247 = vadd.f32 %v1168, %v1246
    %v1248 = vpop.f32.mrb[0].mxu0
    %1249 = vdwg.mxu0
    %v1250 = vadd.f32 %v1242, %v159
    %v1251 = vadd.f32 %v1247, %v160
    %v1252 = vld [vmem:[%s7 + $0x9] sm:$0x1]
    %v1253 = vld [vmem:[%s7 + $0xa] sm:$0x1]
    %v1254 = vsel %vm191, %v1250, 0.0
    %1255 = vadd.xlane.f32.xlu0 %v1254
    %v1256 = vpop.xlane.xlu0 %1255
    %v1257 = vsel %vm195, %v1251, 0.0
    %1258 = vadd.xlane.f32.xlu0 %v1257
    %v1259 = vpop.xlane.xlu0 %1258
    %v1260 = vmul.f32 %v1256, %v199
    %v1261 = vmul.f32 %v1259, %v199
    %v1262 = vsub.f32 %v1250, %v1260
    %v1263 = vsub.f32 %v1251, %v1261
    %v1264 = vmul.f32 %v1262, %v1262
    %v1265 = vmul.f32 %v1263, %v1263
    %v1266 = vsel %vm191, %v1264, 0.0
    %1267 = vadd.xlane.f32.xlu0 %v1266
    %v1268 = vpop.xlane.xlu0 %1267
    %v1269 = vsel %vm195, %v1265, 0.0
    %1270 = vadd.xlane.f32.xlu0 %v1269
    %v1271 = vpop.xlane.xlu0 %1270
    %v1272 = vmul.f32 %v1268, %v199
    %v1273 = vmul.f32 %v1271, %v199
    %v1274 = vadd.f32 %v1272, 1e-05
    %v1275 = vadd.f32 %v1273, 1e-05
    %v1276 = vrsqrt.pop %v1274
    %v1277 = vrsqrt.pop %v1275
    %v1278 = vmul.f32 %v1262, %v1276
    %v1279 = vmul.f32 %v1263, %v1277
    %v1280 = vlaneseq
    %v1281 = vshrl.u32 %v1280, 7
    %v1282 = vsub.s32 0, %v1281
    %v1283 = vrot.slane %v1252, %v1282
    %v1284 = vmul.f32 %v1278, %v1283
    %v1285 = vmul.f32 %v1279, %v1283
    %v1286 = vlaneseq
    %v1287 = vshrl.u32 %v1286, 7
    %v1288 = vsub.s32 0, %v1287
    %v1289 = vrot.slane %v1253, %v1288
    %v1290 = vadd.f32 %v1284, %v1289
    %v1291 = vadd.f32 %v1285, %v1289
    %v1292 = vld [vmem:[%s4] sm:$0xff]
    %v1293 = vld [vmem:[%s4 + $0x8] sm:$0xff]
    %v1294 = vld [vmem:[%s4 + $0x10] sm:$0xff]
    %v1295 = vld [vmem:[%s4 + $0x18] sm:$0xff]
    %v1296 = vld [vmem:[%s7 + $0xb] sm:$0x1]
    %v1297 = vlaneseq
    %v1298 = vshrl.u32 %v1297, 7
    %v1299 = vsub.s32 0, %v1298
    %v1300 = vrot.slane %v1296, %v1299
    %v1302 = vsel %vm191, %v1290, 0
    %v1305 = vsel %vm191, %v1291, 0
    %1307 = vmatprep.subr.mxu0 0.0
    %1308 = vmatpush1.msra.mxu0 %v1292
    %1309 = vmatprep.subr.mxu0 0.0
    %1310 = vmatpush1.msra.mxu0 %v1293
    %1311 = vmatprep.subr.mxu0 0.0
    %1312 = vmatpush1.msra.mxu0 %v1294
    %1313 = vmatprep.subr.mxu0 0.0
    %1314 = vmatpush1.msra.mxu0 %v1295
    %1315 = vmatprep.subr.mxu0 0.0
    %1316 = vmatpush1.msra.mxu0 0.0
    %1317 = vmatprep.subr.mxu0 0.0
    %1318 = vmatpush1.msra.mxu0 0.0
    %1319 = vmatprep.subr.mxu0 0.0
    %1320 = vmatpush1.msra.mxu0 0.0
    %1321 = vmatprep.subr.mxu0 0.0
    %1322 = vmatpush1.msra.mxu0 0.0
    %1323 = vmatprep.subr.mxu0 0.0
    %1324 = vmatpush1.msra.mxu0 0.0
    %1325 = vmatprep.subr.mxu0 0.0
    %1326 = vmatpush1.msra.mxu0 0.0
    %1327 = vmatprep.subr.mxu0 0.0
    %1328 = vmatpush1.msra.mxu0 0.0
    %1329 = vmatprep.subr.mxu0 0.0
    %1330 = vmatpush1.msra.mxu0 0.0
    %1331 = vmatprep.subr.mxu0 0.0
    %1332 = vmatpush1.msra.mxu0 0.0
    %1333 = vmatprep.subr.mxu0 0.0
    %1334 = vmatpush1.msra.mxu0 0.0
    %1335 = vmatprep.subr.mxu0 0.0
    %1336 = vmatpush1.msra.mxu0 0.0
    %1337 = vmatprep.subr.mxu0 0.0
    %1338 = vmatpush1.msra.mxu0 0.0
    %1339 = vmatprep.subr.mxu0 0.0
    %1340 = vmatpush1.msra.mxu0 0.0
    %1341 = vmatprep.subr.mxu0 0.0
    %1342 = vmatpush1.msra.mxu0 0.0
    %1343 = vmatprep.subr.mxu0 0.0
    %1344 = vmatpush1.msra.mxu0 0.0
    %1345 = vmatprep.subr.mxu0 0.0
    %1346 = vmatpush1.msra.mxu0 0.0
    %1347 = vmatprep.subr.mxu0 0.0
    %1348 = vmatpush1.msra.mxu0 0.0
    %1349 = vmatprep.subr.mxu0 0.0
    %1350 = vmatpush1.msra.mxu0 0.0
    %1351 = vmatprep.subr.mxu0 0.0
    %1352 = vmatpush1.msra.mxu0 0.0
    %1353 = vmatprep.subr.mxu0 0.0
    %1354 = vmatpush1.msra.mxu0 0.0
    %1355 = vmatprep.subr.mxu0 0.0
    %1356 = vmatpush1.msra.mxu0 0.0
    %1357 = vmatprep.subr.mxu0 0.0
    %1358 = vmatpush1.msra.mxu0 0.0
    %1359 = vmatprep.subr.mxu0 0.0
    %1360 = vmatpush1.msra.mxu0 0.0
    %1361 = vmatprep.subr.mxu0 0.0
    %1362 = vmatpush1.msra.mxu0 0.0
    %1363 = vmatprep.subr.mxu0 0.0
    %1364 = vmatpush1.msra.mxu0 0.0
    %1365 = vmatprep.subr.mxu0 0.0
    %1366 = vmatpush1.msra.mxu0 0.0
    %1367 = vmatprep.subr.mxu0 0.0
    %1368 = vmatpush1.msra.mxu0 0.0
    %1369 = vmatprep.subr.mxu0 0.0
    %1370 = vmatpush1.msra.mxu0 0.0
    %1371 = vmatprep.mubr.f32.mxu0 0.0
    %1372 = vmatmul.mubr.f32.gmra.mrb[0].mxu0 %v1302
    %v1373 = vpop.f32.mrb[0].mxu0
    %v1374 = vadd.f32 %v1300, %v1373
    %v1375 = vpop.f32.mrb[0].mxu0
    %1376 = vmatprep.mubr.f32.mxu0 0.0
    %1377 = vmatmul.mubr.f32.gmra.mrb[0].mxu0 %v1305
    %v1378 = vpop.f32.mrb[0].mxu0
    %v1379 = vadd.f32 %v1300, %v1378
    %v1380 = vpop.f32.mrb[0].mxu0
    %1381 = vdwg.mxu0
    %v1382 = vmul.f32 %v1374, 0.5
    %v1383 = vmul.f32 %v1379, 0.5
    %v1384 = vmul.f32 %v1374, 0.70710677
    %v1385 = vmul.f32 %v1379, 0.70710677
    %v1386 = vand.u32 2147483647, %v1384
    %v1387 = vand.u32 2147483647, %v1385
    %v1388 = vmul.f32 %v1386, 0.3275911
    %v1389 = vmul.f32 %v1387, 0.3275911
    %v1390 = vadd.f32 %v1388, 1.0
    %v1391 = vadd.f32 %v1389, 1.0
    %v1392 = vrcp.pop %v1390
    %v1393 = vmul.f32 1.0, %v1392
    %v1394 = vrcp.pop %v1391
    %v1395 = vmul.f32 1.0, %v1394
    %v1396 = vmul.f32 %v1393, 1.0614054
    %v1397 = vmul.f32 %v1395, 1.0614054
    %v1398 = vadd.f32 %v1396, -1.4531521
    %v1399 = vadd.f32 %v1397, -1.4531521
    %v1400 = vmul.f32 %v1398, %v1393
    %v1401 = vmul.f32 %v1399, %v1395
    %v1402 = vadd.f32 %v1400, 1.4214138
    %v1403 = vadd.f32 %v1401, 1.4214138
    %v1404 = vmul.f32 %v1402, %v1393
    %v1405 = vmul.f32 %v1403, %v1395
    %v1406 = vadd.f32 %v1404, -0.28449672
    %v1407 = vadd.f32 %v1405, -0.28449672
    %v1408 = vmul.f32 %v1406, %v1393
    %v1409 = vmul.f32 %v1407, %v1395
    %v1410 = vadd.f32 %v1408, 0.2548296
    %v1411 = vadd.f32 %v1409, 0.2548296
    %v1412 = vmul.f32 %v1410, %v1393
    %v1413 = vmul.f32 %v1411, %v1395
    %v1414 = vsub.f32 0.0, %v1386
    %v1415 = vsub.f32 0.0, %v1387
    %v1416 = vmul.f32 %v1414, %v1386
    %v1417 = vmul.f32 %v1415, %v1387
    %v1418 = vmul.f32 %v1416, 1.442695
    %v1419 = vpow.pop %v1418
    %v1420 = vmul.f32 %v1417, 1.442695
    %v1421 = vpow.pop %v1420
    %v1422 = vmul.f32 %v1412, %v1419
    %v1423 = vmul.f32 %v1413, %v1421
    %v1424 = vsub.f32 1.0, %v1422
    %v1425 = vsub.f32 1.0, %v1423
    %vm1426 = vcmp.lt.f32.partialorder %v1384, 0.0
    %vm1427 = vcmp.lt.f32.partialorder %v1385, 0.0
    %v1428 = vsub.f32 0.0, %v1424
    %v1429 = vsub.f32 0.0, %v1425
    %v1430 = vsel %vm1426, %v1428, %v1424
    %v1431 = vsel %vm1427, %v1429, %v1425
    %v1432 = vadd.f32 %v1430, 1.0
    %v1433 = vadd.f32 %v1431, 1.0
    %v1434 = vmul.f32 %v1382, %v1432
    %v1435 = vmul.f32 %v1383, %v1433
    %v1436 = vld [vmem:[%s5] sm:$0xff]
    %v1437 = vld [vmem:[%s5 + $0x8] sm:$0xff]
    %v1438 = vld [vmem:[%s5 + $0x10] sm:$0xff]
    %v1439 = vld [vmem:[%s5 + $0x18] sm:$0xff]
    %v1440 = vld [vmem:[%s5 + $0x20] sm:$0xff]
    %v1441 = vld [vmem:[%s5 + $0x28] sm:$0xff]
    %v1442 = vld [vmem:[%s5 + $0x30] sm:$0xff]
    %v1443 = vld [vmem:[%s5 + $0x38] sm:$0xff]
    %v1444 = vld [vmem:[%s7 + $0xc] sm:$0x1]
    %v1445 = vlaneseq
    %v1446 = vshrl.u32 %v1445, 7
    %v1447 = vsub.s32 0, %v1446
    %v1448 = vrot.slane %v1444, %v1447
    %v1450 = vsel %vm63, %v1434, 0
    %v1453 = vsel %vm63, %v1435, 0
    %1455 = vmatprep.subr.mxu0 0.0
    %1456 = vmatpush1.msra.mxu0 %v1436
    %1457 = vmatprep.subr.mxu0 0.0
    %1458 = vmatpush1.msra.mxu0 %v1437
    %1459 = vmatprep.subr.mxu0 0.0
    %1460 = vmatpush1.msra.mxu0 %v1438
    %1461 = vmatprep.subr.mxu0 0.0
    %1462 = vmatpush1.msra.mxu0 %v1439
    %1463 = vmatprep.subr.mxu0 0.0
    %1464 = vmatpush1.msra.mxu0 %v1440
    %1465 = vmatprep.subr.mxu0 0.0
    %1466 = vmatpush1.msra.mxu0 %v1441
    %1467 = vmatprep.subr.mxu0 0.0
    %1468 = vmatpush1.msra.mxu0 %v1442
    %1469 = vmatprep.subr.mxu0 0.0
    %1470 = vmatpush1.msra.mxu0 %v1443
    %1471 = vmatprep.subr.mxu0 0.0
    %1472 = vmatpush1.msra.mxu0 0.0
    %1473 = vmatprep.subr.mxu0 0.0
    %1474 = vmatpush1.msra.mxu0 0.0
    %1475 = vmatprep.subr.mxu0 0.0
    %1476 = vmatpush1.msra.mxu0 0.0
    %1477 = vmatprep.subr.mxu0 0.0
    %1478 = vmatpush1.msra.mxu0 0.0
    %1479 = vmatprep.subr.mxu0 0.0
    %1480 = vmatpush1.msra.mxu0 0.0
    %1481 = vmatprep.subr.mxu0 0.0
    %1482 = vmatpush1.msra.mxu0 0.0
    %1483 = vmatprep.subr.mxu0 0.0
    %1484 = vmatpush1.msra.mxu0 0.0
    %1485 = vmatprep.subr.mxu0 0.0
    %1486 = vmatpush1.msra.mxu0 0.0
    %1487 = vmatprep.subr.mxu0 0.0
    %1488 = vmatpush1.msra.mxu0 0.0
    %1489 = vmatprep.subr.mxu0 0.0
    %1490 = vmatpush1.msra.mxu0 0.0
    %1491 = vmatprep.subr.mxu0 0.0
    %1492 = vmatpush1.msra.mxu0 0.0
    %1493 = vmatprep.subr.mxu0 0.0
    %1494 = vmatpush1.msra.mxu0 0.0
    %1495 = vmatprep.subr.mxu0 0.0
    %1496 = vmatpush1.msra.mxu0 0.0
    %1497 = vmatprep.subr.mxu0 0.0
    %1498 = vmatpush1.msra.mxu0 0.0
    %1499 = vmatprep.subr.mxu0 0.0
    %1500 = vmatpush1.msra.mxu0 0.0
    %1501 = vmatprep.subr.mxu0 0.0
    %1502 = vmatpush1.msra.mxu0 0.0
    %1503 = vmatprep.subr.mxu0 0.0
    %1504 = vmatpush1.msra.mxu0 0.0
    %1505 = vmatprep.subr.mxu0 0.0
    %1506 = vmatpush1.msra.mxu0 0.0
    %1507 = vmatprep.subr.mxu0 0.0
    %1508 = vmatpush1.msra.mxu0 0.0
    %1509 = vmatprep.subr.mxu0 0.0
    %1510 = vmatpush1.msra.mxu0 0.0
    %1511 = vmatprep.subr.mxu0 0.0
    %1512 = vmatpush1.msra.mxu0 0.0
    %1513 = vmatprep.subr.mxu0 0.0
    %1514 = vmatpush1.msra.mxu0 0.0
    %1515 = vmatprep.subr.mxu0 0.0
    %1516 = vmatpush1.msra.mxu0 0.0
    %1517 = vmatprep.subr.mxu0 0.0
    %1518 = vmatpush1.msra.mxu0 0.0
    %1519 = vmatprep.mubr.f32.mxu0 0.0
    %1520 = vmatmul.mubr.f32.gmra.mrb[0].mxu0 %v1450
    %v1521 = vpop.f32.mrb[0].mxu0
    %v1522 = vadd.f32 %v1448, %v1521
    %v1523 = vpop.f32.mrb[0].mxu0
    %1524 = vmatprep.mubr.f32.mxu0 0.0
    %1525 = vmatmul.mubr.f32.gmra.mrb[0].mxu0 %v1453
    %v1526 = vpop.f32.mrb[0].mxu0
    %v1527 = vadd.f32 %v1448, %v1526
    %v1528 = vpop.f32.mrb[0].mxu0
    %1529 = vdwg.mxu0
    %v1530 = vadd.f32 %v1522, %v1250
    %v1531 = vadd.f32 %v1527, %v1251
    %v1532 = vld [vmem:[%s7 + $0xd] sm:$0x1]
    %v1533 = vld [vmem:[%s7 + $0xe] sm:$0x1]
    %v1534 = vsel %vm191, %v1530, 0.0
    %1535 = vadd.xlane.f32.xlu0 %v1534
    %v1536 = vpop.xlane.xlu0 %1535
    %v1537 = vsel %vm195, %v1531, 0.0
    %1538 = vadd.xlane.f32.xlu0 %v1537
    %v1539 = vpop.xlane.xlu0 %1538
    %v1540 = vmul.f32 %v1536, %v199
    %v1541 = vmul.f32 %v1539, %v199
    %v1542 = vsub.f32 %v1530, %v1540
    %v1543 = vsub.f32 %v1531, %v1541
    %v1544 = vmul.f32 %v1542, %v1542
    %v1545 = vmul.f32 %v1543, %v1543
    %v1546 = vsel %vm191, %v1544, 0.0
    %1547 = vadd.xlane.f32.xlu0 %v1546
    %v1548 = vpop.xlane.xlu0 %1547
    %v1549 = vsel %vm195, %v1545, 0.0
    %1550 = vadd.xlane.f32.xlu0 %v1549
    %v1551 = vpop.xlane.xlu0 %1550
    %v1552 = vmul.f32 %v1548, %v199
    %v1553 = vmul.f32 %v1551, %v199
    %v1554 = vadd.f32 %v1552, 1e-05
    %v1555 = vadd.f32 %v1553, 1e-05
    %v1556 = vrsqrt.pop %v1554
    %v1557 = vrsqrt.pop %v1555
    %v1558 = vmul.f32 %v1542, %v1556
    %v1559 = vmul.f32 %v1543, %v1557
    %v1560 = vlaneseq
    %v1561 = vshrl.u32 %v1560, 7
    %v1562 = vsub.s32 0, %v1561
    %v1563 = vrot.slane %v1532, %v1562
    %v1564 = vmul.f32 %v1558, %v1563
    %v1565 = vmul.f32 %v1559, %v1563
    %v1566 = vlaneseq
    %v1567 = vshrl.u32 %v1566, 7
    %v1568 = vsub.s32 0, %v1567
    %v1569 = vrot.slane %v1533, %v1568
    %v1570 = vadd.f32 %v1564, %v1569
    %v1571 = vadd.f32 %v1565, %v1569
    %s1572 = scalar_lea.vmem %s2, 32
    %v1573 = vld [vmem:[%s1572] sm:$0xff]
    %v1574 = vld [vmem:[%s1572 + $0x8] sm:$0xff]
    %v1575 = vld [vmem:[%s1572 + $0x10] sm:$0xff]
    %v1576 = vld [vmem:[%s1572 + $0x18] sm:$0xff]
    %v1577 = vld [vmem:[%s7 + $0xf] sm:$0x1]
    %v1578 = vlaneseq
    %v1579 = vshrl.u32 %v1578, 7
    %v1580 = vsub.s32 0, %v1579
    %v1581 = vrot.slane %v1577, %v1580
    %v1583 = vsel %vm191, %v1570, 0
    %v1586 = vsel %vm191, %v1571, 0
    %1588 = vmatprep.subr.mxu0 0.0
    %1589 = vmatpush1.msra.mxu0 %v1573
    %1590 = vmatprep.subr.mxu0 0.0
    %1591 = vmatpush1.msra.mxu0 %v1574
    %1592 = vmatprep.subr.mxu0 0.0
    %1593 = vmatpush1.msra.mxu0 %v1575
    %1594 = vmatprep.subr.mxu0 0.0
    %1595 = vmatpush1.msra.mxu0 %v1576
    %1596 = vmatprep.subr.mxu0 0.0
    %1597 = vmatpush1.msra.mxu0 0.0
    %1598 = vmatprep.subr.mxu0 0.0
    %1599 = vmatpush1.msra.mxu0 0.0
    %1600 = vmatprep.subr.mxu0 0.0
    %1601 = vmatpush1.msra.mxu0 0.0
    %1602 = vmatprep.subr.mxu0 0.0
    %1603 = vmatpush1.msra.mxu0 0.0
    %1604 = vmatprep.subr.mxu0 0.0
    %1605 = vmatpush1.msra.mxu0 0.0
    %1606 = vmatprep.subr.mxu0 0.0
    %1607 = vmatpush1.msra.mxu0 0.0
    %1608 = vmatprep.subr.mxu0 0.0
    %1609 = vmatpush1.msra.mxu0 0.0
    %1610 = vmatprep.subr.mxu0 0.0
    %1611 = vmatpush1.msra.mxu0 0.0
    %1612 = vmatprep.subr.mxu0 0.0
    %1613 = vmatpush1.msra.mxu0 0.0
    %1614 = vmatprep.subr.mxu0 0.0
    %1615 = vmatpush1.msra.mxu0 0.0
    %1616 = vmatprep.subr.mxu0 0.0
    %1617 = vmatpush1.msra.mxu0 0.0
    %1618 = vmatprep.subr.mxu0 0.0
    %1619 = vmatpush1.msra.mxu0 0.0
    %1620 = vmatprep.subr.mxu0 0.0
    %1621 = vmatpush1.msra.mxu0 0.0
    %1622 = vmatprep.subr.mxu0 0.0
    %1623 = vmatpush1.msra.mxu0 0.0
    %1624 = vmatprep.subr.mxu0 0.0
    %1625 = vmatpush1.msra.mxu0 0.0
    %1626 = vmatprep.subr.mxu0 0.0
    %1627 = vmatpush1.msra.mxu0 0.0
    %1628 = vmatprep.subr.mxu0 0.0
    %1629 = vmatpush1.msra.mxu0 0.0
    %1630 = vmatprep.subr.mxu0 0.0
    %1631 = vmatpush1.msra.mxu0 0.0
    %1632 = vmatprep.subr.mxu0 0.0
    %1633 = vmatpush1.msra.mxu0 0.0
    %1634 = vmatprep.subr.mxu0 0.0
    %1635 = vmatpush1.msra.mxu0 0.0
    %1636 = vmatprep.subr.mxu0 0.0
    %1637 = vmatpush1.msra.mxu0 0.0
    %1638 = vmatprep.subr.mxu0 0.0
    %1639 = vmatpush1.msra.mxu0 0.0
    %1640 = vmatprep.subr.mxu0 0.0
    %1641 = vmatpush1.msra.mxu0 0.0
    %1642 = vmatprep.subr.mxu0 0.0
    %1643 = vmatpush1.msra.mxu0 0.0
    %1644 = vmatprep.subr.mxu0 0.0
    %1645 = vmatpush1.msra.mxu0 0.0
    %1646 = vmatprep.subr.mxu0 0.0
    %1647 = vmatpush1.msra.mxu0 0.0
    %1648 = vmatprep.subr.mxu0 0.0
    %1649 = vmatpush1.msra.mxu0 0.0
    %1650 = vmatprep.subr.mxu0 0.0
    %1651 = vmatpush1.msra.mxu0 0.0
    %1652 = vmatprep.mubr.f32.mxu0 0.0
    %1653 = vmatmul.mubr.f32.gmra.mrb[0].mxu0 %v1583
    %v1654 = vpop.f32.mrb[0].mxu0
    %v1655 = vadd.f32 %v1581, %v1654
    %v1656 = vpop.f32.mrb[0].mxu0
    %1657 = vmatprep.mubr.f32.mxu0 0.0
    %1658 = vmatmul.mubr.f32.gmra.mrb[0].mxu0 %v1586
    %v1659 = vpop.f32.mrb[0].mxu0
    %v1660 = vadd.f32 %v1581, %v1659
    %v1661 = vpop.f32.mrb[0].mxu0
    %1662 = vdwg.mxu0
    %1665 = vrot.lane.b32.xlu0 %v1655, 96
    %v1666 = vpop.permute.xlu0 %1665
    %1667 = vrot.lane.b32.xlu0 %v1660, 96
    %v1668 = vpop.permute.xlu0 %1667
    %v1669 = vsel %vm328, %v1655, 0
    %v1671 = vsel %vm328, %v1660, 0
    %v1673 = vsel %vm328, %v1666, 0
    %v1675 = vsel %vm328, %v1668, 0
    %1677 = vmatprep.subr.mxu0 0.0
    %1678 = vmatpush1.xpose.msra.mxu0 %v1673
    %1679 = vmatprep.subr.mxu0 0.0
    %1680 = vmatpush1.xpose.msra.mxu0 %v1675
    %1681 = vmatprep.subr.mxu0 0.0
    %1682 = vmatpush1.xpose.msra.mxu0 0.0
    %1683 = vmatprep.subr.mxu0 0.0
    %1684 = vmatpush1.xpose.msra.mxu0 0.0
    %1685 = vmatprep.subr.mxu0 0.0
    %1686 = vmatpush1.xpose.msra.mxu0 0.0
    %1687 = vmatprep.subr.mxu0 0.0
    %1688 = vmatpush1.xpose.msra.mxu0 0.0
    %1689 = vmatprep.subr.mxu0 0.0
    %1690 = vmatpush1.xpose.msra.mxu0 0.0
    %1691 = vmatprep.subr.mxu0 0.0
    %1692 = vmatpush1.xpose.msra.mxu0 0.0
    %1693 = vmatprep.subr.mxu0 0.0
    %1694 = vmatpush1.xpose.msra.mxu0 0.0
    %1695 = vmatprep.subr.mxu0 0.0
    %1696 = vmatpush1.xpose.msra.mxu0 0.0
    %1697 = vmatprep.subr.mxu0 0.0
    %1698 = vmatpush1.xpose.msra.mxu0 0.0
    %1699 = vmatprep.subr.mxu0 0.0
    %1700 = vmatpush1.xpose.msra.mxu0 0.0
    %1701 = vmatprep.subr.mxu0 0.0
    %1702 = vmatpush1.xpose.msra.mxu0 0.0
    %1703 = vmatprep.subr.mxu0 0.0
    %1704 = vmatpush1.xpose.msra.mxu0 0.0
    %1705 = vmatprep.subr.mxu0 0.0
    %1706 = vmatpush1.xpose.msra.mxu0 0.0
    %1707 = vmatprep.subr.mxu0 0.0
    %1708 = vmatpush1.xpose.msra.mxu0 0.0
    %1709 = vmatprep.subr.mxu0 0.0
    %1710 = vmatpush1.xpose.msra.mxu0 0.0
    %1711 = vmatprep.subr.mxu0 0.0
    %1712 = vmatpush1.xpose.msra.mxu0 0.0
    %1713 = vmatprep.subr.mxu0 0.0
    %1714 = vmatpush1.xpose.msra.mxu0 0.0
    %1715 = vmatprep.subr.mxu0 0.0
    %1716 = vmatpush1.xpose.msra.mxu0 0.0
    %1717 = vmatprep.subr.mxu0 0.0
    %1718 = vmatpush1.xpose.msra.mxu0 0.0
    %1719 = vmatprep.subr.mxu0 0.0
    %1720 = vmatpush1.xpose.msra.mxu0 0.0
    %1721 = vmatprep.subr.mxu0 0.0
    %1722 = vmatpush1.xpose.msra.mxu0 0.0
    %1723 = vmatprep.subr.mxu0 0.0
    %1724 = vmatpush1.xpose.msra.mxu0 0.0
    %1725 = vmatprep.subr.mxu0 0.0
    %1726 = vmatpush1.xpose.msra.mxu0 0.0
    %1727 = vmatprep.subr.mxu0 0.0
    %1728 = vmatpush1.xpose.msra.mxu0 0.0
    %1729 = vmatprep.subr.mxu0 0.0
    %1730 = vmatpush1.xpose.msra.mxu0 0.0
    %1731 = vmatprep.subr.mxu0 0.0
    %1732 = vmatpush1.xpose.msra.mxu0 0.0
    %1733 = vmatprep.subr.mxu0 0.0
    %1734 = vmatpush1.xpose.msra.mxu0 0.0
    %1735 = vmatprep.subr.mxu0 0.0
    %1736 = vmatpush1.xpose.msra.mxu0 0.0
    %1737 = vmatprep.subr.mxu0 0.0
    %1738 = vmatpush1.xpose.msra.mxu0 0.0
    %1739 = vmatprep.subr.mxu0 0.0
    %1740 = vmatpush1.xpose.msra.mxu0 0.0
    %1741 = vmatprep.mubr.f32.mxu0 0.0
    %1742 = vmatmul.mubr.f32.gmra.mrb[0].mxu0 %v1669
    %v1743 = vpop.f32.mrb[0].mxu0
    %v1744 = vadd.f32 %v187, %v1743
    %v1745 = vpop.f32.mrb[0].mxu0
    %1746 = vmatprep.mubr.f32.mxu0 0.0
    %1747 = vmatmul.mubr.f32.gmra.mrb[0].mxu0 %v1671
    %v1748 = vpop.f32.mrb[0].mxu0
    %v1749 = vadd.f32 %v188, %v1748
    %v1750 = vpop.f32.mrb[0].mxu0
    %1751 = vdwg.mxu0
    %v1752 = vsel %vm412, %v1744, -inf
    %1753 = vmax.xlane.f32.xlu0 %v1752
    %v1754 = vpop.xlane.xlu0 %1753
    %v1755 = vsel %vm416, %v1749, -inf
    %1756 = vmax.xlane.f32.xlu0 %v1755
    %v1757 = vpop.xlane.xlu0 %1756
    %v1758 = vsub.f32 %v1744, %v1754
    %v1759 = vsub.f32 %v1749, %v1757
    %v1760 = vmul.f32 %v1758, 1.442695
    %v1761 = vpow.pop %v1760
    %v1762 = vmul.f32 %v1759, 1.442695
    %v1763 = vpow.pop %v1762
    %v1764 = vsel %vm412, %v1761, 0.0
    %1765 = vadd.xlane.f32.xlu0 %v1764
    %v1766 = vpop.xlane.xlu0 %1765
    %v1767 = vsel %vm416, %v1763, 0.0
    %1768 = vadd.xlane.f32.xlu0 %v1767
    %v1769 = vpop.xlane.xlu0 %1768
    %v1770 = vrcp.pop %v1766
    %v1771 = vmul.f32 %v1761, %v1770
    %v1772 = vrcp.pop %v1769
    %v1773 = vmul.f32 %v1763, %v1772
    %1774 = vrot.lane.b32.xlu0 %v1655, 64
    %v1775 = vpop.permute.xlu0 %1774
    %1776 = vrot.lane.b32.xlu0 %v1660, 64
    %v1777 = vpop.permute.xlu0 %1776
    %v1780 = vsel %vm412, %v1771, 0
    %v1783 = vsel %vm412, %v1773, 0
    %v1785 = vsel %vm447, %v1777, 0
    %1787 = vmatprep.subr.mxu0 0.0
    %1788 = vmatpush1.msra.mxu0 %v1775
    %1789 = vmatprep.subr.mxu0 0.0
    %1790 = vmatpush1.msra.mxu0 %v1785
    %1791 = vmatprep.subr.mxu0 0.0
    %1792 = vmatpush1.msra.mxu0 0.0
    %1793 = vmatprep.subr.mxu0 0.0
    %1794 = vmatpush1.msra.mxu0 0.0
    %1795 = vmatprep.subr.mxu0 0.0
    %1796 = vmatpush1.msra.mxu0 0.0
    %1797 = vmatprep.subr.mxu0 0.0
    %1798 = vmatpush1.msra.mxu0 0.0
    %1799 = vmatprep.subr.mxu0 0.0
    %1800 = vmatpush1.msra.mxu0 0.0
    %1801 = vmatprep.subr.mxu0 0.0
    %1802 = vmatpush1.msra.mxu0 0.0
    %1803 = vmatprep.subr.mxu0 0.0
    %1804 = vmatpush1.msra.mxu0 0.0
    %1805 = vmatprep.subr.mxu0 0.0
    %1806 = vmatpush1.msra.mxu0 0.0
    %1807 = vmatprep.subr.mxu0 0.0
    %1808 = vmatpush1.msra.mxu0 0.0
    %1809 = vmatprep.subr.mxu0 0.0
    %1810 = vmatpush1.msra.mxu0 0.0
    %1811 = vmatprep.subr.mxu0 0.0
    %1812 = vmatpush1.msra.mxu0 0.0
    %1813 = vmatprep.subr.mxu0 0.0
    %1814 = vmatpush1.msra.mxu0 0.0
    %1815 = vmatprep.subr.mxu0 0.0
    %1816 = vmatpush1.msra.mxu0 0.0
    %1817 = vmatprep.subr.mxu0 0.0
    %1818 = vmatpush1.msra.mxu0 0.0
    %1819 = vmatprep.subr.mxu0 0.0
    %1820 = vmatpush1.msra.mxu0 0.0
    %1821 = vmatprep.subr.mxu0 0.0
    %1822 = vmatpush1.msra.mxu0 0.0
    %1823 = vmatprep.subr.mxu0 0.0
    %1824 = vmatpush1.msra.mxu0 0.0
    %1825 = vmatprep.subr.mxu0 0.0
    %1826 = vmatpush1.msra.mxu0 0.0
    %1827 = vmatprep.subr.mxu0 0.0
    %1828 = vmatpush1.msra.mxu0 0.0
    %1829 = vmatprep.subr.mxu0 0.0
    %1830 = vmatpush1.msra.mxu0 0.0
    %1831 = vmatprep.subr.mxu0 0.0
    %1832 = vmatpush1.msra.mxu0 0.0
    %1833 = vmatprep.subr.mxu0 0.0
    %1834 = vmatpush1.msra.mxu0 0.0
    %1835 = vmatprep.subr.mxu0 0.0
    %1836 = vmatpush1.msra.mxu0 0.0
    %1837 = vmatprep.subr.mxu0 0.0
    %1838 = vmatpush1.msra.mxu0 0.0
    %1839 = vmatprep.subr.mxu0 0.0
    %1840 = vmatpush1.msra.mxu0 0.0
    %1841 = vmatprep.subr.mxu0 0.0
    %1842 = vmatpush1.msra.mxu0 0.0
    %1843 = vmatprep.subr.mxu0 0.0
    %1844 = vmatpush1.msra.mxu0 0.0
    %1845 = vmatprep.subr.mxu0 0.0
    %1846 = vmatpush1.msra.mxu0 0.0
    %1847 = vmatprep.subr.mxu0 0.0
    %1848 = vmatpush1.msra.mxu0 0.0
    %1849 = vmatprep.subr.mxu0 0.0
    %1850 = vmatpush1.msra.mxu0 0.0
    %1851 = vmatprep.mubr.f32.mxu0 0.0
    %1852 = vmatmul.mubr.f32.gmra.mrb[0].mxu0 %v1780
    %v1853 = vpop.f32.mrb[0].mxu0
    %v1854 = vadd.f32 0.0, %v1853
    %v1855 = vpop.f32.mrb[0].mxu0
    %1856 = vmatprep.mubr.f32.mxu0 0.0
    %1857 = vmatmul.mubr.f32.gmra.mrb[0].mxu0 %v1783
    %v1858 = vpop.f32.mrb[0].mxu0
    %v1859 = vadd.f32 0.0, %v1858
    %v1860 = vpop.f32.mrb[0].mxu0
    %1861 = vdwg.mxu0
    %1862 = vrot.lane.b32.xlu0 %v1655, 120
    %v1863 = vpop.permute.xlu0 %1862
    %1864 = vrot.lane.b32.xlu0 %v1660, 120
    %v1865 = vpop.permute.xlu0 %1864
    %1866 = vrot.lane.b32.xlu0 %v1655, 88
    %v1867 = vpop.permute.xlu0 %1866
    %1868 = vrot.lane.b32.xlu0 %v1660, 88
    %v1869 = vpop.permute.xlu0 %1868
    %v1870 = vsel %vm328, %v1863, 0
    %v1872 = vsel %vm328, %v1865, 0
    %v1874 = vsel %vm328, %v1867, 0
    %v1876 = vsel %vm328, %v1869, 0
    %1878 = vmatprep.subr.mxu0 0.0
    %1879 = vmatpush1.xpose.msra.mxu0 %v1874
    %1880 = vmatprep.subr.mxu0 0.0
    %1881 = vmatpush1.xpose.msra.mxu0 %v1876
    %1882 = vmatprep.subr.mxu0 0.0
    %1883 = vmatpush1.xpose.msra.mxu0 0.0
    %1884 = vmatprep.subr.mxu0 0.0
    %1885 = vmatpush1.xpose.msra.mxu0 0.0
    %1886 = vmatprep.subr.mxu0 0.0
    %1887 = vmatpush1.xpose.msra.mxu0 0.0
    %1888 = vmatprep.subr.mxu0 0.0
    %1889 = vmatpush1.xpose.msra.mxu0 0.0
    %1890 = vmatprep.subr.mxu0 0.0
    %1891 = vmatpush1.xpose.msra.mxu0 0.0
    %1892 = vmatprep.subr.mxu0 0.0
    %1893 = vmatpush1.xpose.msra.mxu0 0.0
    %1894 = vmatprep.subr.mxu0 0.0
    %1895 = vmatpush1.xpose.msra.mxu0 0.0
    %1896 = vmatprep.subr.mxu0 0.0
    %1897 = vmatpush1.xpose.msra.mxu0 0.0
    %1898 = vmatprep.subr.mxu0 0.0
    %1899 = vmatpush1.xpose.msra.mxu0 0.0
    %1900 = vmatprep.subr.mxu0 0.0
    %1901 = vmatpush1.xpose.msra.mxu0 0.0
    %1902 = vmatprep.subr.mxu0 0.0
    %1903 = vmatpush1.xpose.msra.mxu0 0.0
    %1904 = vmatprep.subr.mxu0 0.0
    %1905 = vmatpush1.xpose.msra.mxu0 0.0
    %1906 = vmatprep.subr.mxu0 0.0
    %1907 = vmatpush1.xpose.msra.mxu0 0.0
    %1908 = vmatprep.subr.mxu0 0.0
    %1909 = vmatpush1.xpose.msra.mxu0 0.0
    %1910 = vmatprep.subr.mxu0 0.0
    %1911 = vmatpush1.xpose.msra.mxu0 0.0
    %1912 = vmatprep.subr.mxu0 0.0
    %1913 = vmatpush1.xpose.msra.mxu0 0.0
    %1914 = vmatprep.subr.mxu0 0.0
    %1915 = vmatpush1.xpose.msra.mxu0 0.0
    %1916 = vmatprep.subr.mxu0 0.0
    %1917 = vmatpush1.xpose.msra.mxu0 0.0
    %1918 = vmatprep.subr.mxu0 0.0
    %1919 = vmatpush1.xpose.msra.mxu0 0.0
    %1920 = vmatprep.subr.mxu0 0.0
    %1921 = vmatpush1.xpose.msra.mxu0 0.0
    %1922 = vmatprep.subr.mxu0 0.0
    %1923 = vmatpush1.xpose.msra.mxu0 0.0
    %1924 = vmatprep.subr.mxu0 0.0
    %1925 = vmatpush1.xpose.msra.mxu0 0.0
    %1926 = vmatprep.subr.mxu0 0.0
    %1927 = vmatpush1.xpose.msra.mxu0 0.0
    %1928 = vmatprep.subr.mxu0 0.0
    %1929 = vmatpush1.xpose.msra.mxu0 0.0
    %1930 = vmatprep.subr.mxu0 0.0
    %1931 = vmatpush1.xpose.msra.mxu0 0.0
    %1932 = vmatprep.subr.mxu0 0.0
    %1933 = vmatpush1.xpose.msra.mxu0 0.0
    %1934 = vmatprep.subr.mxu0 0.0
    %1935 = vmatpush1.xpose.msra.mxu0 0.0
    %1936 = vmatprep.subr.mxu0 0.0
    %1937 = vmatpush1.xpose.msra.mxu0 0.0
    %1938 = vmatprep.subr.mxu0 0.0
    %1939 = vmatpush1.xpose.msra.mxu0 0.0
    %1940 = vmatprep.subr.mxu0 0.0
    %1941 = vmatpush1.xpose.msra.mxu0 0.0
    %1942 = vmatprep.mubr.f32.mxu0 0.0
    %1943 = vmatmul.mubr.f32.gmra.mrb[0].mxu0 %v1870
    %v1944 = vpop.f32.mrb[0].mxu0
    %v1945 = vadd.f32 %v187, %v1944
    %v1946 = vpop.f32.mrb[0].mxu0
    %1947 = vmatprep.mubr.f32.mxu0 0.0
    %1948 = vmatmul.mubr.f32.gmra.mrb[0].mxu0 %v1872
    %v1949 = vpop.f32.mrb[0].mxu0
    %v1950 = vadd.f32 %v188, %v1949
    %v1951 = vpop.f32.mrb[0].mxu0
    %1952 = vdwg.mxu0
    %v1953 = vsel %vm412, %v1945, -inf
    %1954 = vmax.xlane.f32.xlu0 %v1953
    %v1955 = vpop.xlane.xlu0 %1954
    %v1956 = vsel %vm416, %v1950, -inf
    %1957 = vmax.xlane.f32.xlu0 %v1956
    %v1958 = vpop.xlane.xlu0 %1957
    %v1959 = vsub.f32 %v1945, %v1955
    %v1960 = vsub.f32 %v1950, %v1958
    %v1961 = vmul.f32 %v1959, 1.442695
    %v1962 = vpow.pop %v1961
    %v1963 = vmul.f32 %v1960, 1.442695
    %v1964 = vpow.pop %v1963
    %v1965 = vsel %vm412, %v1962, 0.0
    %1966 = vadd.xlane.f32.xlu0 %v1965
    %v1967 = vpop.xlane.xlu0 %1966
    %v1968 = vsel %vm416, %v1964, 0.0
    %1969 = vadd.xlane.f32.xlu0 %v1968
    %v1970 = vpop.xlane.xlu0 %1969
    %v1971 = vrcp.pop %v1967
    %v1972 = vmul.f32 %v1962, %v1971
    %v1973 = vrcp.pop %v1970
    %v1974 = vmul.f32 %v1964, %v1973
    %1975 = vrot.lane.b32.xlu0 %v1655, 56
    %v1976 = vpop.permute.xlu0 %1975
    %1977 = vrot.lane.b32.xlu0 %v1660, 56
    %v1978 = vpop.permute.xlu0 %1977
    %v1981 = vsel %vm412, %v1972, 0
    %v1984 = vsel %vm412, %v1974, 0
    %v1986 = vsel %vm447, %v1978, 0
    %1988 = vmatprep.subr.mxu0 0.0
    %1989 = vmatpush1.msra.mxu0 %v1976
    %1990 = vmatprep.subr.mxu0 0.0
    %1991 = vmatpush1.msra.mxu0 %v1986
    %1992 = vmatprep.subr.mxu0 0.0
    %1993 = vmatpush1.msra.mxu0 0.0
    %1994 = vmatprep.subr.mxu0 0.0
    %1995 = vmatpush1.msra.mxu0 0.0
    %1996 = vmatprep.subr.mxu0 0.0
    %1997 = vmatpush1.msra.mxu0 0.0
    %1998 = vmatprep.subr.mxu0 0.0
    %1999 = vmatpush1.msra.mxu0 0.0
    %2000 = vmatprep.subr.mxu0 0.0
    %2001 = vmatpush1.msra.mxu0 0.0
    %2002 = vmatprep.subr.mxu0 0.0
    %2003 = vmatpush1.msra.mxu0 0.0
    %2004 = vmatprep.subr.mxu0 0.0
    %2005 = vmatpush1.msra.mxu0 0.0
    %2006 = vmatprep.subr.mxu0 0.0
    %2007 = vmatpush1.msra.mxu0 0.0
    %2008 = vmatprep.subr.mxu0 0.0
    %2009 = vmatpush1.msra.mxu0 0.0
    %2010 = vmatprep.subr.mxu0 0.0
    %2011 = vmatpush1.msra.mxu0 0.0
    %2012 = vmatprep.subr.mxu0 0.0
    %2013 = vmatpush1.msra.mxu0 0.0
    %2014 = vmatprep.subr.mxu0 0.0
    %2015 = vmatpush1.msra.mxu0 0.0
    %2016 = vmatprep.subr.mxu0 0.0
    %2017 = vmatpush1.msra.mxu0 0.0
    %2018 = vmatprep.subr.mxu0 0.0
    %2019 = vmatpush1.msra.mxu0 0.0
    %2020 = vmatprep.subr.mxu0 0.0
    %2021 = vmatpush1.msra.mxu0 0.0
    %2022 = vmatprep.subr.mxu0 0.0
    %2023 = vmatpush1.msra.mxu0 0.0
    %2024 = vmatprep.subr.mxu0 0.0
    %2025 = vmatpush1.msra.mxu0 0.0
    %2026 = vmatprep.subr.mxu0 0.0
    %2027 = vmatpush1.msra.mxu0 0.0
    %2028 = vmatprep.subr.mxu0 0.0
    %2029 = vmatpush1.msra.mxu0 0.0
    %2030 = vmatprep.subr.mxu0 0.0
    %2031 = vmatpush1.msra.mxu0 0.0
    %2032 = vmatprep.subr.mxu0 0.0
    %2033 = vmatpush1.msra.mxu0 0.0
    %2034 = vmatprep.subr.mxu0 0.0
    %2035 = vmatpush1.msra.mxu0 0.0
    %2036 = vmatprep.subr.mxu0 0.0
    %2037 = vmatpush1.msra.mxu0 0.0
    %2038 = vmatprep.subr.mxu0 0.0
    %2039 = vmatpush1.msra.mxu0 0.0
    %2040 = vmatprep.subr.mxu0 0.0
    %2041 = vmatpush1.msra.mxu0 0.0
    %2042 = vmatprep.subr.mxu0 0.0
    %2043 = vmatpush1.msra.mxu0 0.0
    %2044 = vmatprep.subr.mxu0 0.0
    %2045 = vmatpush1.msra.mxu0 0.0
    %2046 = vmatprep.subr.mxu0 0.0
    %2047 = vmatpush1.msra.mxu0 0.0
    %2048 = vmatprep.subr.mxu0 0.0
    %2049 = vmatpush1.msra.mxu0 0.0
    %2050 = vmatprep.subr.mxu0 0.0
    %2051 = vmatpush1.msra.mxu0 0.0
    %2052 = vmatprep.mubr.f32.mxu0 0.0
    %2053 = vmatmul.mubr.f32.gmra.mrb[0].mxu0 %v1981
    %v2054 = vpop.f32.mrb[0].mxu0
    %v2055 = vadd.f32 0.0, %v2054
    %v2056 = vpop.f32.mrb[0].mxu0
    %2057 = vmatprep.mubr.f32.mxu0 0.0
    %2058 = vmatmul.mubr.f32.gmra.mrb[0].mxu0 %v1984
    %v2059 = vpop.f32.mrb[0].mxu0
    %v2060 = vadd.f32 0.0, %v2059
    %v2061 = vpop.f32.mrb[0].mxu0
    %2062 = vdwg.mxu0
    %2063 = vrot.lane.b32.xlu0 %v1655, 112
    %v2064 = vpop.permute.xlu0 %2063
    %2065 = vrot.lane.b32.xlu0 %v1660, 112
    %v2066 = vpop.permute.xlu0 %2065
    %2067 = vrot.lane.b32.xlu0 %v1655, 80
    %v2068 = vpop.permute.xlu0 %2067
    %2069 = vrot.lane.b32.xlu0 %v1660, 80
    %v2070 = vpop.permute.xlu0 %2069
    %v2071 = vsel %vm328, %v2064, 0
    %v2073 = vsel %vm328, %v2066, 0
    %v2075 = vsel %vm328, %v2068, 0
    %v2077 = vsel %vm328, %v2070, 0
    %2079 = vmatprep.subr.mxu0 0.0
    %2080 = vmatpush1.xpose.msra.mxu0 %v2075
    %2081 = vmatprep.subr.mxu0 0.0
    %2082 = vmatpush1.xpose.msra.mxu0 %v2077
    %2083 = vmatprep.subr.mxu0 0.0
    %2084 = vmatpush1.xpose.msra.mxu0 0.0
    %2085 = vmatprep.subr.mxu0 0.0
    %2086 = vmatpush1.xpose.msra.mxu0 0.0
    %2087 = vmatprep.subr.mxu0 0.0
    %2088 = vmatpush1.xpose.msra.mxu0 0.0
    %2089 = vmatprep.subr.mxu0 0.0
    %2090 = vmatpush1.xpose.msra.mxu0 0.0
    %2091 = vmatprep.subr.mxu0 0.0
    %2092 = vmatpush1.xpose.msra.mxu0 0.0
    %2093 = vmatprep.subr.mxu0 0.0
    %2094 = vmatpush1.xpose.msra.mxu0 0.0
    %2095 = vmatprep.subr.mxu0 0.0
    %2096 = vmatpush1.xpose.msra.mxu0 0.0
    %2097 = vmatprep.subr.mxu0 0.0
    %2098 = vmatpush1.xpose.msra.mxu0 0.0
    %2099 = vmatprep.subr.mxu0 0.0
    %2100 = vmatpush1.xpose.msra.mxu0 0.0
    %2101 = vmatprep.subr.mxu0 0.0
    %2102 = vmatpush1.xpose.msra.mxu0 0.0
    %2103 = vmatprep.subr.mxu0 0.0
    %2104 = vmatpush1.xpose.msra.mxu0 0.0
    %2105 = vmatprep.subr.mxu0 0.0
    %2106 = vmatpush1.xpose.msra.mxu0 0.0
    %2107 = vmatprep.subr.mxu0 0.0
    %2108 = vmatpush1.xpose.msra.mxu0 0.0
    %2109 = vmatprep.subr.mxu0 0.0
    %2110 = vmatpush1.xpose.msra.mxu0 0.0
    %2111 = vmatprep.subr.mxu0 0.0
    %2112 = vmatpush1.xpose.msra.mxu0 0.0
    %2113 = vmatprep.subr.mxu0 0.0
    %2114 = vmatpush1.xpose.msra.mxu0 0.0
    %2115 = vmatprep.subr.mxu0 0.0
    %2116 = vmatpush1.xpose.msra.mxu0 0.0
    %2117 = vmatprep.subr.mxu0 0.0
    %2118 = vmatpush1.xpose.msra.mxu0 0.0
    %2119 = vmatprep.subr.mxu0 0.0
    %2120 = vmatpush1.xpose.msra.mxu0 0.0
    %2121 = vmatprep.subr.mxu0 0.0
    %2122 = vmatpush1.xpose.msra.mxu0 0.0
    %2123 = vmatprep.subr.mxu0 0.0
    %2124 = vmatpush1.xpose.msra.mxu0 0.0
    %2125 = vmatprep.subr.mxu0 0.0
    %2126 = vmatpush1.xpose.msra.mxu0 0.0
    %2127 = vmatprep.subr.mxu0 0.0
    %2128 = vmatpush1.xpose.msra.mxu0 0.0
    %2129 = vmatprep.subr.mxu0 0.0
    %2130 = vmatpush1.xpose.msra.mxu0 0.0
    %2131 = vmatprep.subr.mxu0 0.0
    %2132 = vmatpush1.xpose.msra.mxu0 0.0
    %2133 = vmatprep.subr.mxu0 0.0
    %2134 = vmatpush1.xpose.msra.mxu0 0.0
    %2135 = vmatprep.subr.mxu0 0.0
    %2136 = vmatpush1.xpose.msra.mxu0 0.0
    %2137 = vmatprep.subr.mxu0 0.0
    %2138 = vmatpush1.xpose.msra.mxu0 0.0
    %2139 = vmatprep.subr.mxu0 0.0
    %2140 = vmatpush1.xpose.msra.mxu0 0.0
    %2141 = vmatprep.subr.mxu0 0.0
    %2142 = vmatpush1.xpose.msra.mxu0 0.0
    %2143 = vmatprep.mubr.f32.mxu0 0.0
    %2144 = vmatmul.mubr.f32.gmra.mrb[0].mxu0 %v2071
    %v2145 = vpop.f32.mrb[0].mxu0
    %v2146 = vadd.f32 %v187, %v2145
    %v2147 = vpop.f32.mrb[0].mxu0
    %2148 = vmatprep.mubr.f32.mxu0 0.0
    %2149 = vmatmul.mubr.f32.gmra.mrb[0].mxu0 %v2073
    %v2150 = vpop.f32.mrb[0].mxu0
    %v2151 = vadd.f32 %v188, %v2150
    %v2152 = vpop.f32.mrb[0].mxu0
    %2153 = vdwg.mxu0
    %v2154 = vsel %vm412, %v2146, -inf
    %2155 = vmax.xlane.f32.xlu0 %v2154
    %v2156 = vpop.xlane.xlu0 %2155
    %v2157 = vsel %vm416, %v2151, -inf
    %2158 = vmax.xlane.f32.xlu0 %v2157
    %v2159 = vpop.xlane.xlu0 %2158
    %v2160 = vsub.f32 %v2146, %v2156
    %v2161 = vsub.f32 %v2151, %v2159
    %v2162 = vmul.f32 %v2160, 1.442695
    %v2163 = vpow.pop %v2162
    %v2164 = vmul.f32 %v2161, 1.442695
    %v2165 = vpow.pop %v2164
    %v2166 = vsel %vm412, %v2163, 0.0
    %2167 = vadd.xlane.f32.xlu0 %v2166
    %v2168 = vpop.xlane.xlu0 %2167
    %v2169 = vsel %vm416, %v2165, 0.0
    %2170 = vadd.xlane.f32.xlu0 %v2169
    %v2171 = vpop.xlane.xlu0 %2170
    %v2172 = vrcp.pop %v2168
    %v2173 = vmul.f32 %v2163, %v2172
    %v2174 = vrcp.pop %v2171
    %v2175 = vmul.f32 %v2165, %v2174
    %2176 = vrot.lane.b32.xlu0 %v1655, 48
    %v2177 = vpop.permute.xlu0 %2176
    %2178 = vrot.lane.b32.xlu0 %v1660, 48
    %v2179 = vpop.permute.xlu0 %2178
    %v2182 = vsel %vm412, %v2173, 0
    %v2185 = vsel %vm412, %v2175, 0
    %v2187 = vsel %vm447, %v2179, 0
    %2189 = vmatprep.subr.mxu0 0.0
    %2190 = vmatpush1.msra.mxu0 %v2177
    %2191 = vmatprep.subr.mxu0 0.0
    %2192 = vmatpush1.msra.mxu0 %v2187
    %2193 = vmatprep.subr.mxu0 0.0
    %2194 = vmatpush1.msra.mxu0 0.0
    %2195 = vmatprep.subr.mxu0 0.0
    %2196 = vmatpush1.msra.mxu0 0.0
    %2197 = vmatprep.subr.mxu0 0.0
    %2198 = vmatpush1.msra.mxu0 0.0
    %2199 = vmatprep.subr.mxu0 0.0
    %2200 = vmatpush1.msra.mxu0 0.0
    %2201 = vmatprep.subr.mxu0 0.0
    %2202 = vmatpush1.msra.mxu0 0.0
    %2203 = vmatprep.subr.mxu0 0.0
    %2204 = vmatpush1.msra.mxu0 0.0
    %2205 = vmatprep.subr.mxu0 0.0
    %2206 = vmatpush1.msra.mxu0 0.0
    %2207 = vmatprep.subr.mxu0 0.0
    %2208 = vmatpush1.msra.mxu0 0.0
    %2209 = vmatprep.subr.mxu0 0.0
    %2210 = vmatpush1.msra.mxu0 0.0
    %2211 = vmatprep.subr.mxu0 0.0
    %2212 = vmatpush1.msra.mxu0 0.0
    %2213 = vmatprep.subr.mxu0 0.0
    %2214 = vmatpush1.msra.mxu0 0.0
    %2215 = vmatprep.subr.mxu0 0.0
    %2216 = vmatpush1.msra.mxu0 0.0
    %2217 = vmatprep.subr.mxu0 0.0
    %2218 = vmatpush1.msra.mxu0 0.0
    %2219 = vmatprep.subr.mxu0 0.0
    %2220 = vmatpush1.msra.mxu0 0.0
    %2221 = vmatprep.subr.mxu0 0.0
    %2222 = vmatpush1.msra.mxu0 0.0
    %2223 = vmatprep.subr.mxu0 0.0
    %2224 = vmatpush1.msra.mxu0 0.0
    %2225 = vmatprep.subr.mxu0 0.0
    %2226 = vmatpush1.msra.mxu0 0.0
    %2227 = vmatprep.subr.mxu0 0.0
    %2228 = vmatpush1.msra.mxu0 0.0
    %2229 = vmatprep.subr.mxu0 0.0
    %2230 = vmatpush1.msra.mxu0 0.0
    %2231 = vmatprep.subr.mxu0 0.0
    %2232 = vmatpush1.msra.mxu0 0.0
    %2233 = vmatprep.subr.mxu0 0.0
    %2234 = vmatpush1.msra.mxu0 0.0
    %2235 = vmatprep.subr.mxu0 0.0
    %2236 = vmatpush1.msra.mxu0 0.0
    %2237 = vmatprep.subr.mxu0 0.0
    %2238 = vmatpush1.msra.mxu0 0.0
    %2239 = vmatprep.subr.mxu0 0.0
    %2240 = vmatpush1.msra.mxu0 0.0
    %2241 = vmatprep.subr.mxu0 0.0
    %2242 = vmatpush1.msra.mxu0 0.0
    %2243 = vmatprep.subr.mxu0 0.0
    %2244 = vmatpush1.msra.mxu0 0.0
    %2245 = vmatprep.subr.mxu0 0.0
    %2246 = vmatpush1.msra.mxu0 0.0
    %2247 = vmatprep.subr.mxu0 0.0
    %2248 = vmatpush1.msra.mxu0 0.0
    %2249 = vmatprep.subr.mxu0 0.0
    %2250 = vmatpush1.msra.mxu0 0.0
    %2251 = vmatprep.subr.mxu0 0.0
    %2252 = vmatpush1.msra.mxu0 0.0
    %2253 = vmatprep.mubr.f32.mxu0 0.0
    %2254 = vmatmul.mubr.f32.gmra.mrb[0].mxu0 %v2182
    %v2255 = vpop.f32.mrb[0].mxu0
    %v2256 = vadd.f32 0.0, %v2255
    %v2257 = vpop.f32.mrb[0].mxu0
    %2258 = vmatprep.mubr.f32.mxu0 0.0
    %2259 = vmatmul.mubr.f32.gmra.mrb[0].mxu0 %v2185
    %v2260 = vpop.f32.mrb[0].mxu0
    %v2261 = vadd.f32 0.0, %v2260
    %v2262 = vpop.f32.mrb[0].mxu0
    %2263 = vdwg.mxu0
    %2264 = vrot.lane.b32.xlu0 %v1655, 104
    %v2265 = vpop.permute.xlu0 %2264
    %2266 = vrot.lane.b32.xlu0 %v1660, 104
    %v2267 = vpop.permute.xlu0 %2266
    %2268 = vrot.lane.b32.xlu0 %v1655, 72
    %v2269 = vpop.permute.xlu0 %2268
    %2270 = vrot.lane.b32.xlu0 %v1660, 72
    %v2271 = vpop.permute.xlu0 %2270
    %v2272 = vsel %vm328, %v2265, 0
    %v2274 = vsel %vm328, %v2267, 0
    %v2276 = vsel %vm328, %v2269, 0
    %v2278 = vsel %vm328, %v2271, 0
    %2280 = vmatprep.subr.mxu0 0.0
    %2281 = vmatpush1.xpose.msra.mxu0 %v2276
    %2282 = vmatprep.subr.mxu0 0.0
    %2283 = vmatpush1.xpose.msra.mxu0 %v2278
    %2284 = vmatprep.subr.mxu0 0.0
    %2285 = vmatpush1.xpose.msra.mxu0 0.0
    %2286 = vmatprep.subr.mxu0 0.0
    %2287 = vmatpush1.xpose.msra.mxu0 0.0
    %2288 = vmatprep.subr.mxu0 0.0
    %2289 = vmatpush1.xpose.msra.mxu0 0.0
    %2290 = vmatprep.subr.mxu0 0.0
    %2291 = vmatpush1.xpose.msra.mxu0 0.0
    %2292 = vmatprep.subr.mxu0 0.0
    %2293 = vmatpush1.xpose.msra.mxu0 0.0
    %2294 = vmatprep.subr.mxu0 0.0
    %2295 = vmatpush1.xpose.msra.mxu0 0.0
    %2296 = vmatprep.subr.mxu0 0.0
    %2297 = vmatpush1.xpose.msra.mxu0 0.0
    %2298 = vmatprep.subr.mxu0 0.0
    %2299 = vmatpush1.xpose.msra.mxu0 0.0
    %2300 = vmatprep.subr.mxu0 0.0
    %2301 = vmatpush1.xpose.msra.mxu0 0.0
    %2302 = vmatprep.subr.mxu0 0.0
    %2303 = vmatpush1.xpose.msra.mxu0 0.0
    %2304 = vmatprep.subr.mxu0 0.0
    %2305 = vmatpush1.xpose.msra.mxu0 0.0
    %2306 = vmatprep.subr.mxu0 0.0
    %2307 = vmatpush1.xpose.msra.mxu0 0.0
    %2308 = vmatprep.subr.mxu0 0.0
    %2309 = vmatpush1.xpose.msra.mxu0 0.0
    %2310 = vmatprep.subr.mxu0 0.0
    %2311 = vmatpush1.xpose.msra.mxu0 0.0
    %2312 = vmatprep.subr.mxu0 0.0
    %2313 = vmatpush1.xpose.msra.mxu0 0.0
    %2314 = vmatprep.subr.mxu0 0.0
    %2315 = vmatpush1.xpose.msra.mxu0 0.0
    %2316 = vmatprep.subr.mxu0 0.0
    %2317 = vmatpush1.xpose.msra.mxu0 0.0
    %2318 = vmatprep.subr.mxu0 0.0
    %2319 = vmatpush1.xpose.msra.mxu0 0.0
    %2320 = vmatprep.subr.mxu0 0.0
    %2321 = vmatpush1.xpose.msra.mxu0 0.0
    %2322 = vmatprep.subr.mxu0 0.0
    %2323 = vmatpush1.xpose.msra.mxu0 0.0
    %2324 = vmatprep.subr.mxu0 0.0
    %2325 = vmatpush1.xpose.msra.mxu0 0.0
    %2326 = vmatprep.subr.mxu0 0.0
    %2327 = vmatpush1.xpose.msra.mxu0 0.0
    %2328 = vmatprep.subr.mxu0 0.0
    %2329 = vmatpush1.xpose.msra.mxu0 0.0
    %2330 = vmatprep.subr.mxu0 0.0
    %2331 = vmatpush1.xpose.msra.mxu0 0.0
    %2332 = vmatprep.subr.mxu0 0.0
    %2333 = vmatpush1.xpose.msra.mxu0 0.0
    %2334 = vmatprep.subr.mxu0 0.0
    %2335 = vmatpush1.xpose.msra.mxu0 0.0
    %2336 = vmatprep.subr.mxu0 0.0
    %2337 = vmatpush1.xpose.msra.mxu0 0.0
    %2338 = vmatprep.subr.mxu0 0.0
    %2339 = vmatpush1.xpose.msra.mxu0 0.0
    %2340 = vmatprep.subr.mxu0 0.0
    %2341 = vmatpush1.xpose.msra.mxu0 0.0
    %2342 = vmatprep.subr.mxu0 0.0
    %2343 = vmatpush1.xpose.msra.mxu0 0.0
    %2344 = vmatprep.mubr.f32.mxu0 0.0
    %2345 = vmatmul.mubr.f32.gmra.mrb[0].mxu0 %v2272
    %v2346 = vpop.f32.mrb[0].mxu0
    %v2347 = vadd.f32 %v187, %v2346
    %v2348 = vpop.f32.mrb[0].mxu0
    %2349 = vmatprep.mubr.f32.mxu0 0.0
    %2350 = vmatmul.mubr.f32.gmra.mrb[0].mxu0 %v2274
    %v2351 = vpop.f32.mrb[0].mxu0
    %v2352 = vadd.f32 %v188, %v2351
    %v2353 = vpop.f32.mrb[0].mxu0
    %2354 = vdwg.mxu0
    %v2355 = vsel %vm412, %v2347, -inf
    %2356 = vmax.xlane.f32.xlu0 %v2355
    %v2357 = vpop.xlane.xlu0 %2356
    %v2358 = vsel %vm416, %v2352, -inf
    %2359 = vmax.xlane.f32.xlu0 %v2358
    %v2360 = vpop.xlane.xlu0 %2359
    %v2361 = vsub.f32 %v2347, %v2357
    %v2362 = vsub.f32 %v2352, %v2360
    %v2363 = vmul.f32 %v2361, 1.442695
    %v2364 = vpow.pop %v2363
    %v2365 = vmul.f32 %v2362, 1.442695
    %v2366 = vpow.pop %v2365
    %v2367 = vsel %vm412, %v2364, 0.0
    %2368 = vadd.xlane.f32.xlu0 %v2367
    %v2369 = vpop.xlane.xlu0 %2368
    %v2370 = vsel %vm416, %v2366, 0.0
    %2371 = vadd.xlane.f32.xlu0 %v2370
    %v2372 = vpop.xlane.xlu0 %2371
    %v2373 = vrcp.pop %v2369
    %v2374 = vmul.f32 %v2364, %v2373
    %v2375 = vrcp.pop %v2372
    %v2376 = vmul.f32 %v2366, %v2375
    %2377 = vrot.lane.b32.xlu0 %v1655, 40
    %v2378 = vpop.permute.xlu0 %2377
    %2379 = vrot.lane.b32.xlu0 %v1660, 40
    %v2380 = vpop.permute.xlu0 %2379
    %v2383 = vsel %vm412, %v2374, 0
    %v2386 = vsel %vm412, %v2376, 0
    %v2388 = vsel %vm447, %v2380, 0
    %2390 = vmatprep.subr.mxu0 0.0
    %2391 = vmatpush1.msra.mxu0 %v2378
    %2392 = vmatprep.subr.mxu0 0.0
    %2393 = vmatpush1.msra.mxu0 %v2388
    %2394 = vmatprep.subr.mxu0 0.0
    %2395 = vmatpush1.msra.mxu0 0.0
    %2396 = vmatprep.subr.mxu0 0.0
    %2397 = vmatpush1.msra.mxu0 0.0
    %2398 = vmatprep.subr.mxu0 0.0
    %2399 = vmatpush1.msra.mxu0 0.0
    %2400 = vmatprep.subr.mxu0 0.0
    %2401 = vmatpush1.msra.mxu0 0.0
    %2402 = vmatprep.subr.mxu0 0.0
    %2403 = vmatpush1.msra.mxu0 0.0
    %2404 = vmatprep.subr.mxu0 0.0
    %2405 = vmatpush1.msra.mxu0 0.0
    %2406 = vmatprep.subr.mxu0 0.0
    %2407 = vmatpush1.msra.mxu0 0.0
    %2408 = vmatprep.subr.mxu0 0.0
    %2409 = vmatpush1.msra.mxu0 0.0
    %2410 = vmatprep.subr.mxu0 0.0
    %2411 = vmatpush1.msra.mxu0 0.0
    %2412 = vmatprep.subr.mxu0 0.0
    %2413 = vmatpush1.msra.mxu0 0.0
    %2414 = vmatprep.subr.mxu0 0.0
    %2415 = vmatpush1.msra.mxu0 0.0
    %2416 = vmatprep.subr.mxu0 0.0
    %2417 = vmatpush1.msra.mxu0 0.0
    %2418 = vmatprep.subr.mxu0 0.0
    %2419 = vmatpush1.msra.mxu0 0.0
    %2420 = vmatprep.subr.mxu0 0.0
    %2421 = vmatpush1.msra.mxu0 0.0
    %2422 = vmatprep.subr.mxu0 0.0
    %2423 = vmatpush1.msra.mxu0 0.0
    %2424 = vmatprep.subr.mxu0 0.0
    %2425 = vmatpush1.msra.mxu0 0.0
    %2426 = vmatprep.subr.mxu0 0.0
    %2427 = vmatpush1.msra.mxu0 0.0
    %2428 = vmatprep.subr.mxu0 0.0
    %2429 = vmatpush1.msra.mxu0 0.0
    %2430 = vmatprep.subr.mxu0 0.0
    %2431 = vmatpush1.msra.mxu0 0.0
    %2432 = vmatprep.subr.mxu0 0.0
    %2433 = vmatpush1.msra.mxu0 0.0
    %2434 = vmatprep.subr.mxu0 0.0
    %2435 = vmatpush1.msra.mxu0 0.0
    %2436 = vmatprep.subr.mxu0 0.0
    %2437 = vmatpush1.msra.mxu0 0.0
    %2438 = vmatprep.subr.mxu0 0.0
    %2439 = vmatpush1.msra.mxu0 0.0
    %2440 = vmatprep.subr.mxu0 0.0
    %2441 = vmatpush1.msra.mxu0 0.0
    %2442 = vmatprep.subr.mxu0 0.0
    %2443 = vmatpush1.msra.mxu0 0.0
    %2444 = vmatprep.subr.mxu0 0.0
    %2445 = vmatpush1.msra.mxu0 0.0
    %2446 = vmatprep.subr.mxu0 0.0
    %2447 = vmatpush1.msra.mxu0 0.0
    %2448 = vmatprep.subr.mxu0 0.0
    %2449 = vmatpush1.msra.mxu0 0.0
    %2450 = vmatprep.subr.mxu0 0.0
    %2451 = vmatpush1.msra.mxu0 0.0
    %2452 = vmatprep.subr.mxu0 0.0
    %2453 = vmatpush1.msra.mxu0 0.0
    %2454 = vmatprep.mubr.f32.mxu0 0.0
    %2455 = vmatmul.mubr.f32.gmra.mrb[0].mxu0 %v2383
    %v2456 = vpop.f32.mrb[0].mxu0
    %v2457 = vadd.f32 0.0, %v2456
    %v2458 = vpop.f32.mrb[0].mxu0
    %2459 = vmatprep.mubr.f32.mxu0 0.0
    %2460 = vmatmul.mubr.f32.gmra.mrb[0].mxu0 %v2386
    %v2461 = vpop.f32.mrb[0].mxu0
    %v2462 = vadd.f32 0.0, %v2461
    %v2463 = vpop.f32.mrb[0].mxu0
    %2464 = vdwg.mxu0
    %2467 = vrot.lane.b32.xlu0 %v2055, 8
    %v2468 = vpop.permute.xlu0 %2467
    %2469 = vrot.lane.b32.xlu0 %v2060, 8
    %v2470 = vpop.permute.xlu0 %2469
    %2475 = vrot.lane.b32.xlu0 %v2256, 16
    %v2476 = vpop.permute.xlu0 %2475
    %2477 = vrot.lane.b32.xlu0 %v2261, 16
    %v2478 = vpop.permute.xlu0 %2477
    %2483 = vrot.lane.b32.xlu0 %v2457, 24
    %v2484 = vpop.permute.xlu0 %2483
    %2485 = vrot.lane.b32.xlu0 %v2462, 24
    %v2486 = vpop.permute.xlu0 %2485
    %v2489 = vsel %vm328, %v1854, %v2468
    %v2490 = vsel %vm328, %v1859, %v2470
    %v2491 = vsel %vm1154, %v2489, %v2476
    %v2492 = vsel %vm1154, %v2490, %v2478
    %v2493 = vsel %vm1157, %v2491, %v2484
    %v2494 = vsel %vm1157, %v2492, %v2486
    %s2495 = scalar_lea.vmem %s3, 32
    %v2496 = vld [vmem:[%s2495] sm:$0xff]
    %v2497 = vld [vmem:[%s2495 + $0x8] sm:$0xff]
    %v2498 = vld [vmem:[%s2495 + $0x10] sm:$0xff]
    %v2499 = vld [vmem:[%s2495 + $0x18] sm:$0xff]
    %v2500 = vld [vmem:[%s7 + $0x10] sm:$0x1]
    %v2501 = vlaneseq
    %v2502 = vshrl.u32 %v2501, 7
    %v2503 = vsub.s32 0, %v2502
    %v2504 = vrot.slane %v2500, %v2503
    %v2506 = vsel %vm191, %v2493, 0
    %v2509 = vsel %vm191, %v2494, 0
    %2511 = vmatprep.subr.mxu0 0.0
    %2512 = vmatpush1.msra.mxu0 %v2496
    %2513 = vmatprep.subr.mxu0 0.0
    %2514 = vmatpush1.msra.mxu0 %v2497
    %2515 = vmatprep.subr.mxu0 0.0
    %2516 = vmatpush1.msra.mxu0 %v2498
    %2517 = vmatprep.subr.mxu0 0.0
    %2518 = vmatpush1.msra.mxu0 %v2499
    %2519 = vmatprep.subr.mxu0 0.0
    %2520 = vmatpush1.msra.mxu0 0.0
    %2521 = vmatprep.subr.mxu0 0.0
    %2522 = vmatpush1.msra.mxu0 0.0
    %2523 = vmatprep.subr.mxu0 0.0
    %2524 = vmatpush1.msra.mxu0 0.0
    %2525 = vmatprep.subr.mxu0 0.0
    %2526 = vmatpush1.msra.mxu0 0.0
    %2527 = vmatprep.subr.mxu0 0.0
    %2528 = vmatpush1.msra.mxu0 0.0
    %2529 = vmatprep.subr.mxu0 0.0
    %2530 = vmatpush1.msra.mxu0 0.0
    %2531 = vmatprep.subr.mxu0 0.0
    %2532 = vmatpush1.msra.mxu0 0.0
    %2533 = vmatprep.subr.mxu0 0.0
    %2534 = vmatpush1.msra.mxu0 0.0
    %2535 = vmatprep.subr.mxu0 0.0
    %2536 = vmatpush1.msra.mxu0 0.0
    %2537 = vmatprep.subr.mxu0 0.0
    %2538 = vmatpush1.msra.mxu0 0.0
    %2539 = vmatprep.subr.mxu0 0.0
    %2540 = vmatpush1.msra.mxu0 0.0
    %2541 = vmatprep.subr.mxu0 0.0
    %2542 = vmatpush1.msra.mxu0 0.0
    %2543 = vmatprep.subr.mxu0 0.0
    %2544 = vmatpush1.msra.mxu0 0.0
    %2545 = vmatprep.subr.mxu0 0.0
    %2546 = vmatpush1.msra.mxu0 0.0
    %2547 = vmatprep.subr.mxu0 0.0
    %2548 = vmatpush1.msra.mxu0 0.0
    %2549 = vmatprep.subr.mxu0 0.0
    %2550 = vmatpush1.msra.mxu0 0.0
    %2551 = vmatprep.subr.mxu0 0.0
    %2552 = vmatpush1.msra.mxu0 0.0
    %2553 = vmatprep.subr.mxu0 0.0
    %2554 = vmatpush1.msra.mxu0 0.0
    %2555 = vmatprep.subr.mxu0 0.0
    %2556 = vmatpush1.msra.mxu0 0.0
    %2557 = vmatprep.subr.mxu0 0.0
    %2558 = vmatpush1.msra.mxu0 0.0
    %2559 = vmatprep.subr.mxu0 0.0
    %2560 = vmatpush1.msra.mxu0 0.0
    %2561 = vmatprep.subr.mxu0 0.0
    %2562 = vmatpush1.msra.mxu0 0.0
    %2563 = vmatprep.subr.mxu0 0.0
    %2564 = vmatpush1.msra.mxu0 0.0
    %2565 = vmatprep.subr.mxu0 0.0
    %2566 = vmatpush1.msra.mxu0 0.0
    %2567 = vmatprep.subr.mxu0 0.0
    %2568 = vmatpush1.msra.mxu0 0.0
    %2569 = vmatprep.subr.mxu0 0.0
    %2570 = vmatpush1.msra.mxu0 0.0
    %2571 = vmatprep.subr.mxu0 0.0
    %2572 = vmatpush1.msra.mxu0 0.0
    %2573 = vmatprep.subr.mxu0 0.0
    %2574 = vmatpush1.msra.mxu0 0.0
    %2575 = vmatprep.mubr.f32.mxu0 0.0
    %2576 = vmatmul.mubr.f32.gmra.mrb[0].mxu0 %v2506
    %v2577 = vpop.f32.mrb[0].mxu0
    %v2578 = vadd.f32 %v2504, %v2577
    %v2579 = vpop.f32.mrb[0].mxu0
    %2580 = vmatprep.mubr.f32.mxu0 0.0
    %2581 = vmatmul.mubr.f32.gmra.mrb[0].mxu0 %v2509
    %v2582 = vpop.f32.mrb[0].mxu0
    %v2583 = vadd.f32 %v2504, %v2582
    %v2584 = vpop.f32.mrb[0].mxu0
    %2585 = vdwg.mxu0
    %v2586 = vadd.f32 %v2578, %v1530
    %v2587 = vadd.f32 %v2583, %v1531
    %v2588 = vld [vmem:[%s7 + $0x11] sm:$0x1]
    %v2589 = vld [vmem:[%s7 + $0x12] sm:$0x1]
    %v2590 = vsel %vm191, %v2586, 0.0
    %2591 = vadd.xlane.f32.xlu0 %v2590
    %v2592 = vpop.xlane.xlu0 %2591
    %v2593 = vsel %vm195, %v2587, 0.0
    %2594 = vadd.xlane.f32.xlu0 %v2593
    %v2595 = vpop.xlane.xlu0 %2594
    %v2596 = vmul.f32 %v2592, %v199
    %v2597 = vmul.f32 %v2595, %v199
    %v2598 = vsub.f32 %v2586, %v2596
    %v2599 = vsub.f32 %v2587, %v2597
    %v2600 = vmul.f32 %v2598, %v2598
    %v2601 = vmul.f32 %v2599, %v2599
    %v2602 = vsel %vm191, %v2600, 0.0
    %2603 = vadd.xlane.f32.xlu0 %v2602
    %v2604 = vpop.xlane.xlu0 %2603
    %v2605 = vsel %vm195, %v2601, 0.0
    %2606 = vadd.xlane.f32.xlu0 %v2605
    %v2607 = vpop.xlane.xlu0 %2606
    %v2608 = vmul.f32 %v2604, %v199
    %v2609 = vmul.f32 %v2607, %v199
    %v2610 = vadd.f32 %v2608, 1e-05
    %v2611 = vadd.f32 %v2609, 1e-05
    %v2612 = vrsqrt.pop %v2610
    %v2613 = vrsqrt.pop %v2611
    %v2614 = vmul.f32 %v2598, %v2612
    %v2615 = vmul.f32 %v2599, %v2613
    %v2616 = vlaneseq
    %v2617 = vshrl.u32 %v2616, 7
    %v2618 = vsub.s32 0, %v2617
    %v2619 = vrot.slane %v2588, %v2618
    %v2620 = vmul.f32 %v2614, %v2619
    %v2621 = vmul.f32 %v2615, %v2619
    %v2622 = vlaneseq
    %v2623 = vshrl.u32 %v2622, 7
    %v2624 = vsub.s32 0, %v2623
    %v2625 = vrot.slane %v2589, %v2624
    %v2626 = vadd.f32 %v2620, %v2625
    %v2627 = vadd.f32 %v2621, %v2625
    %s2628 = scalar_lea.vmem %s4, 32
    %v2629 = vld [vmem:[%s2628] sm:$0xff]
    %v2630 = vld [vmem:[%s2628 + $0x8] sm:$0xff]
    %v2631 = vld [vmem:[%s2628 + $0x10] sm:$0xff]
    %v2632 = vld [vmem:[%s2628 + $0x18] sm:$0xff]
    %v2633 = vld [vmem:[%s7 + $0x13] sm:$0x1]
    %v2634 = vlaneseq
    %v2635 = vshrl.u32 %v2634, 7
    %v2636 = vsub.s32 0, %v2635
    %v2637 = vrot.slane %v2633, %v2636
    %v2639 = vsel %vm191, %v2626, 0
    %v2642 = vsel %vm191, %v2627, 0
    %2644 = vmatprep.subr.mxu0 0.0
    %2645 = vmatpush1.msra.mxu0 %v2629
    %2646 = vmatprep.subr.mxu0 0.0
    %2647 = vmatpush1.msra.mxu0 %v2630
    %2648 = vmatprep.subr.mxu0 0.0
    %2649 = vmatpush1.msra.mxu0 %v2631
    %2650 = vmatprep.subr.mxu0 0.0
    %2651 = vmatpush1.msra.mxu0 %v2632
    %2652 = vmatprep.subr.mxu0 0.0
    %2653 = vmatpush1.msra.mxu0 0.0
    %2654 = vmatprep.subr.mxu0 0.0
    %2655 = vmatpush1.msra.mxu0 0.0
    %2656 = vmatprep.subr.mxu0 0.0
    %2657 = vmatpush1.msra.mxu0 0.0
    %2658 = vmatprep.subr.mxu0 0.0
    %2659 = vmatpush1.msra.mxu0 0.0
    %2660 = vmatprep.subr.mxu0 0.0
    %2661 = vmatpush1.msra.mxu0 0.0
    %2662 = vmatprep.subr.mxu0 0.0
    %2663 = vmatpush1.msra.mxu0 0.0
    %2664 = vmatprep.subr.mxu0 0.0
    %2665 = vmatpush1.msra.mxu0 0.0
    %2666 = vmatprep.subr.mxu0 0.0
    %2667 = vmatpush1.msra.mxu0 0.0
    %2668 = vmatprep.subr.mxu0 0.0
    %2669 = vmatpush1.msra.mxu0 0.0
    %2670 = vmatprep.subr.mxu0 0.0
    %2671 = vmatpush1.msra.mxu0 0.0
    %2672 = vmatprep.subr.mxu0 0.0
    %2673 = vmatpush1.msra.mxu0 0.0
    %2674 = vmatprep.subr.mxu0 0.0
    %2675 = vmatpush1.msra.mxu0 0.0
    %2676 = vmatprep.subr.mxu0 0.0
    %2677 = vmatpush1.msra.mxu0 0.0
    %2678 = vmatprep.subr.mxu0 0.0
    %2679 = vmatpush1.msra.mxu0 0.0
    %2680 = vmatprep.subr.mxu0 0.0
    %2681 = vmatpush1.msra.mxu0 0.0
    %2682 = vmatprep.subr.mxu0 0.0
    %2683 = vmatpush1.msra.mxu0 0.0
    %2684 = vmatprep.subr.mxu0 0.0
    %2685 = vmatpush1.msra.mxu0 0.0
    %2686 = vmatprep.subr.mxu0 0.0
    %2687 = vmatpush1.msra.mxu0 0.0
    %2688 = vmatprep.subr.mxu0 0.0
    %2689 = vmatpush1.msra.mxu0 0.0
    %2690 = vmatprep.subr.mxu0 0.0
    %2691 = vmatpush1.msra.mxu0 0.0
    %2692 = vmatprep.subr.mxu0 0.0
    %2693 = vmatpush1.msra.mxu0 0.0
    %2694 = vmatprep.subr.mxu0 0.0
    %2695 = vmatpush1.msra.mxu0 0.0
    %2696 = vmatprep.subr.mxu0 0.0
    %2697 = vmatpush1.msra.mxu0 0.0
    %2698 = vmatprep.subr.mxu0 0.0
    %2699 = vmatpush1.msra.mxu0 0.0
    %2700 = vmatprep.subr.mxu0 0.0
    %2701 = vmatpush1.msra.mxu0 0.0
    %2702 = vmatprep.subr.mxu0 0.0
    %2703 = vmatpush1.msra.mxu0 0.0
    %2704 = vmatprep.subr.mxu0 0.0
    %2705 = vmatpush1.msra.mxu0 0.0
    %2706 = vmatprep.subr.mxu0 0.0
    %2707 = vmatpush1.msra.mxu0 0.0
    %2708 = vmatprep.mubr.f32.mxu0 0.0
    %2709 = vmatmul.mubr.f32.gmra.mrb[0].mxu0 %v2639
    %v2710 = vpop.f32.mrb[0].mxu0
    %v2711 = vadd.f32 %v2637, %v2710
    %v2712 = vpop.f32.mrb[0].mxu0
    %2713 = vmatprep.mubr.f32.mxu0 0.0
    %2714 = vmatmul.mubr.f32.gmra.mrb[0].mxu0 %v2642
    %v2715 = vpop.f32.mrb[0].mxu0
    %v2716 = vadd.f32 %v2637, %v2715
    %v2717 = vpop.f32.mrb[0].mxu0
    %2718 = vdwg.mxu0
    %v2719 = vmul.f32 %v2711, 0.5
    %v2720 = vmul.f32 %v2716, 0.5
    %v2721 = vmul.f32 %v2711, 0.70710677
    %v2722 = vmul.f32 %v2716, 0.70710677
    %v2723 = vand.u32 2147483647, %v2721
    %v2724 = vand.u32 2147483647, %v2722
    %v2725 = vmul.f32 %v2723, 0.3275911
    %v2726 = vmul.f32 %v2724, 0.3275911
    %v2727 = vadd.f32 %v2725, 1.0
    %v2728 = vadd.f32 %v2726, 1.0
    %v2729 = vrcp.pop %v2727
    %v2730 = vmul.f32 1.0, %v2729
    %v2731 = vrcp.pop %v2728
    %v2732 = vmul.f32 1.0, %v2731
    %v2733 = vmul.f32 %v2730, 1.0614054
    %v2734 = vmul.f32 %v2732, 1.0614054
    %v2735 = vadd.f32 %v2733, -1.4531521
    %v2736 = vadd.f32 %v2734, -1.4531521
    %v2737 = vmul.f32 %v2735, %v2730
    %v2738 = vmul.f32 %v2736, %v2732
    %v2739 = vadd.f32 %v2737, 1.4214138
    %v2740 = vadd.f32 %v2738, 1.4214138
    %v2741 = vmul.f32 %v2739, %v2730
    %v2742 = vmul.f32 %v2740, %v2732
    %v2743 = vadd.f32 %v2741, -0.28449672
    %v2744 = vadd.f32 %v2742, -0.28449672
    %v2745 = vmul.f32 %v2743, %v2730
    %v2746 = vmul.f32 %v2744, %v2732
    %v2747 = vadd.f32 %v2745, 0.2548296
    %v2748 = vadd.f32 %v2746, 0.2548296
    %v2749 = vmul.f32 %v2747, %v2730
    %v2750 = vmul.f32 %v2748, %v2732
    %v2751 = vsub.f32 0.0, %v2723
    %v2752 = vsub.f32 0.0, %v2724
    %v2753 = vmul.f32 %v2751, %v2723
    %v2754 = vmul.f32 %v2752, %v2724
    %v2755 = vmul.f32 %v2753, 1.442695
    %v2756 = vpow.pop %v2755
    %v2757 = vmul.f32 %v2754, 1.442695
    %v2758 = vpow.pop %v2757
    %v2759 = vmul.f32 %v2749, %v2756
    %v2760 = vmul.f32 %v2750, %v2758
    %v2761 = vsub.f32 1.0, %v2759
    %v2762 = vsub.f32 1.0, %v2760
    %vm2763 = vcmp.lt.f32.partialorder %v2721, 0.0
    %vm2764 = vcmp.lt.f32.partialorder %v2722, 0.0
    %v2765 = vsub.f32 0.0, %v2761
    %v2766 = vsub.f32 0.0, %v2762
    %v2767 = vsel %vm2763, %v2765, %v2761
    %v2768 = vsel %vm2764, %v2766, %v2762
    %v2769 = vadd.f32 %v2767, 1.0
    %v2770 = vadd.f32 %v2768, 1.0
    %v2771 = vmul.f32 %v2719, %v2769
    %v2772 = vmul.f32 %v2720, %v2770
    %s2773 = scalar_lea.vmem %s5, 64
    %v2774 = vld [vmem:[%s2773] sm:$0xff]
    %v2775 = vld [vmem:[%s2773 + $0x8] sm:$0xff]
    %v2776 = vld [vmem:[%s2773 + $0x10] sm:$0xff]
    %v2777 = vld [vmem:[%s2773 + $0x18] sm:$0xff]
    %v2778 = vld [vmem:[%s2773 + $0x20] sm:$0xff]
    %v2779 = vld [vmem:[%s2773 + $0x28] sm:$0xff]
    %v2780 = vld [vmem:[%s2773 + $0x30] sm:$0xff]
    %v2781 = vld [vmem:[%s2773 + $0x38] sm:$0xff]
    %v2782 = vld [vmem:[%s7 + $0x14] sm:$0x1]
    %v2783 = vlaneseq
    %v2784 = vshrl.u32 %v2783, 7
    %v2785 = vsub.s32 0, %v2784
    %v2786 = vrot.slane %v2782, %v2785
    %v2788 = vsel %vm63, %v2771, 0
    %v2791 = vsel %vm63, %v2772, 0
    %2793 = vmatprep.subr.mxu0 0.0
    %2794 = vmatpush1.msra.mxu0 %v2774
    %2795 = vmatprep.subr.mxu0 0.0
    %2796 = vmatpush1.msra.mxu0 %v2775
    %2797 = vmatprep.subr.mxu0 0.0
    %2798 = vmatpush1.msra.mxu0 %v2776
    %2799 = vmatprep.subr.mxu0 0.0
    %2800 = vmatpush1.msra.mxu0 %v2777
    %2801 = vmatprep.subr.mxu0 0.0
    %2802 = vmatpush1.msra.mxu0 %v2778
    %2803 = vmatprep.subr.mxu0 0.0
    %2804 = vmatpush1.msra.mxu0 %v2779
    %2805 = vmatprep.subr.mxu0 0.0
    %2806 = vmatpush1.msra.mxu0 %v2780
    %2807 = vmatprep.subr.mxu0 0.0
    %2808 = vmatpush1.msra.mxu0 %v2781
    %2809 = vmatprep.subr.mxu0 0.0
    %2810 = vmatpush1.msra.mxu0 0.0
    %2811 = vmatprep.subr.mxu0 0.0
    %2812 = vmatpush1.msra.mxu0 0.0
    %2813 = vmatprep.subr.mxu0 0.0
    %2814 = vmatpush1.msra.mxu0 0.0
    %2815 = vmatprep.subr.mxu0 0.0
    %2816 = vmatpush1.msra.mxu0 0.0
    %2817 = vmatprep.subr.mxu0 0.0
    %2818 = vmatpush1.msra.mxu0 0.0
    %2819 = vmatprep.subr.mxu0 0.0
    %2820 = vmatpush1.msra.mxu0 0.0
    %2821 = vmatprep.subr.mxu0 0.0
    %2822 = vmatpush1.msra.mxu0 0.0
    %2823 = vmatprep.subr.mxu0 0.0
    %2824 = vmatpush1.msra.mxu0 0.0
    %2825 = vmatprep.subr.mxu0 0.0
    %2826 = vmatpush1.msra.mxu0 0.0
    %2827 = vmatprep.subr.mxu0 0.0
    %2828 = vmatpush1.msra.mxu0 0.0
    %2829 = vmatprep.subr.mxu0 0.0
    %2830 = vmatpush1.msra.mxu0 0.0
    %2831 = vmatprep.subr.mxu0 0.0
    %2832 = vmatpush1.msra.mxu0 0.0
    %2833 = vmatprep.subr.mxu0 0.0
    %2834 = vmatpush1.msra.mxu0 0.0
    %2835 = vmatprep.subr.mxu0 0.0
    %2836 = vmatpush1.msra.mxu0 0.0
    %2837 = vmatprep.subr.mxu0 0.0
    %2838 = vmatpush1.msra.mxu0 0.0
    %2839 = vmatprep.subr.mxu0 0.0
    %2840 = vmatpush1.msra.mxu0 0.0
    %2841 = vmatprep.subr.mxu0 0.0
    %2842 = vmatpush1.msra.mxu0 0.0
    %2843 = vmatprep.subr.mxu0 0.0
    %2844 = vmatpush1.msra.mxu0 0.0
    %2845 = vmatprep.subr.mxu0 0.0
    %2846 = vmatpush1.msra.mxu0 0.0
    %2847 = vmatprep.subr.mxu0 0.0
    %2848 = vmatpush1.msra.mxu0 0.0
    %2849 = vmatprep.subr.mxu0 0.0
    %2850 = vmatpush1.msra.mxu0 0.0
    %2851 = vmatprep.subr.mxu0 0.0
    %2852 = vmatpush1.msra.mxu0 0.0
    %2853 = vmatprep.subr.mxu0 0.0
    %2854 = vmatpush1.msra.mxu0 0.0
    %2855 = vmatprep.subr.mxu0 0.0
    %2856 = vmatpush1.msra.mxu0 0.0
    %2857 = vmatprep.mubr.f32.mxu0 0.0
    %2858 = vmatmul.mubr.f32.gmra.mrb[0].mxu0 %v2788
    %v2859 = vpop.f32.mrb[0].mxu0
    %v2860 = vadd.f32 %v2786, %v2859
    %v2861 = vpop.f32.mrb[0].mxu0
    %2862 = vmatprep.mubr.f32.mxu0 0.0
    %2863 = vmatmul.mubr.f32.gmra.mrb[0].mxu0 %v2791
    %v2864 = vpop.f32.mrb[0].mxu0
    %v2865 = vpop.f32.mrb[0].mxu0
    %2866 = vdwg.mxu0
    %v2867 = vadd.f32 %v2860, %v2586
    %v2869 = vrot.slane %v2867, 4
    %vm2871 = vcmask 1040384
    %v2872 = vsel %vm2871, %v2867, %v2869
    %v2873 = vld [vmem:[%s7 + $0x2] sm:$0x1]
    %v2874 = vld [vmem:[%s7 + $0x3] sm:$0x1]
    %v2875 = vsel %vm195, %v2872, 0.0
    %2876 = vadd.xlane.f32.xlu0 %v2875
    %v2877 = vpop.xlane.xlu0 %2876
    %v2878 = vmul.f32 %v2877, %v199
    %v2879 = vsub.f32 %v2872, %v2878
    %v2880 = vmul.f32 %v2879, %v2879
    %v2881 = vsel %vm195, %v2880, 0.0
    %2882 = vadd.xlane.f32.xlu0 %v2881
    %v2883 = vpop.xlane.xlu0 %2882
    %v2884 = vmul.f32 %v2883, %v199
    %v2885 = vadd.f32 %v2884, 1e-05
    %v2886 = vrsqrt.pop %v2885
    %v2887 = vmul.f32 %v2879, %v2886
    %v2888 = vlaneseq
    %v2889 = vshrl.u32 %v2888, 7
    %v2890 = vsub.s32 0, %v2889
    %v2891 = vrot.slane %v2873, %v2890
    %v2892 = vmul.f32 %v2887, %v2891
    %v2893 = vlaneseq
    %v2894 = vshrl.u32 %v2893, 7
    %v2895 = vsub.s32 0, %v2894
    %v2896 = vrot.slane %v2874, %v2895
    %v2897 = vadd.f32 %v2892, %v2896
    %v2898 = vld [vmem:[%s6] sm:$0xff]
    %v2899 = vld [vmem:[%s6 + $0x8] sm:$0xff]
    %v2900 = vld [vmem:[%s6 + $0x10] sm:$0xff]
    %v2901 = vld [vmem:[%s6 + $0x18] sm:$0xff]
    %v2902 = vld [vmem:[%s7 + $0x4] sm:$0x1]
    %v2903 = vlaneseq
    %v2904 = vshrl.u32 %v2903, 7
    %v2905 = vsub.s32 0, %v2904
    %v2906 = vrot.slane %v2902, %v2905
    %v2908 = vsel %vm191, %v2897, 0
    %2910 = vmatprep.subr.mxu0 0.0
    %2911 = vmatpush1.msra.mxu0 %v2898
    %2912 = vmatprep.subr.mxu0 0.0
    %2913 = vmatpush1.msra.mxu0 %v2899
    %2914 = vmatprep.subr.mxu0 0.0
    %2915 = vmatpush1.msra.mxu0 %v2900
    %2916 = vmatprep.subr.mxu0 0.0
    %2917 = vmatpush1.msra.mxu0 %v2901
    %2918 = vmatprep.subr.mxu0 0.0
    %2919 = vmatpush1.msra.mxu0 0.0
    %2920 = vmatprep.subr.mxu0 0.0
    %2921 = vmatpush1.msra.mxu0 0.0
    %2922 = vmatprep.subr.mxu0 0.0
    %2923 = vmatpush1.msra.mxu0 0.0
    %2924 = vmatprep.subr.mxu0 0.0
    %2925 = vmatpush1.msra.mxu0 0.0
    %2926 = vmatprep.subr.mxu0 0.0
    %2927 = vmatpush1.msra.mxu0 0.0
    %2928 = vmatprep.subr.mxu0 0.0
    %2929 = vmatpush1.msra.mxu0 0.0
    %2930 = vmatprep.subr.mxu0 0.0
    %2931 = vmatpush1.msra.mxu0 0.0
    %2932 = vmatprep.subr.mxu0 0.0
    %2933 = vmatpush1.msra.mxu0 0.0
    %2934 = vmatprep.subr.mxu0 0.0
    %2935 = vmatpush1.msra.mxu0 0.0
    %2936 = vmatprep.subr.mxu0 0.0
    %2937 = vmatpush1.msra.mxu0 0.0
    %2938 = vmatprep.subr.mxu0 0.0
    %2939 = vmatpush1.msra.mxu0 0.0
    %2940 = vmatprep.subr.mxu0 0.0
    %2941 = vmatpush1.msra.mxu0 0.0
    %2942 = vmatprep.subr.mxu0 0.0
    %2943 = vmatpush1.msra.mxu0 0.0
    %2944 = vmatprep.subr.mxu0 0.0
    %2945 = vmatpush1.msra.mxu0 0.0
    %2946 = vmatprep.subr.mxu0 0.0
    %2947 = vmatpush1.msra.mxu0 0.0
    %2948 = vmatprep.subr.mxu0 0.0
    %2949 = vmatpush1.msra.mxu0 0.0
    %2950 = vmatprep.subr.mxu0 0.0
    %2951 = vmatpush1.msra.mxu0 0.0
    %2952 = vmatprep.subr.mxu0 0.0
    %2953 = vmatpush1.msra.mxu0 0.0
    %2954 = vmatprep.subr.mxu0 0.0
    %2955 = vmatpush1.msra.mxu0 0.0
    %2956 = vmatprep.subr.mxu0 0.0
    %2957 = vmatpush1.msra.mxu0 0.0
    %2958 = vmatprep.subr.mxu0 0.0
    %2959 = vmatpush1.msra.mxu0 0.0
    %2960 = vmatprep.subr.mxu0 0.0
    %2961 = vmatpush1.msra.mxu0 0.0
    %2962 = vmatprep.subr.mxu0 0.0
    %2963 = vmatpush1.msra.mxu0 0.0
    %2964 = vmatprep.subr.mxu0 0.0
    %2965 = vmatpush1.msra.mxu0 0.0
    %2966 = vmatprep.subr.mxu0 0.0
    %2967 = vmatpush1.msra.mxu0 0.0
    %2968 = vmatprep.subr.mxu0 0.0
    %2969 = vmatpush1.msra.mxu0 0.0
    %2970 = vmatprep.subr.mxu0 0.0
    %2971 = vmatpush1.msra.mxu0 0.0
    %2972 = vmatprep.subr.mxu0 0.0
    %2973 = vmatpush1.msra.mxu0 0.0
    %2974 = vmatprep.mubr.f32.mxu0 0.0
    %2975 = vmatmul.mubr.f32.gmra.mrb[0].mxu0 %v2908
    %v2976 = vpop.f32.mrb[0].mxu0
    %v2977 = vadd.f32 %v2906, %v2976
    %v2978 = vpop.f32.mrb[0].mxu0
    %2979 = vdwg.mxu0
    %2980 = vst [vmem:[#allocation2] sm:$0x3] %v2977
    // Predicated region
    $region34: #{_lambda_.1} parent=1 // pred_check
      _
    $region35: #{_lambda_.1} parent=1 // pred_check_branch
      %2982 = sbr.rel (0) target = $region37
    $region36: #{_lambda_.1} parent=1 // pred_region
      %s2984 = ssub.s32 32, 32
      %2985 = vsyncadd [#allocation3], %s2984
      %s2987 = sshll.u32 [#allocation2], 4
      %s2988 = int_to_ptr.vmem [resolvable:$true] %s2987
      %2990 = dma.vmem_to_hbm [thread:$0]  %s2988, 32, %s8, [#allocation3]
    $region37: #{_lambda_.1} parent=1 // pred_fallthru
      _
    // Predicated region
    $region38: #{_lambda_.1} parent=1 // pred_check
      _
    $region39: #{_lambda_.1} parent=1 // pred_check_branch
      %2992 = sbr.rel (0) target = $region41
    $region40: #{_lambda_.1} parent=1 // pred_region
      %2993 = dma.done [#allocation3], 32
    $region41: #{_lambda_.1} parent=1 // pred_fallthru
      _
    %2994 = vsyncpa [#allocation3], 1

</llo_original>
